<compile_context>
chip_gen: v6e
topology: v6e:2x2x1
jax: 0.10.0
libtpu: 0.0.40
codegen_flags: <defaults>
</compile_context>

<pallas_src>
import functools
import math

import jax
import jax.numpy as jnp
from jax import lax
from jax.experimental import pallas as pl
from jax.experimental.pallas import tpu as pltpu


# ----------------------------------------------------------------------------
# In-kernel helpers
# ----------------------------------------------------------------------------
def _layer_norm(x, gamma, beta, eps=1e-5):
    # x: [R, D], gamma/beta: [1, D] -- all f32
    mu = jnp.mean(x, axis=-1, keepdims=True)
    var = jnp.mean((x - mu) ** 2, axis=-1, keepdims=True)
    return (x - mu) * lax.rsqrt(var + eps) * gamma + beta


def _roll_lanes(z, shift):
    # Circular roll by a static amount toward higher lane indices (jnp.roll semantics).
    n = z.shape[-1]
    shift = shift % n
    if shift == 0:
        return z
    if n % 128 == 0:
        # lane dim is vreg-aligned: use the XLU rotate (frees the VALU at realistic L).
        return pltpu.roll(z, shift, axis=z.ndim - 1)
    # small / unaligned lane dim: two static lane slices + one concat (always lowers).
    return jnp.concatenate([z[..., n - shift:], z[..., :n - shift]], axis=-1)


def _rel_shift_rows(z, seq_len, row_bits):
    """Transformer-XL relative shift, batched over rows.

    z: [R, 2L], row m corresponds to in-block position q = m mod L.
    Returns [R, L] with out[m, k] = z[m, k - q + L].

    Realized as one global roll by L plus ceil(log2 L) conditional rolls selected per
    row: O(log L) whole-array ops instead of O(L) per-row slices.
    """
    y = _roll_lanes(z, seq_len)
    for j, take in row_bits:
        y = jnp.where(take, _roll_lanes(y, 1 << j), y)
    return y[:, :seq_len]


# ----------------------------------------------------------------------------
# Fused kernel: in_fc -> num_layers x EncoderLayer -> out_fc + argmax decode
# grid = (layer,); the full batch lives in the block; the running activation stays
# resident in a VMEM scratch across the layer axis.
# ----------------------------------------------------------------------------
def tener_fused_kernel(
    emb_ref, maskb_ref, inw_ref, inb_ref, posb_ref,
    qkvw_ref, ffw1_ref, ffw2_ref, vec_ref,
    outwt_ref, outbt_ref,
    hid_ref, pred_ref,
    x_sc,
    *, n_head, head_dim, num_tags, scale,
):
    layer = pl.program_id(0)
    n_layers = pl.num_programs(0)
    B, _, L = maskb_ref.shape
    H, hd = n_head, head_dim
    D = H * hd
    R = B * L
    f32 = jnp.float32

    # ---- layer 0: fused in_fc (char-embedding projection) ----
    @pl.when(layer == 0)
    def _():
        x_sc[...] = (jnp.dot(emb_ref[...], inw_ref[...],
                             preferred_element_type=f32) + inb_ref[...])

    x = x_sc[...]                                  # [B*L, D] residual input of this layer

    # per-layer packed small vectors: one DMA instead of eight
    vecs = vec_ref[0]                              # [8, max(D, FF)]
    FF = ffw1_ref.shape[2]
    rrb_row = vecs[0:1, :D]
    rwb_row = vecs[1:2, :D]
    ln1_g, ln1_b = vecs[2:3, :D], vecs[3:4, :D]
    ff_b1 = vecs[4:5, :FF]
    ff_b2 = vecs[5:6, :D]
    ln2_g, ln2_b = vecs[6:7, :D], vecs[7:8, :D]

    # ---- relative multi-head self-attention (TENER) ----
    qkv = jnp.dot(x, qkvw_ref[0], preferred_element_type=f32)        # [B*L, 3D]
    q_flat, k_flat, v_flat = qkv[:, :D], qkv[:, D:2 * D], qkv[:, 2 * D:]

    # Positional score terms for ALL heads via two matmuls against the block-diagonal
    # [D, H*2L] sinusoidal table (no [L, L, hd] tensors, no per-head pos matmuls).
    posb = posb_ref[...]
    bd_all = jnp.dot(q_flat + rwb_row, posb, preferred_element_type=f32)   # [B*L, H*2L]
    et_all = jnp.dot(k_flat, posb, preferred_element_type=f32)             # [B*L, H*2L]

    q_rr3 = (q_flat + rrb_row).reshape(B, L, D)
    k3 = k_flat.reshape(B, L, D)
    v3 = v_flat.reshape(B, L, D)
    mask_bias = maskb_ref[...]                     # [B, 1, L]: 0 / -1e30 (hoisted to wrapper)

    # per-row in-block position bits (shared by all heads and both shift terms)
    row = lax.broadcasted_iota(jnp.int32, (R, 1), 0)
    q_ids = (row & (L - 1)) if (L & (L - 1)) == 0 else row % L
    row_bits = [(j, (q_ids & (1 << j)) != 0) for j in range((L - 1).bit_length())]

    head_outs = []
    for h in range(H):                             # unrolled; n_head is small and static
        lo, hi = h * hd, (h + 1) * hd
        # content term (q + r_r_bias) . k  -- NT dot_general, no explicit k transpose
        ac = jnp.einsum("bqd,bkd->bqk", q_rr3[:, :, lo:hi], k3[:, :, lo:hi],
                        preferred_element_type=f32)                        # [B, L, L]
        # positional terms: Transformer-XL shift / TENER transpose-shift
        bd = _rel_shift_rows(bd_all[:, h * 2 * L:(h + 1) * 2 * L], L, row_bits)
        bd = bd.reshape(B, L, L)
        ek = _rel_shift_rows(et_all[:, h * 2 * L:(h + 1) * 2 * L], L, row_bits)  # rows=keys
        # transpose (k, q) -> (q, k); per-b 2D transposes (always lowers for small B).
        # TODO(synk): for large B use a single batched swapaxes / strided pltpu.roll form.
        e = jnp.stack([ek[b * L:(b + 1) * L, :].T for b in range(B)], axis=0)    # [B, L, L]

        attn = ac + bd + e
        if scale != 1.0:                           # attn_scale=False -> dead multiply dropped
            attn = attn * jnp.float32(1.0 / scale)
        attn = attn + mask_bias

        m = jnp.max(attn, axis=-1, keepdims=True)
        p = jnp.exp(attn - m)
        p = p * pl.reciprocal(jnp.sum(p, axis=-1, keepdims=True), approx=True)
        head_outs.append(jnp.einsum("bqk,bkd->bqd", p, v3[:, :, lo:hi],
                                    preferred_element_type=f32))           # [B, L, hd]

    attn_out = jnp.concatenate(head_outs, axis=-1).reshape(R, D)

    # ---- EncoderLayer tail: residual + norm1 + FFN + residual + norm2 (after_norm=True;
    #      dropout is identity in eval mode) ----
    x = _layer_norm(x + attn_out, ln1_g, ln1_b)
    residual = x
    h1 = jnp.maximum(jnp.dot(x, ffw1_ref[0], preferred_element_type=f32) + ff_b1, 0.0)
    h2 = jnp.dot(h1, ffw2_ref[0], preferred_element_type=f32) + ff_b2
    x = _layer_norm(residual + h2, ln2_g, ln2_b)
    x_sc[...] = x                                  # stays resident in VMEM for next layer

    # ---- last layer only: write hidden states + fused out_fc + argmax decode ----
    @pl.when(layer == n_layers - 1)
    def _():
        hid_ref[...] = x.reshape(B, L, D)
        # logits computed transposed so the prediction comes out lane-dense as [1, B*L]
        logits_t = lax.dot_general(outwt_ref[...], x, (((1,), (1,)), ((), ())),
                                   preferred_element_type=f32) + outbt_ref[...]  # [T, B*L]
        mx = jnp.max(logits_t, axis=0, keepdims=True)
        ids = lax.broadcasted_iota(jnp.int32, logits_t.shape, 0).astype(f32)
        cand = jnp.where(logits_t == mx, ids, jnp.float32(num_tags))
        pred_ref[...] = jnp.min(cand, axis=0, keepdims=True).astype(jnp.int32)  # first argmax


# ----------------------------------------------------------------------------
# Relative sinusoidal positional embedding (compact [2L, head_dim] table only)
# ----------------------------------------------------------------------------
def rel_sinusoidal_table(embedding_dim, padding_idx=0, init_size=1200):
    num_embeddings = init_size + 1
    half_dim = embedding_dim // 2
    s = math.log(10000) / (half_dim - 1)
    freqs = jnp.exp(jnp.arange(half_dim, dtype=jnp.float32) * -s)
    pos = jnp.arange(-(num_embeddings // 2 + num_embeddings % 2),
                     num_embeddings // 2, dtype=jnp.float32)
    emb = pos[:, None] * freqs[None, :]
    emb = jnp.concatenate([jnp.sin(emb), jnp.cos(emb)], axis=1)
    if embedding_dim % 2 == 1:
        emb = jnp.concatenate([emb, jnp.zeros((num_embeddings, 1))], axis=1)
    emb = emb.at[padding_idx, :].set(0.0)
    origin_shift = (init_size + 1) // 2 + 1
    return emb, origin_shift


def rel_pos_table(seq_len, head_dim):
    # [2L, head_dim]; row r corresponds to relative offset (r - L).
    table, origin_shift = rel_sinusoidal_table(head_dim, padding_idx=0, init_size=1200)
    positions = jnp.arange(-seq_len, seq_len) + origin_shift
    return table[positions]


# ----------------------------------------------------------------------------
# Full forward (decode=True, no CRF / seg / bigram; eval-mode dropout)
# ----------------------------------------------------------------------------
def ner_forward(tokens, masks, params, *, n_head, head_dim, num_tags, scale=1.0):
    B, L, _ = tokens.shape
    D = n_head * head_dim
    nl = params["qkv_w"].shape[0]
    FF = params["ff_w1"].shape[2]
    PK = max(D, FF)
    T = num_tags

    # Char-embedding lookup stays in XLA (simple gather glue).
    emb = jnp.take(params["char_emb"], tokens[:, :, 0], axis=0).reshape(B * L, -1)

    # Pad the in_fc contraction dim up to a multiple of 32 (zero padding; result identical).
    E = emb.shape[-1]
    Ep = -(-E // 32) * 32
    in_w = params["in_w"]
    if Ep != E:
        emb = jnp.pad(emb, ((0, 0), (0, Ep - E)))
        in_w = jnp.pad(in_w, ((0, Ep - E), (0, 0)))

    # Key-mask bias precomputed once (hoists the broadcast/select out of the kernel loop).
    mask_bias = jnp.where(masks.reshape(B, 1, L) == 0, -1e30, 0.0).astype(jnp.float32)

    # Block-diagonal [D, H*2L] relative-position table shared across layers and heads.
    pos_t = rel_pos_table(L, head_dim).T                                    # [hd, 2L]
    pos_block = jnp.kron(jnp.eye(n_head, dtype=jnp.float32), pos_t)         # [D, H*2L]

    # Pack the eight small per-layer vectors into one [nl, 8, PK] tensor (one DMA per step).
    def pad_last(a):
        return jnp.pad(a, ((0, 0), (0, 0), (0, PK - a.shape[-1])))
    vec_pack = jnp.concatenate([
        pad_last(params["rrb"].reshape(nl, 1, D)),
        pad_last(params["rwb"].reshape(nl, 1, D)),
        pad_last(params["ln1_g"]), pad_last(params["ln1_b"]),
        pad_last(params["ff_b1"]),
        pad_last(params["ff_b2"]),
        pad_last(params["ln2_g"]), pad_last(params["ln2_b"]),
    ], axis=1)                                                              # [nl, 8, PK]

    out_wT = params["out_w"].T                                              # [T, D]
    out_bT = params["out_b"].T                                              # [T, 1]

    kern = functools.partial(tener_fused_kernel, n_head=n_head, head_dim=head_dim,
                             num_tags=num_tags, scale=scale)

    # TODO(synk): for realistic d_model/FF/L on v7x (64 MiB VMEM), set vmem_limit_bytes and
    # consider pl.Buffered(1) on the largest per-layer weight; also add a parallel row-block
    # grid axis so megacore can shard the batch.
    hid, pred = pl.pallas_call(
        kern,
        out_shape=(jax.ShapeDtypeStruct((B, L, D), jnp.float32),
                   jax.ShapeDtypeStruct((1, B * L), jnp.int32)),
        grid=(nl,),
        in_specs=[
            pl.BlockSpec((B * L, Ep), lambda l: (0, 0)),            # emb (flat, DMA'd once)
            pl.BlockSpec((B, 1, L), lambda l: (0, 0, 0)),           # key-mask bias
            pl.BlockSpec((Ep, D), lambda l: (0, 0)),                # in_fc weight
            pl.BlockSpec((1, D), lambda l: (0, 0)),                 # in_fc bias
            pl.BlockSpec((D, 2 * L * n_head), lambda l: (0, 0)),    # block-diag pos table
            pl.BlockSpec((1, D, 3 * D), lambda l: (l, 0, 0)),       # qkv_w   (per layer)
            pl.BlockSpec((1, D, FF), lambda l: (l, 0, 0)),          # ffn w1  (per layer)
            pl.BlockSpec((1, FF, D), lambda l: (l, 0, 0)),          # ffn w2  (per layer)
            pl.BlockSpec((1, 8, PK), lambda l: (l, 0, 0)),          # packed per-layer vecs
            pl.BlockSpec((T, D), lambda l: (0, 0)),                 # out_fc weight^T
            pl.BlockSpec((T, 1), lambda l: (0, 0)),                 # out_fc bias^T
        ],
        out_specs=(
            pl.BlockSpec((B, L, D), lambda l: (0, 0, 0)),           # final hidden states
            pl.BlockSpec((1, B * L), lambda l: (0, 0)),             # predicted tag ids
        ),
        scratch_shapes=[pltpu.VMEM((B * L, D), jnp.float32)],       # activation, resident
        compiler_params=pltpu.CompilerParams(
            dimension_semantics=("arbitrary",)),
    )(emb, mask_bias, in_w, params["in_b"], pos_block,
      params["qkv_w"], params["ff_w1"], params["ff_w2"], vec_pack,
      out_wT, out_bT)

    return hid, pred.reshape(B, L)
# TODO(synk): CRF decode / CE-loss training branch (use_crf, decode=False) and the
# after_norm=False (pre-norm) variant are not implemented.


# ----------------------------------------------------------------------------
# Deterministic parameter init + driver
# ----------------------------------------------------------------------------
def init_params(key, *, char_vocab, char_embed, d_model, ff_dim, n_head, head_dim,
                num_layers, num_tags):
    keys = iter(jax.random.split(key, 12))

    def nrm(shape, s=0.05):
        return jax.random.normal(next(keys), shape, jnp.float32) * s

    nl = num_layers
    return {
        "char_emb": nrm((char_vocab, char_embed), 0.1),
        "in_w": nrm((char_embed, d_model)),
        "in_b": nrm((1, d_model)),
        "out_w": nrm((d_model, num_tags)),
        "out_b": nrm((1, num_tags)),
        # Per-layer weights stacked on a leading layer axis so a single fused pallas_call
        # streams layer l's weights at grid step l.
        "qkv_w": nrm((nl, d_model, 3 * d_model)),
        "rrb": nrm((nl, n_head, head_dim), 0.1),
        "rwb": nrm((nl, n_head, head_dim), 0.1),
        "ln1_g": jnp.ones((nl, 1, d_model), jnp.float32),
        "ln1_b": jnp.zeros((nl, 1, d_model), jnp.float32),
        "ff_w1": nrm((nl, d_model, ff_dim)),
        "ff_b1": nrm((nl, 1, ff_dim)),
        "ff_w2": nrm((nl, ff_dim, d_model)),
        "ff_b2": nrm((nl, 1, d_model)),
        "ln2_g": jnp.ones((nl, 1, d_model), jnp.float32),
        "ln2_b": jnp.zeros((nl, 1, d_model), jnp.float32),
    }


if __name__ == "__main__":
    # Small config consistent with the TENER NER module.
    num_tags = 7
    char_vocab_size = 50
    char_embed_size = 24
    num_layers = 2
    n_head = 2
    head_dims = 16
    d_model = n_head * head_dims          # 32
    ff_dim = 2 * d_model                  # 64
    B, L = 2, 8

    key = jax.random.PRNGKey(0)
    k_tok, k_par = jax.random.split(key)
    tokens = jax.random.randint(k_tok, (B, L, 1), 0, char_vocab_size, dtype=jnp.int32)
    masks = jnp.ones((B, L), jnp.int32).at[1, -1].set(0)   # last pos of example 1 = pad

    params = init_params(
        k_par, char_vocab=char_vocab_size, char_embed=char_embed_size,
        d_model=d_model, ff_dim=ff_dim, n_head=n_head, head_dim=head_dims,
        num_layers=num_layers, num_tags=num_tags)

    hidden, pred = ner_forward(tokens, masks, params,
                               n_head=n_head, head_dim=head_dims,
                               num_tags=num_tags, scale=1.0)   # attn_scale=False
    hidden, pred = jax.block_until_ready((hidden, pred))
    assert hidden.shape == (B, L, d_model) and hidden.dtype == jnp.float32
    assert pred.shape == (B, L) and pred.dtype == jnp.int32
    assert bool(jnp.all(jnp.isfinite(hidden)))
    print("KERNEL_OK")
</pallas_src>

<mosaic_0001>
module attributes {stable_mosaic.version = 11 : i64} {
  func.func @tener_fused_kernel(%arg0: i32, %arg1: memref<16x32xf32, #tpu.memory_space<vmem>>, %arg2: memref<2x1x8xf32, #tpu.memory_space<vmem>>, %arg3: memref<32x32xf32, #tpu.memory_space<vmem>>, %arg4: memref<1x32xf32, #tpu.memory_space<vmem>>, %arg5: memref<32x32xf32, #tpu.memory_space<vmem>>, %arg6: memref<1x32x96xf32, #tpu.memory_space<vmem>>, %arg7: memref<1x32x64xf32, #tpu.memory_space<vmem>>, %arg8: memref<1x64x32xf32, #tpu.memory_space<vmem>>, %arg9: memref<1x8x64xf32, #tpu.memory_space<vmem>>, %arg10: memref<7x32xf32, #tpu.memory_space<vmem>>, %arg11: memref<7x1xf32, #tpu.memory_space<vmem>>, %arg12: memref<2x8x32xf32, #tpu.memory_space<vmem>>, %arg13: memref<1x16xi32, #tpu.memory_space<vmem>>, %arg14: memref<16x32xf32, #tpu.memory_space<vmem>>) attributes {dimension_semantics = [#tpu.dimension_semantics<arbitrary>], iteration_bounds = array<i64: 2>, scalar_prefetch = 0 : i64, scratch_operands = 1 : i64, tpu.core_type = #tpu.core_type<tc>, window_params = [{pipeline_mode = #tpu.pipeline_mode<synchronous>, transform_indices = @transform_0, window_bounds = array<i64: 16, 32>}, {pipeline_mode = #tpu.pipeline_mode<synchronous>, transform_indices = @transform_1, window_bounds = array<i64: 2, 1, 8>}, {pipeline_mode = #tpu.pipeline_mode<synchronous>, transform_indices = @transform_2, window_bounds = array<i64: 32, 32>}, {pipeline_mode = #tpu.pipeline_mode<synchronous>, transform_indices = @transform_3, window_bounds = array<i64: 1, 32>}, {pipeline_mode = #tpu.pipeline_mode<synchronous>, transform_indices = @transform_4, window_bounds = array<i64: 32, 32>}, {transform_indices = @transform_5, window_bounds = array<i64: 1, 32, 96>}, {transform_indices = @transform_6, window_bounds = array<i64: 1, 32, 64>}, {transform_indices = @transform_7, window_bounds = array<i64: 1, 64, 32>}, {transform_indices = @transform_8, window_bounds = array<i64: 1, 8, 64>}, {pipeline_mode = #tpu.pipeline_mode<synchronous>, transform_indices = @transform_9, window_bounds = array<i64: 7, 32>}, {pipeline_mode = #tpu.pipeline_mode<synchronous>, transform_indices = @transform_10, window_bounds = array<i64: 7, 1>}, {pipeline_mode = #tpu.pipeline_mode<synchronous>, transform_indices = @transform_11, window_bounds = array<i64: 2, 8, 32>}, {pipeline_mode = #tpu.pipeline_mode<synchronous>, transform_indices = @transform_12, window_bounds = array<i64: 1, 16>}]} {
    %c0_i32 = arith.constant 0 : i32
    %0 = arith.cmpi eq, %arg0, %c0_i32 : i32
    %1 = arith.extui %0 : i1 to i32
    %c0_i32_0 = arith.constant 0 : i32
    %2 = arith.cmpi ne, %1, %c0_i32_0 : i32
    scf.if %2 {
      %c0_49 = arith.constant 0 : index
      %c0_50 = arith.constant 0 : index
      %256 = vector.load %arg1[%c0_49, %c0_50] : memref<16x32xf32, #tpu.memory_space<vmem>>, vector<16x32xf32>
      %c0_51 = arith.constant 0 : index
      %c0_52 = arith.constant 0 : index
      %257 = vector.load %arg3[%c0_51, %c0_52] : memref<32x32xf32, #tpu.memory_space<vmem>>, vector<32x32xf32>
      %cst_53 = arith.constant dense<0.000000e+00> : vector<16x32xf32>
      %258 = tpu.matmul %256, %257, %cst_53 {dimension_numbers = #tpu.dot_dimension_numbers<[1], [0], [0], [1], [0, 0, 1, 1], [], []>} : vector<16x32xf32>, vector<32x32xf32>, vector<16x32xf32> -> vector<16x32xf32>
      %c0_54 = arith.constant 0 : index
      %c0_55 = arith.constant 0 : index
      %259 = vector.load %arg4[%c0_54, %c0_55] : memref<1x32xf32, #tpu.memory_space<vmem>>, vector<1x32xf32>
      %260 = vector.broadcast %259 : vector<1x32xf32> to vector<16x32xf32>
      %261 = arith.addf %258, %260 : vector<16x32xf32>
      %c0_56 = arith.constant 0 : index
      %c0_57 = arith.constant 0 : index
      %262 = vector.load %arg14[%c0_56, %c0_57] : memref<16x32xf32, #tpu.memory_space<vmem>>, vector<16x32xf32>
      tpu.vector_store %arg14[%c0_56, %c0_57], %261 {strides = array<i32>} : memref<16x32xf32, #tpu.memory_space<vmem>>, vector<16x32xf32>,
    } else {
    }
    %c0 = arith.constant 0 : index
    %c0_1 = arith.constant 0 : index
    %3 = vector.load %arg14[%c0, %c0_1] : memref<16x32xf32, #tpu.memory_space<vmem>>, vector<16x32xf32>
    %c0_2 = arith.constant 0 : index
    %c0_3 = arith.constant 0 : index
    %c0_4 = arith.constant 0 : index
    %4 = vector.load %arg9[%c0_2, %c0_3, %c0_4] : memref<1x8x64xf32, #tpu.memory_space<vmem>>, vector<1x8x64xf32>
    %5 = vector.shape_cast %4 : vector<1x8x64xf32> to vector<8x64xf32>
    %6 = vector.extract_strided_slice %5 {offsets = [0, 0], sizes = [1, 32], strides = [1, 1]} : vector<8x64xf32> to vector<1x32xf32>
    %7 = vector.extract_strided_slice %5 {offsets = [1, 0], sizes = [1, 32], strides = [1, 1]} : vector<8x64xf32> to vector<1x32xf32>
    %8 = vector.extract_strided_slice %5 {offsets = [2, 0], sizes = [1, 32], strides = [1, 1]} : vector<8x64xf32> to vector<1x32xf32>
    %9 = vector.extract_strided_slice %5 {offsets = [3, 0], sizes = [1, 32], strides = [1, 1]} : vector<8x64xf32> to vector<1x32xf32>
    %10 = vector.extract_strided_slice %5 {offsets = [4, 0], sizes = [1, 64], strides = [1, 1]} : vector<8x64xf32> to vector<1x64xf32>
    %11 = vector.extract_strided_slice %5 {offsets = [5, 0], sizes = [1, 32], strides = [1, 1]} : vector<8x64xf32> to vector<1x32xf32>
    %12 = vector.extract_strided_slice %5 {offsets = [6, 0], sizes = [1, 32], strides = [1, 1]} : vector<8x64xf32> to vector<1x32xf32>
    %13 = vector.extract_strided_slice %5 {offsets = [7, 0], sizes = [1, 32], strides = [1, 1]} : vector<8x64xf32> to vector<1x32xf32>
    %c0_5 = arith.constant 0 : index
    %c0_6 = arith.constant 0 : index
    %c0_7 = arith.constant 0 : index
    %14 = vector.load %arg6[%c0_5, %c0_6, %c0_7] : memref<1x32x96xf32, #tpu.memory_space<vmem>>, vector<1x32x96xf32>
    %15 = vector.shape_cast %14 : vector<1x32x96xf32> to vector<32x96xf32>
    %cst = arith.constant dense<0.000000e+00> : vector<16x96xf32>
    %16 = tpu.matmul %3, %15, %cst {dimension_numbers = #tpu.dot_dimension_numbers<[1], [0], [0], [1], [0, 0, 1, 1], [], []>} : vector<16x32xf32>, vector<32x96xf32>, vector<16x96xf32> -> vector<16x96xf32>
    %17 = vector.extract_strided_slice %16 {offsets = [0, 0], sizes = [16, 32], strides = [1, 1]} : vector<16x96xf32> to vector<16x32xf32>
    %18 = vector.extract_strided_slice %16 {offsets = [0, 32], sizes = [16, 32], strides = [1, 1]} : vector<16x96xf32> to vector<16x32xf32>
    %19 = vector.extract_strided_slice %16 {offsets = [0, 64], sizes = [16, 32], strides = [1, 1]} : vector<16x96xf32> to vector<16x32xf32>
    %c0_8 = arith.constant 0 : index
    %c0_9 = arith.constant 0 : index
    %20 = vector.load %arg5[%c0_8, %c0_9] : memref<32x32xf32, #tpu.memory_space<vmem>>, vector<32x32xf32>
    %21 = vector.broadcast %7 : vector<1x32xf32> to vector<16x32xf32>
    %22 = arith.addf %17, %21 : vector<16x32xf32>
    %cst_10 = arith.constant dense<0.000000e+00> : vector<16x32xf32>
    %23 = tpu.matmul %22, %20, %cst_10 {dimension_numbers = #tpu.dot_dimension_numbers<[1], [0], [0], [1], [0, 0, 1, 1], [], []>} : vector<16x32xf32>, vector<32x32xf32>, vector<16x32xf32> -> vector<16x32xf32>
    %cst_11 = arith.constant dense<0.000000e+00> : vector<16x32xf32>
    %24 = tpu.matmul %18, %20, %cst_11 {dimension_numbers = #tpu.dot_dimension_numbers<[1], [0], [0], [1], [0, 0, 1, 1], [], []>} : vector<16x32xf32>, vector<32x32xf32>, vector<16x32xf32> -> vector<16x32xf32>
    %25 = vector.broadcast %6 : vector<1x32xf32> to vector<16x32xf32>
    %26 = arith.addf %17, %25 : vector<16x32xf32>
    %27 = vector.shape_cast %26 : vector<16x32xf32> to vector<2x8x32xf32>
    %28 = vector.shape_cast %18 : vector<16x32xf32> to vector<2x8x32xf32>
    %29 = vector.shape_cast %19 : vector<16x32xf32> to vector<2x8x32xf32>
    %c0_12 = arith.constant 0 : index
    %c0_13 = arith.constant 0 : index
    %c0_14 = arith.constant 0 : index
    %30 = vector.load %arg2[%c0_12, %c0_13, %c0_14] : memref<2x1x8xf32, #tpu.memory_space<vmem>>, vector<2x1x8xf32>
    %31 = tpu.iota {dimensions = array<i32: 0>} : vector<16x1xi32>
    %c7_i32 = arith.constant 7 : i32
    %32 = vector.broadcast %c7_i32 : i32 to vector<16x1xi32>
    %33 = arith.andi %31, %32 : vector<16x1xi32>
    %c1_i32 = arith.constant 1 : i32
    %34 = vector.broadcast %c1_i32 : i32 to vector<16x1xi32>
    %35 = arith.andi %33, %34 : vector<16x1xi32>
    %c0_i32_15 = arith.constant 0 : i32
    %36 = vector.broadcast %c0_i32_15 : i32 to vector<16x1xi32>
    %37 = arith.cmpi ne, %35, %36 : vector<16x1xi32>
    %c2_i32 = arith.constant 2 : i32
    %38 = vector.broadcast %c2_i32 : i32 to vector<16x1xi32>
    %39 = arith.andi %33, %38 : vector<16x1xi32>
    %c0_i32_16 = arith.constant 0 : i32
    %40 = vector.broadcast %c0_i32_16 : i32 to vector<16x1xi32>
    %41 = arith.cmpi ne, %39, %40 : vector<16x1xi32>
    %c4_i32 = arith.constant 4 : i32
    %42 = vector.broadcast %c4_i32 : i32 to vector<16x1xi32>
    %43 = arith.andi %33, %42 : vector<16x1xi32>
    %c0_i32_17 = arith.constant 0 : i32
    %44 = vector.broadcast %c0_i32_17 : i32 to vector<16x1xi32>
    %45 = arith.cmpi ne, %43, %44 : vector<16x1xi32>
    %46 = vector.extract_strided_slice %27 {offsets = [0, 0, 0], sizes = [2, 8, 16], strides = [1, 1, 1]} : vector<2x8x32xf32> to vector<2x8x16xf32>
    %47 = vector.extract_strided_slice %28 {offsets = [0, 0, 0], sizes = [2, 8, 16], strides = [1, 1, 1]} : vector<2x8x32xf32> to vector<2x8x16xf32>
    "tpu.trace_start"() <{level = 10 : i32, message = "bqd,bkd->bqk"}> : () -> ()
    %cst_18 = arith.constant dense<0.000000e+00> : vector<2x8x8xf32>
    %48 = tpu.matmul %46, %47, %cst_18 {dimension_numbers = #tpu.dot_dimension_numbers<[2], [2], [1], [1], [0, 0, 0, 1, 1, 1], [0], [0]>} : vector<2x8x16xf32>, vector<2x8x16xf32>, vector<2x8x8xf32> -> vector<2x8x8xf32>
    "tpu.trace_stop"() : () -> ()
    %49 = vector.extract_strided_slice %23 {offsets = [0, 0], sizes = [16, 16], strides = [1, 1]} : vector<16x32xf32> to vector<16x16xf32>
    %50 = vector.extract_strided_slice %49 {offsets = [0, 8], sizes = [16, 8], strides = [1, 1]} : vector<16x16xf32> to vector<16x8xf32>
    %51 = vector.extract_strided_slice %49 {offsets = [0, 0], sizes = [16, 8], strides = [1, 1]} : vector<16x16xf32> to vector<16x8xf32>
    %52 = tpu.concatenate %50, %51 in 1 : vector<16x8xf32>, vector<16x8xf32> -> vector<16x16xf32>
    %53 = vector.extract_strided_slice %52 {offsets = [0, 15], sizes = [16, 1], strides = [1, 1]} : vector<16x16xf32> to vector<16x1xf32>
    %54 = vector.extract_strided_slice %52 {offsets = [0, 0], sizes = [16, 15], strides = [1, 1]} : vector<16x16xf32> to vector<16x15xf32>
    %55 = tpu.concatenate %53, %54 in 1 : vector<16x1xf32>, vector<16x15xf32> -> vector<16x16xf32>
    %56 = vector.shape_cast %37 : vector<16x1xi1> to vector<16x1xi1>
    %57 = vector.broadcast %56 : vector<16x1xi1> to vector<16x16xi1>
    %58 = arith.select %57, %55, %52 : vector<16x16xi1>, vector<16x16xf32>
    %59 = vector.extract_strided_slice %58 {offsets = [0, 14], sizes = [16, 2], strides = [1, 1]} : vector<16x16xf32> to vector<16x2xf32>
    %60 = vector.extract_strided_slice %58 {offsets = [0, 0], sizes = [16, 14], strides = [1, 1]} : vector<16x16xf32> to vector<16x14xf32>
    %61 = tpu.concatenate %59, %60 in 1 : vector<16x2xf32>, vector<16x14xf32> -> vector<16x16xf32>
    %62 = vector.shape_cast %41 : vector<16x1xi1> to vector<16x1xi1>
    %63 = vector.broadcast %62 : vector<16x1xi1> to vector<16x16xi1>
    %64 = arith.select %63, %61, %58 : vector<16x16xi1>, vector<16x16xf32>
    %65 = vector.extract_strided_slice %64 {offsets = [0, 12], sizes = [16, 4], strides = [1, 1]} : vector<16x16xf32> to vector<16x4xf32>
    %66 = vector.extract_strided_slice %64 {offsets = [0, 0], sizes = [16, 12], strides = [1, 1]} : vector<16x16xf32> to vector<16x12xf32>
    %67 = tpu.concatenate %65, %66 in 1 : vector<16x4xf32>, vector<16x12xf32> -> vector<16x16xf32>
    %68 = vector.shape_cast %45 : vector<16x1xi1> to vector<16x1xi1>
    %69 = vector.broadcast %68 : vector<16x1xi1> to vector<16x16xi1>
    %70 = arith.select %69, %67, %64 : vector<16x16xi1>, vector<16x16xf32>
    %71 = vector.extract_strided_slice %70 {offsets = [0, 0], sizes = [16, 8], strides = [1, 1]} : vector<16x16xf32> to vector<16x8xf32>
    %72 = vector.shape_cast %71 : vector<16x8xf32> to vector<2x8x8xf32>
    %73 = vector.extract_strided_slice %24 {offsets = [0, 0], sizes = [16, 16], strides = [1, 1]} : vector<16x32xf32> to vector<16x16xf32>
    %74 = vector.extract_strided_slice %73 {offsets = [0, 8], sizes = [16, 8], strides = [1, 1]} : vector<16x16xf32> to vector<16x8xf32>
    %75 = vector.extract_strided_slice %73 {offsets = [0, 0], sizes = [16, 8], strides = [1, 1]} : vector<16x16xf32> to vector<16x8xf32>
    %76 = tpu.concatenate %74, %75 in 1 : vector<16x8xf32>, vector<16x8xf32> -> vector<16x16xf32>
    %77 = vector.extract_strided_slice %76 {offsets = [0, 15], sizes = [16, 1], strides = [1, 1]} : vector<16x16xf32> to vector<16x1xf32>
    %78 = vector.extract_strided_slice %76 {offsets = [0, 0], sizes = [16, 15], strides = [1, 1]} : vector<16x16xf32> to vector<16x15xf32>
    %79 = tpu.concatenate %77, %78 in 1 : vector<16x1xf32>, vector<16x15xf32> -> vector<16x16xf32>
    %80 = vector.shape_cast %37 : vector<16x1xi1> to vector<16x1xi1>
    %81 = vector.broadcast %80 : vector<16x1xi1> to vector<16x16xi1>
    %82 = arith.select %81, %79, %76 : vector<16x16xi1>, vector<16x16xf32>
    %83 = vector.extract_strided_slice %82 {offsets = [0, 14], sizes = [16, 2], strides = [1, 1]} : vector<16x16xf32> to vector<16x2xf32>
    %84 = vector.extract_strided_slice %82 {offsets = [0, 0], sizes = [16, 14], strides = [1, 1]} : vector<16x16xf32> to vector<16x14xf32>
    %85 = tpu.concatenate %83, %84 in 1 : vector<16x2xf32>, vector<16x14xf32> -> vector<16x16xf32>
    %86 = vector.shape_cast %41 : vector<16x1xi1> to vector<16x1xi1>
    %87 = vector.broadcast %86 : vector<16x1xi1> to vector<16x16xi1>
    %88 = arith.select %87, %85, %82 : vector<16x16xi1>, vector<16x16xf32>
    %89 = vector.extract_strided_slice %88 {offsets = [0, 12], sizes = [16, 4], strides = [1, 1]} : vector<16x16xf32> to vector<16x4xf32>
    %90 = vector.extract_strided_slice %88 {offsets = [0, 0], sizes = [16, 12], strides = [1, 1]} : vector<16x16xf32> to vector<16x12xf32>
    %91 = tpu.concatenate %89, %90 in 1 : vector<16x4xf32>, vector<16x12xf32> -> vector<16x16xf32>
    %92 = vector.shape_cast %45 : vector<16x1xi1> to vector<16x1xi1>
    %93 = vector.broadcast %92 : vector<16x1xi1> to vector<16x16xi1>
    %94 = arith.select %93, %91, %88 : vector<16x16xi1>, vector<16x16xf32>
    %95 = vector.extract_strided_slice %94 {offsets = [0, 0], sizes = [16, 8], strides = [1, 1]} : vector<16x16xf32> to vector<16x8xf32>
    %96 = vector.extract_strided_slice %95 {offsets = [0, 0], sizes = [8, 8], strides = [1, 1]} : vector<16x8xf32> to vector<8x8xf32>
    %97 = tpu.transpose %96, [1, 0] : vector<8x8xf32> -> vector<8x8xf32>
    %98 = vector.extract_strided_slice %95 {offsets = [8, 0], sizes = [8, 8], strides = [1, 1]} : vector<16x8xf32> to vector<8x8xf32>
    %99 = tpu.transpose %98, [1, 0] : vector<8x8xf32> -> vector<8x8xf32>
    %100 = vector.shape_cast %97 : vector<8x8xf32> to vector<1x8x8xf32>
    %101 = vector.shape_cast %99 : vector<8x8xf32> to vector<1x8x8xf32>
    %102 = tpu.concatenate %100, %101 in 0 : vector<1x8x8xf32>, vector<1x8x8xf32> -> vector<2x8x8xf32>
    %103 = arith.addf %48, %72 : vector<2x8x8xf32>
    %104 = arith.addf %103, %102 : vector<2x8x8xf32>
    %105 = vector.broadcast %30 : vector<2x1x8xf32> to vector<2x8x8xf32>
    %106 = arith.addf %104, %105 : vector<2x8x8xf32>
    %cst_19 = arith.constant dense<0xFF800000> : vector<2x8xf32>
    %107 = vector.multi_reduction <maximumf>, %106, %cst_19 [2] : vector<2x8x8xf32> to vector<2x8xf32>
    %108 = vector.shape_cast %107 : vector<2x8xf32> to vector<2x8x1xf32>
    %109 = vector.broadcast %108 : vector<2x8x1xf32> to vector<2x8x8xf32>
    %110 = arith.subf %106, %109 : vector<2x8x8xf32>
    %111 = math.exp %110 : vector<2x8x8xf32>
    %cst_20 = arith.constant dense<0.000000e+00> : vector<2x8xf32>
    %112 = vector.multi_reduction <add>, %111, %cst_20 [2] : vector<2x8x8xf32> to vector<2x8xf32>
    %113 = vector.shape_cast %112 : vector<2x8xf32> to vector<2x8x1xf32>
    %114 = tpu.reciprocal %113 {approx = true} : vector<2x8x1xf32> -> vector<2x8x1xf32>
    %115 = vector.broadcast %114 : vector<2x8x1xf32> to vector<2x8x8xf32>
    %116 = arith.mulf %111, %115 : vector<2x8x8xf32>
    %117 = vector.extract_strided_slice %29 {offsets = [0, 0, 0], sizes = [2, 8, 16], strides = [1, 1, 1]} : vector<2x8x32xf32> to vector<2x8x16xf32>
    "tpu.trace_start"() <{level = 10 : i32, message = "bqk,bkd->bqd"}> : () -> ()
    %cst_21 = arith.constant dense<0.000000e+00> : vector<2x8x16xf32>
    %118 = tpu.matmul %116, %117, %cst_21 {dimension_numbers = #tpu.dot_dimension_numbers<[2], [1], [1], [2], [0, 0, 0, 1, 1, 2], [0], [0]>} : vector<2x8x8xf32>, vector<2x8x16xf32>, vector<2x8x16xf32> -> vector<2x8x16xf32>
    "tpu.trace_stop"() : () -> ()
    %119 = vector.extract_strided_slice %27 {offsets = [0, 0, 16], sizes = [2, 8, 16], strides = [1, 1, 1]} : vector<2x8x32xf32> to vector<2x8x16xf32>
    %120 = vector.extract_strided_slice %28 {offsets = [0, 0, 16], sizes = [2, 8, 16], strides = [1, 1, 1]} : vector<2x8x32xf32> to vector<2x8x16xf32>
    "tpu.trace_start"() <{level = 10 : i32, message = "bqd,bkd->bqk"}> : () -> ()
    %cst_22 = arith.constant dense<0.000000e+00> : vector<2x8x8xf32>
    %121 = tpu.matmul %119, %120, %cst_22 {dimension_numbers = #tpu.dot_dimension_numbers<[2], [2], [1], [1], [0, 0, 0, 1, 1, 1], [0], [0]>} : vector<2x8x16xf32>, vector<2x8x16xf32>, vector<2x8x8xf32> -> vector<2x8x8xf32>
    "tpu.trace_stop"() : () -> ()
    %122 = vector.extract_strided_slice %23 {offsets = [0, 16], sizes = [16, 16], strides = [1, 1]} : vector<16x32xf32> to vector<16x16xf32>
    %123 = vector.extract_strided_slice %122 {offsets = [0, 8], sizes = [16, 8], strides = [1, 1]} : vector<16x16xf32> to vector<16x8xf32>
    %124 = vector.extract_strided_slice %122 {offsets = [0, 0], sizes = [16, 8], strides = [1, 1]} : vector<16x16xf32> to vector<16x8xf32>
    %125 = tpu.concatenate %123, %124 in 1 : vector<16x8xf32>, vector<16x8xf32> -> vector<16x16xf32>
    %126 = vector.extract_strided_slice %125 {offsets = [0, 15], sizes = [16, 1], strides = [1, 1]} : vector<16x16xf32> to vector<16x1xf32>
    %127 = vector.extract_strided_slice %125 {offsets = [0, 0], sizes = [16, 15], strides = [1, 1]} : vector<16x16xf32> to vector<16x15xf32>
    %128 = tpu.concatenate %126, %127 in 1 : vector<16x1xf32>, vector<16x15xf32> -> vector<16x16xf32>
    %129 = vector.shape_cast %37 : vector<16x1xi1> to vector<16x1xi1>
    %130 = vector.broadcast %129 : vector<16x1xi1> to vector<16x16xi1>
    %131 = arith.select %130, %128, %125 : vector<16x16xi1>, vector<16x16xf32>
    %132 = vector.extract_strided_slice %131 {offsets = [0, 14], sizes = [16, 2], strides = [1, 1]} : vector<16x16xf32> to vector<16x2xf32>
    %133 = vector.extract_strided_slice %131 {offsets = [0, 0], sizes = [16, 14], strides = [1, 1]} : vector<16x16xf32> to vector<16x14xf32>
    %134 = tpu.concatenate %132, %133 in 1 : vector<16x2xf32>, vector<16x14xf32> -> vector<16x16xf32>
    %135 = vector.shape_cast %41 : vector<16x1xi1> to vector<16x1xi1>
    %136 = vector.broadcast %135 : vector<16x1xi1> to vector<16x16xi1>
    %137 = arith.select %136, %134, %131 : vector<16x16xi1>, vector<16x16xf32>
    %138 = vector.extract_strided_slice %137 {offsets = [0, 12], sizes = [16, 4], strides = [1, 1]} : vector<16x16xf32> to vector<16x4xf32>
    %139 = vector.extract_strided_slice %137 {offsets = [0, 0], sizes = [16, 12], strides = [1, 1]} : vector<16x16xf32> to vector<16x12xf32>
    %140 = tpu.concatenate %138, %139 in 1 : vector<16x4xf32>, vector<16x12xf32> -> vector<16x16xf32>
    %141 = vector.shape_cast %45 : vector<16x1xi1> to vector<16x1xi1>
    %142 = vector.broadcast %141 : vector<16x1xi1> to vector<16x16xi1>
    %143 = arith.select %142, %140, %137 : vector<16x16xi1>, vector<16x16xf32>
    %144 = vector.extract_strided_slice %143 {offsets = [0, 0], sizes = [16, 8], strides = [1, 1]} : vector<16x16xf32> to vector<16x8xf32>
    %145 = vector.shape_cast %144 : vector<16x8xf32> to vector<2x8x8xf32>
    %146 = vector.extract_strided_slice %24 {offsets = [0, 16], sizes = [16, 16], strides = [1, 1]} : vector<16x32xf32> to vector<16x16xf32>
    %147 = vector.extract_strided_slice %146 {offsets = [0, 8], sizes = [16, 8], strides = [1, 1]} : vector<16x16xf32> to vector<16x8xf32>
    %148 = vector.extract_strided_slice %146 {offsets = [0, 0], sizes = [16, 8], strides = [1, 1]} : vector<16x16xf32> to vector<16x8xf32>
    %149 = tpu.concatenate %147, %148 in 1 : vector<16x8xf32>, vector<16x8xf32> -> vector<16x16xf32>
    %150 = vector.extract_strided_slice %149 {offsets = [0, 15], sizes = [16, 1], strides = [1, 1]} : vector<16x16xf32> to vector<16x1xf32>
    %151 = vector.extract_strided_slice %149 {offsets = [0, 0], sizes = [16, 15], strides = [1, 1]} : vector<16x16xf32> to vector<16x15xf32>
    %152 = tpu.concatenate %150, %151 in 1 : vector<16x1xf32>, vector<16x15xf32> -> vector<16x16xf32>
    %153 = vector.shape_cast %37 : vector<16x1xi1> to vector<16x1xi1>
    %154 = vector.broadcast %153 : vector<16x1xi1> to vector<16x16xi1>
    %155 = arith.select %154, %152, %149 : vector<16x16xi1>, vector<16x16xf32>
    %156 = vector.extract_strided_slice %155 {offsets = [0, 14], sizes = [16, 2], strides = [1, 1]} : vector<16x16xf32> to vector<16x2xf32>
    %157 = vector.extract_strided_slice %155 {offsets = [0, 0], sizes = [16, 14], strides = [1, 1]} : vector<16x16xf32> to vector<16x14xf32>
    %158 = tpu.concatenate %156, %157 in 1 : vector<16x2xf32>, vector<16x14xf32> -> vector<16x16xf32>
    %159 = vector.shape_cast %41 : vector<16x1xi1> to vector<16x1xi1>
    %160 = vector.broadcast %159 : vector<16x1xi1> to vector<16x16xi1>
    %161 = arith.select %160, %158, %155 : vector<16x16xi1>, vector<16x16xf32>
    %162 = vector.extract_strided_slice %161 {offsets = [0, 12], sizes = [16, 4], strides = [1, 1]} : vector<16x16xf32> to vector<16x4xf32>
    %163 = vector.extract_strided_slice %161 {offsets = [0, 0], sizes = [16, 12], strides = [1, 1]} : vector<16x16xf32> to vector<16x12xf32>
    %164 = tpu.concatenate %162, %163 in 1 : vector<16x4xf32>, vector<16x12xf32> -> vector<16x16xf32>
    %165 = vector.shape_cast %45 : vector<16x1xi1> to vector<16x1xi1>
    %166 = vector.broadcast %165 : vector<16x1xi1> to vector<16x16xi1>
    %167 = arith.select %166, %164, %161 : vector<16x16xi1>, vector<16x16xf32>
    %168 = vector.extract_strided_slice %167 {offsets = [0, 0], sizes = [16, 8], strides = [1, 1]} : vector<16x16xf32> to vector<16x8xf32>
    %169 = vector.extract_strided_slice %168 {offsets = [0, 0], sizes = [8, 8], strides = [1, 1]} : vector<16x8xf32> to vector<8x8xf32>
    %170 = tpu.transpose %169, [1, 0] : vector<8x8xf32> -> vector<8x8xf32>
    %171 = vector.extract_strided_slice %168 {offsets = [8, 0], sizes = [8, 8], strides = [1, 1]} : vector<16x8xf32> to vector<8x8xf32>
    %172 = tpu.transpose %171, [1, 0] : vector<8x8xf32> -> vector<8x8xf32>
    %173 = vector.shape_cast %170 : vector<8x8xf32> to vector<1x8x8xf32>
    %174 = vector.shape_cast %172 : vector<8x8xf32> to vector<1x8x8xf32>
    %175 = tpu.concatenate %173, %174 in 0 : vector<1x8x8xf32>, vector<1x8x8xf32> -> vector<2x8x8xf32>
    %176 = arith.addf %121, %145 : vector<2x8x8xf32>
    %177 = arith.addf %176, %175 : vector<2x8x8xf32>
    %178 = vector.broadcast %30 : vector<2x1x8xf32> to vector<2x8x8xf32>
    %179 = arith.addf %177, %178 : vector<2x8x8xf32>
    %cst_23 = arith.constant dense<0xFF800000> : vector<2x8xf32>
    %180 = vector.multi_reduction <maximumf>, %179, %cst_23 [2] : vector<2x8x8xf32> to vector<2x8xf32>
    %181 = vector.shape_cast %180 : vector<2x8xf32> to vector<2x8x1xf32>
    %182 = vector.broadcast %181 : vector<2x8x1xf32> to vector<2x8x8xf32>
    %183 = arith.subf %179, %182 : vector<2x8x8xf32>
    %184 = math.exp %183 : vector<2x8x8xf32>
    %cst_24 = arith.constant dense<0.000000e+00> : vector<2x8xf32>
    %185 = vector.multi_reduction <add>, %184, %cst_24 [2] : vector<2x8x8xf32> to vector<2x8xf32>
    %186 = vector.shape_cast %185 : vector<2x8xf32> to vector<2x8x1xf32>
    %187 = tpu.reciprocal %186 {approx = true} : vector<2x8x1xf32> -> vector<2x8x1xf32>
    %188 = vector.broadcast %187 : vector<2x8x1xf32> to vector<2x8x8xf32>
    %189 = arith.mulf %184, %188 : vector<2x8x8xf32>
    %190 = vector.extract_strided_slice %29 {offsets = [0, 0, 16], sizes = [2, 8, 16], strides = [1, 1, 1]} : vector<2x8x32xf32> to vector<2x8x16xf32>
    "tpu.trace_start"() <{level = 10 : i32, message = "bqk,bkd->bqd"}> : () -> ()
    %cst_25 = arith.constant dense<0.000000e+00> : vector<2x8x16xf32>
    %191 = tpu.matmul %189, %190, %cst_25 {dimension_numbers = #tpu.dot_dimension_numbers<[2], [1], [1], [2], [0, 0, 0, 1, 1, 2], [0], [0]>} : vector<2x8x8xf32>, vector<2x8x16xf32>, vector<2x8x16xf32> -> vector<2x8x16xf32>
    "tpu.trace_stop"() : () -> ()
    %192 = tpu.concatenate %118, %191 in 2 : vector<2x8x16xf32>, vector<2x8x16xf32> -> vector<2x8x32xf32>
    %193 = vector.shape_cast %192 : vector<2x8x32xf32> to vector<16x32xf32>
    %194 = arith.addf %3, %193 : vector<16x32xf32>
    %cst_26 = arith.constant dense<0.000000e+00> : vector<16xf32>
    %195 = vector.multi_reduction <add>, %194, %cst_26 [1] : vector<16x32xf32> to vector<16xf32>
    %196 = vector.shape_cast %195 : vector<16xf32> to vector<16x1xf32>
    %cst_27 = arith.constant 3.200000e+01 : f32
    %197 = vector.broadcast %cst_27 : f32 to vector<16x1xf32>
    %198 = arith.divf %196, %197 : vector<16x1xf32>
    %199 = vector.broadcast %198 : vector<16x1xf32> to vector<16x32xf32>
    %200 = arith.subf %194, %199 : vector<16x32xf32>
    %201 = arith.mulf %200, %200 : vector<16x32xf32>
    %cst_28 = arith.constant dense<0.000000e+00> : vector<16xf32>
    %202 = vector.multi_reduction <add>, %201, %cst_28 [1] : vector<16x32xf32> to vector<16xf32>
    %203 = vector.shape_cast %202 : vector<16xf32> to vector<16x1xf32>
    %cst_29 = arith.constant 3.200000e+01 : f32
    %204 = vector.broadcast %cst_29 : f32 to vector<16x1xf32>
    %205 = arith.divf %203, %204 : vector<16x1xf32>
    %206 = vector.broadcast %198 : vector<16x1xf32> to vector<16x32xf32>
    %207 = arith.subf %194, %206 : vector<16x32xf32>
    %cst_30 = arith.constant 9.99999974E-6 : f32
    %208 = vector.broadcast %cst_30 : f32 to vector<16x1xf32>
    %209 = arith.addf %205, %208 : vector<16x1xf32>
    %210 = math.rsqrt %209 : vector<16x1xf32>
    %211 = vector.broadcast %210 : vector<16x1xf32> to vector<16x32xf32>
    %212 = arith.mulf %207, %211 : vector<16x32xf32>
    %213 = vector.broadcast %8 : vector<1x32xf32> to vector<16x32xf32>
    %214 = arith.mulf %212, %213 : vector<16x32xf32>
    %215 = vector.broadcast %9 : vector<1x32xf32> to vector<16x32xf32>
    %216 = arith.addf %214, %215 : vector<16x32xf32>
    %c0_31 = arith.constant 0 : index
    %c0_32 = arith.constant 0 : index
    %c0_33 = arith.constant 0 : index
    %217 = vector.load %arg7[%c0_31, %c0_32, %c0_33] : memref<1x32x64xf32, #tpu.memory_space<vmem>>, vector<1x32x64xf32>
    %218 = vector.shape_cast %217 : vector<1x32x64xf32> to vector<32x64xf32>
    %cst_34 = arith.constant dense<0.000000e+00> : vector<16x64xf32>
    %219 = tpu.matmul %216, %218, %cst_34 {dimension_numbers = #tpu.dot_dimension_numbers<[1], [0], [0], [1], [0, 0, 1, 1], [], []>} : vector<16x32xf32>, vector<32x64xf32>, vector<16x64xf32> -> vector<16x64xf32>
    %220 = vector.broadcast %10 : vector<1x64xf32> to vector<16x64xf32>
    %221 = arith.addf %219, %220 : vector<16x64xf32>
    %cst_35 = arith.constant 0.000000e+00 : f32
    %222 = vector.broadcast %cst_35 : f32 to vector<16x64xf32>
    %223 = arith.maximumf %221, %222 : vector<16x64xf32>
    %c0_36 = arith.constant 0 : index
    %c0_37 = arith.constant 0 : index
    %c0_38 = arith.constant 0 : index
    %224 = vector.load %arg8[%c0_36, %c0_37, %c0_38] : memref<1x64x32xf32, #tpu.memory_space<vmem>>, vector<1x64x32xf32>
    %225 = vector.shape_cast %224 : vector<1x64x32xf32> to vector<64x32xf32>
    %cst_39 = arith.constant dense<0.000000e+00> : vector<16x32xf32>
    %226 = tpu.matmul %223, %225, %cst_39 {dimension_numbers = #tpu.dot_dimension_numbers<[1], [0], [0], [1], [0, 0, 1, 1], [], []>} : vector<16x64xf32>, vector<64x32xf32>, vector<16x32xf32> -> vector<16x32xf32>
    %227 = vector.broadcast %11 : vector<1x32xf32> to vector<16x32xf32>
    %228 = arith.addf %226, %227 : vector<16x32xf32>
    %229 = arith.addf %216, %228 : vector<16x32xf32>
    %cst_40 = arith.constant dense<0.000000e+00> : vector<16xf32>
    %230 = vector.multi_reduction <add>, %229, %cst_40 [1] : vector<16x32xf32> to vector<16xf32>
    %231 = vector.shape_cast %230 : vector<16xf32> to vector<16x1xf32>
    %cst_41 = arith.constant 3.200000e+01 : f32
    %232 = vector.broadcast %cst_41 : f32 to vector<16x1xf32>
    %233 = arith.divf %231, %232 : vector<16x1xf32>
    %234 = vector.broadcast %233 : vector<16x1xf32> to vector<16x32xf32>
    %235 = arith.subf %229, %234 : vector<16x32xf32>
    %236 = arith.mulf %235, %235 : vector<16x32xf32>
    %cst_42 = arith.constant dense<0.000000e+00> : vector<16xf32>
    %237 = vector.multi_reduction <add>, %236, %cst_42 [1] : vector<16x32xf32> to vector<16xf32>
    %238 = vector.shape_cast %237 : vector<16xf32> to vector<16x1xf32>
    %cst_43 = arith.constant 3.200000e+01 : f32
    %239 = vector.broadcast %cst_43 : f32 to vector<16x1xf32>
    %240 = arith.divf %238, %239 : vector<16x1xf32>
    %241 = vector.broadcast %233 : vector<16x1xf32> to vector<16x32xf32>
    %242 = arith.subf %229, %241 : vector<16x32xf32>
    %cst_44 = arith.constant 9.99999974E-6 : f32
    %243 = vector.broadcast %cst_44 : f32 to vector<16x1xf32>
    %244 = arith.addf %240, %243 : vector<16x1xf32>
    %245 = math.rsqrt %244 : vector<16x1xf32>
    %246 = vector.broadcast %245 : vector<16x1xf32> to vector<16x32xf32>
    %247 = arith.mulf %242, %246 : vector<16x32xf32>
    %248 = vector.broadcast %12 : vector<1x32xf32> to vector<16x32xf32>
    %249 = arith.mulf %247, %248 : vector<16x32xf32>
    %250 = vector.broadcast %13 : vector<1x32xf32> to vector<16x32xf32>
    %251 = arith.addf %249, %250 : vector<16x32xf32>
    %c0_45 = arith.constant 0 : index
    %c0_46 = arith.constant 0 : index
    %252 = vector.load %arg14[%c0_45, %c0_46] : memref<16x32xf32, #tpu.memory_space<vmem>>, vector<16x32xf32>
    tpu.vector_store %arg14[%c0_45, %c0_46], %251 {strides = array<i32>} : memref<16x32xf32, #tpu.memory_space<vmem>>, vector<16x32xf32>,
    %c1_i32_47 = arith.constant 1 : i32
    %253 = arith.cmpi eq, %arg0, %c1_i32_47 : i32
    %254 = arith.extui %253 : i1 to i32
    %c0_i32_48 = arith.constant 0 : i32
    %255 = arith.cmpi ne, %254, %c0_i32_48 : i32
    scf.if %255 {
      %256 = vector.shape_cast %251 : vector<16x32xf32> to vector<2x8x32xf32>
      %c0_49 = arith.constant 0 : index
      %c0_50 = arith.constant 0 : index
      %c0_51 = arith.constant 0 : index
      %257 = vector.load %arg12[%c0_49, %c0_50, %c0_51] : memref<2x8x32xf32, #tpu.memory_space<vmem>>, vector<2x8x32xf32>
      tpu.vector_store %arg12[%c0_49, %c0_50, %c0_51], %256 {strides = array<i32>} : memref<2x8x32xf32, #tpu.memory_space<vmem>>, vector<2x8x32xf32>,
      %c0_52 = arith.constant 0 : index
      %c0_53 = arith.constant 0 : index
      %258 = vector.load %arg10[%c0_52, %c0_53] : memref<7x32xf32, #tpu.memory_space<vmem>>, vector<7x32xf32>
      %cst_54 = arith.constant dense<0.000000e+00> : vector<7x16xf32>
      %259 = tpu.matmul %258, %251, %cst_54 {dimension_numbers = #tpu.dot_dimension_numbers<[1], [1], [0], [0], [0, 0, 1, 0], [], []>} : vector<7x32xf32>, vector<16x32xf32>, vector<7x16xf32> -> vector<7x16xf32>
      %c0_55 = arith.constant 0 : index
      %c0_56 = arith.constant 0 : index
      %260 = vector.load %arg11[%c0_55, %c0_56] : memref<7x1xf32, #tpu.memory_space<vmem>>, vector<7x1xf32>
      %261 = vector.broadcast %260 : vector<7x1xf32> to vector<7x16xf32>
      %262 = arith.addf %259, %261 : vector<7x16xf32>
      %cst_57 = arith.constant dense<0xFF800000> : vector<16xf32>
      %263 = vector.multi_reduction <maximumf>, %262, %cst_57 [0] : vector<7x16xf32> to vector<16xf32>
      %264 = vector.shape_cast %263 : vector<16xf32> to vector<1x16xf32>
      %265 = tpu.iota {dimensions = array<i32: 0>} : vector<7x16xi32>
      %266 = arith.sitofp %265 : vector<7x16xi32> to vector<7x16xf32>
      %267 = vector.broadcast %264 : vector<1x16xf32> to vector<7x16xf32>
      %268 = arith.cmpf oeq, %262, %267 : vector<7x16xf32>
      %cst_58 = arith.constant 7.000000e+00 : f32
      %269 = vector.broadcast %cst_58 : f32 to vector<7x16xf32>
      %270 = arith.select %268, %266, %269 : vector<7x16xi1>, vector<7x16xf32>
      %cst_59 = arith.constant dense<0x7F800000> : vector<16xf32>
      %271 = vector.multi_reduction <minimumf>, %270, %cst_59 [0] : vector<7x16xf32> to vector<16xf32>
      %272 = vector.shape_cast %271 : vector<16xf32> to vector<1x16xf32>
      %273 = arith.fptosi %272 : vector<1x16xf32> to vector<1x16xi32>
      %c0_60 = arith.constant 0 : index
      %c0_61 = arith.constant 0 : index
      %274 = vector.load %arg13[%c0_60, %c0_61] : memref<1x16xi32, #tpu.memory_space<vmem>>, vector<1x16xi32>
      tpu.vector_store %arg13[%c0_60, %c0_61], %273 {strides = array<i32>} : memref<1x16xi32, #tpu.memory_space<vmem>>, vector<1x16xi32>,
    } else {
    }
    return
  }
  func.func @transform_0(%arg0: i32) -> (i32, i32) {
    %c0_i32 = arith.constant 0 : i32
    %c0_i32_0 = arith.constant 0 : i32
    %c0_i32_1 = arith.constant 0 : i32
    return %c0_i32, %c0_i32_0 : i32, i32
  }
  func.func @transform_1(%arg0: i32) -> (i32, i32, i32) {
    %c0_i32 = arith.constant 0 : i32
    %c0_i32_0 = arith.constant 0 : i32
    %c0_i32_1 = arith.constant 0 : i32
    %c0_i32_2 = arith.constant 0 : i32
    return %c0_i32, %c0_i32_0, %c0_i32_1 : i32, i32, i32
  }
  func.func @transform_2(%arg0: i32) -> (i32, i32) {
    %c0_i32 = arith.constant 0 : i32
    %c0_i32_0 = arith.constant 0 : i32
    %c0_i32_1 = arith.constant 0 : i32
    return %c0_i32, %c0_i32_0 : i32, i32
  }
  func.func @transform_3(%arg0: i32) -> (i32, i32) {
    %c0_i32 = arith.constant 0 : i32
    %c0_i32_0 = arith.constant 0 : i32
    %c0_i32_1 = arith.constant 0 : i32
    return %c0_i32, %c0_i32_0 : i32, i32
  }
  func.func @transform_4(%arg0: i32) -> (i32, i32) {
    %c0_i32 = arith.constant 0 : i32
    %c0_i32_0 = arith.constant 0 : i32
    %c0_i32_1 = arith.constant 0 : i32
    return %c0_i32, %c0_i32_0 : i32, i32
  }
  func.func @transform_5(%arg0: i32) -> (i32, i32, i32) {
    %c0_i32 = arith.constant 0 : i32
    %c0_i32_0 = arith.constant 0 : i32
    %c0_i32_1 = arith.constant 0 : i32
    return %arg0, %c0_i32, %c0_i32_0 : i32, i32, i32
  }
  func.func @transform_6(%arg0: i32) -> (i32, i32, i32) {
    %c0_i32 = arith.constant 0 : i32
    %c0_i32_0 = arith.constant 0 : i32
    %c0_i32_1 = arith.constant 0 : i32
    return %arg0, %c0_i32, %c0_i32_0 : i32, i32, i32
  }
  func.func @transform_7(%arg0: i32) -> (i32, i32, i32) {
    %c0_i32 = arith.constant 0 : i32
    %c0_i32_0 = arith.constant 0 : i32
    %c0_i32_1 = arith.constant 0 : i32
    return %arg0, %c0_i32, %c0_i32_0 : i32, i32, i32
  }
  func.func @transform_8(%arg0: i32) -> (i32, i32, i32) {
    %c0_i32 = arith.constant 0 : i32
    %c0_i32_0 = arith.constant 0 : i32
    %c0_i32_1 = arith.constant 0 : i32
    return %arg0, %c0_i32, %c0_i32_0 : i32, i32, i32
  }
  func.func @transform_9(%arg0: i32) -> (i32, i32) {
    %c0_i32 = arith.constant 0 : i32
    %c0_i32_0 = arith.constant 0 : i32
    %c0_i32_1 = arith.constant 0 : i32
    return %c0_i32, %c0_i32_0 : i32, i32
  }
  func.func @transform_10(%arg0: i32) -> (i32, i32) {
    %c0_i32 = arith.constant 0 : i32
    %c0_i32_0 = arith.constant 0 : i32
    %c0_i32_1 = arith.constant 0 : i32
    return %c0_i32, %c0_i32_0 : i32, i32
  }
  func.func @transform_11(%arg0: i32) -> (i32, i32, i32) {
    %c0_i32 = arith.constant 0 : i32
    %c0_i32_0 = arith.constant 0 : i32
    %c0_i32_1 = arith.constant 0 : i32
    %c0_i32_2 = arith.constant 0 : i32
    return %c0_i32, %c0_i32_0, %c0_i32_1 : i32, i32, i32
  }
  func.func @transform_12(%arg0: i32) -> (i32, i32) {
    %c0_i32 = arith.constant 0 : i32
    %c0_i32_0 = arith.constant 0 : i32
    %c0_i32_1 = arith.constant 0 : i32
    return %c0_i32, %c0_i32_0 : i32, i32
  }
}

</mosaic_0001>

<llo_original>
// kernel: tpu_custom_call.1
$region0: #{tpu_custom_call.1}
  #allocation0 [shape = 'u32[]', space=smem, size = 0x4, offset = 0x4, fixed_abs, tag = 'smem constant byte address 0x4 - core index']
  #allocation1 [shape = 'u32[144,128]{1,0:T(1,128)}', space=vmem, size = 0x12000, scoped, tag = 'internal scratch']
  #allocation2 [shape = 'f32[16,32]{1,0:T(8,128)}', space=vmem, size = 0x2000, scoped, tag = 'scratch operand']
  %s0 = inlined_call_operand.hbm [shape: f32[16,32], index: 0, kind: input, shape index: {}]
  %s1 = inlined_call_operand.hbm [shape: f32[2,1,8], index: 1, kind: input, shape index: {}]
  %s2 = inlined_call_operand.vmem [shape: f32[32,32], index: 2, kind: input, shape index: {}]
  %s3 = inlined_call_operand.hbm [shape: f32[1,32], index: 3, kind: input, shape index: {}]
  %s4 = inlined_call_operand.vmem [shape: f32[32,32], index: 4, kind: input, shape index: {}]
  %s5 = inlined_call_operand.vmem [shape: f32[2,32,96], index: 5, kind: input, shape index: {}]
  %s6 = inlined_call_operand.vmem [shape: f32[2,32,64], index: 6, kind: input, shape index: {}]
  %s7 = inlined_call_operand.vmem [shape: f32[2,64,32], index: 7, kind: input, shape index: {}]
  %s8 = inlined_call_operand.vmem [shape: f32[2,8,64], index: 8, kind: input, shape index: {}]
  %s9 = inlined_call_operand.hbm [shape: f32[7,32], index: 9, kind: input, shape index: {}]
  %s10 = inlined_call_operand.vmem [shape: f32[7,1], index: 10, kind: input, shape index: {}]
  %s11 = inlined_call_operand.hbm [shape: f32[2,8,32], index: 11, kind: output, shape index: {0}]
  %s12 = inlined_call_operand.hbm [shape: s32[1,16], index: 12, kind: output, shape index: {1}]
  %13 = xla_tuple %s11, %s12
  %s14 = sld [smem:[#allocation0]]
  $region109: #{tpu_custom_call.1} parent=0
    _
  %s16 = ssub.s32 1, %s14
  %s17 = scalar_select 0, %s16, %s14
  $region1: #{tpu_custom_call.1} parent=0
    #allocation3 [shape = 'u8[8192]{0}', space=vmem, size = 0x2000, scoped, tag = 'input window, operand 0, single buffered']
    #allocation4 [shape = 's32[2]{0}', space=sflag, size = 0x8, scoped, tag = 'scoped memory for tpu_custom_call.1']
    #allocation5 [shape = 's32[2]{0}', space=sflag, size = 0x8, scoped, tag = 'scoped memory for tpu_custom_call.1']
    #allocation6 [shape = 'u8[1024]{0}', space=vmem, size = 0x400, scoped, tag = 'input window, operand 1, single buffered']
    #allocation7 [shape = 's32[1]{0}', space=sflag, size = 0x4, scoped, tag = 'scoped memory for tpu_custom_call.1']
    #allocation8 [shape = 'u8[512]{0}', space=vmem, size = 0x400, scoped, tag = 'input window, operand 3, single buffered']
    #allocation9 [shape = 'u8[4096]{0}', space=vmem, size = 0x1000, scoped, tag = 'input window, operand 9, single buffered']
    #allocation10 [shape = 's32[1]{0}', space=sflag, size = 0x4, scoped, tag = 'scoped memory for tpu_custom_call.1']
    #allocation11 [shape = 'u8[8192]{0}', space=vmem, size = 0x2000, scoped, tag = 'output window, operand 0, single buffered']
    #allocation12 [shape = 'u8[512]{0}', space=vmem, size = 0x400, scoped, tag = 'output window, operand 1, single buffered']
    #allocation13 [shape = 's32[1]{0}', space=sflag, size = 0x4, scoped, tag = 'scoped memory for tpu_custom_call.1']
    %18 = vsyncpa [#allocation4], 0
    %19 = vsyncpa [#allocation7], 0
    %20 = vsyncpa [#allocation10], 0
    %21 = vsyncpa [#allocation5], 0
    %22 = vsyncpa [#allocation13], 0
    loop: start=0, step=1, limit=4
    $region2: #{tpu_custom_call.1} parent=1 // loop_pre_header
      _
    $region3: #{tpu_custom_call.1} parent=1 // loop_header
      %s24 = sphi 0, %s28
      %p25 = scmp.ge.s32.totalorder %s24, 4
      %s32 = sphi 0, %s32
      %s34 = sphi 0, %s32
      %s35 = sphi 0, %s34
      %s49 = sphi 0, %s35
      %s53 = sphi 0, %s53
      %s55 = sphi 0, %s53
      %s56 = sphi 0, %s55
      %s70 = sphi 0, %s56
      %s74 = sphi 0, %s74
      %s76 = sphi 0, %s74
      %s77 = sphi 0, %s76
      %s91 = sphi 0, %s77
      %s95 = sphi 0, %s95
      %s97 = sphi 0, %s95
      %s98 = sphi 0, %s97
      %s112 = sphi 0, %s98
      %s116 = sphi 0, %s116
      %s118 = sphi 0, %s116
      %s119 = sphi 0, %s118
      %s133 = sphi 0, %s119
      %s139 = sphi 0, %s141
      %s142 = sphi 0, %s139
      %s143 = sphi 0, %s142
      %s159 = sphi 0, %s143
      %s165 = sphi 0, %s167
      %s168 = sphi 0, %s165
      %s169 = sphi 0, %s168
      %s185 = sphi 0, %s169
      %s191 = sphi 0, %s193
      %s194 = sphi 0, %s191
      %s195 = sphi 0, %s194
      %s211 = sphi 0, %s195
      %s217 = sphi 0, %s219
      %s220 = sphi 0, %s217
      %s221 = sphi 0, %s220
      %s237 = sphi 0, %s221
      %s241 = sphi 0, %s241
      %s243 = sphi 0, %s241
      %s244 = sphi 0, %s243
      %s258 = sphi 0, %s244
      %s262 = sphi 0, %s262
      %s264 = sphi 0, %s262
      %s265 = sphi 0, %s264
      %s279 = sphi 0, %s265
      %s283 = sphi 0, %s283
      %s285 = sphi 0, %s283
      %s286 = sphi 0, %s285
      %s300 = sphi 0, %s286
      %s304 = sphi 0, %s304
      %s306 = sphi 0, %s304
      %s307 = sphi 0, %s306
      %s321 = sphi 0, %s307
    $region4: #{tpu_custom_call.1} parent=1 // loop_header_branch
      %27 = sbr.rel (%p25) target = $region8
    $region5: #{tpu_custom_call.1} parent=1 // loop_body
      %s29 = ssub.s32 %s24, 1
      %s30 = ssub.s32 %s24, 2
      %s31 = sadd.s32 %s24, 1
      %s33 = sadd.s32 %s32, 1
      %p36 = scmp.eq.s32.totalorder %s24, 1
      %p37 = scmp.ne.s32.totalorder %s32, %s34
      %p38 = scmp.eq.s32.totalorder %s24, 0
      %p39 = por %p37, %p38
      %p40 = scmp.ne.s32.totalorder %s32, %s34
      %p41 = scmp.eq.s32.totalorder %s29, 1
      %p42 = por %p40, %p41
      %p43 = scmp.ne.s32.totalorder %s34, %s35
      %p44 = scmp.eq.s32.totalorder %s29, 0
      %p45 = por %p43, %p44
      %p46 = scmp.ne.s32.totalorder %s34, %s35
      %p47 = scmp.eq.s32.totalorder %s30, 1
      %p48 = por %p46, %p47
      %p50 = scmp.ne.s32.totalorder %s35, %s49
      %p51 = scmp.eq.s32.totalorder %s30, 0
      %p52 = por %p50, %p51
      %s54 = sadd.s32 %s53, 1
      %p57 = scmp.eq.s32.totalorder %s24, 1
      %p58 = scmp.ne.s32.totalorder %s53, %s55
      %p59 = scmp.eq.s32.totalorder %s24, 0
      %p60 = por %p58, %p59
      %p61 = scmp.ne.s32.totalorder %s53, %s55
      %p62 = scmp.eq.s32.totalorder %s29, 1
      %p63 = por %p61, %p62
      %p64 = scmp.ne.s32.totalorder %s55, %s56
      %p65 = scmp.eq.s32.totalorder %s29, 0
      %p66 = por %p64, %p65
      %p67 = scmp.ne.s32.totalorder %s55, %s56
      %p68 = scmp.eq.s32.totalorder %s30, 1
      %p69 = por %p67, %p68
      %p71 = scmp.ne.s32.totalorder %s56, %s70
      %p72 = scmp.eq.s32.totalorder %s30, 0
      %p73 = por %p71, %p72
      %s75 = sadd.s32 %s74, 1
      %p78 = scmp.eq.s32.totalorder %s24, 1
      %p79 = scmp.ne.s32.totalorder %s74, %s76
      %p80 = scmp.eq.s32.totalorder %s24, 0
      %p81 = por %p79, %p80
      %p82 = scmp.ne.s32.totalorder %s74, %s76
      %p83 = scmp.eq.s32.totalorder %s29, 1
      %p84 = por %p82, %p83
      %p85 = scmp.ne.s32.totalorder %s76, %s77
      %p86 = scmp.eq.s32.totalorder %s29, 0
      %p87 = por %p85, %p86
      %p88 = scmp.ne.s32.totalorder %s76, %s77
      %p89 = scmp.eq.s32.totalorder %s30, 1
      %p90 = por %p88, %p89
      %p92 = scmp.ne.s32.totalorder %s77, %s91
      %p93 = scmp.eq.s32.totalorder %s30, 0
      %p94 = por %p92, %p93
      %s96 = sadd.s32 %s95, 1
      %p99 = scmp.eq.s32.totalorder %s24, 1
      %p100 = scmp.ne.s32.totalorder %s95, %s97
      %p101 = scmp.eq.s32.totalorder %s24, 0
      %p102 = por %p100, %p101
      %p103 = scmp.ne.s32.totalorder %s95, %s97
      %p104 = scmp.eq.s32.totalorder %s29, 1
      %p105 = por %p103, %p104
      %p106 = scmp.ne.s32.totalorder %s97, %s98
      %p107 = scmp.eq.s32.totalorder %s29, 0
      %p108 = por %p106, %p107
      %p109 = scmp.ne.s32.totalorder %s97, %s98
      %p110 = scmp.eq.s32.totalorder %s30, 1
      %p111 = por %p109, %p110
      %p113 = scmp.ne.s32.totalorder %s98, %s112
      %p114 = scmp.eq.s32.totalorder %s30, 0
      %p115 = por %p113, %p114
      %s117 = sadd.s32 %s116, 1
      %p120 = scmp.eq.s32.totalorder %s24, 1
      %p121 = scmp.ne.s32.totalorder %s116, %s118
      %p122 = scmp.eq.s32.totalorder %s24, 0
      %p123 = por %p121, %p122
      %p124 = scmp.ne.s32.totalorder %s116, %s118
      %p125 = scmp.eq.s32.totalorder %s29, 1
      %p126 = por %p124, %p125
      %p127 = scmp.ne.s32.totalorder %s118, %s119
      %p128 = scmp.eq.s32.totalorder %s29, 0
      %p129 = por %p127, %p128
      %p130 = scmp.ne.s32.totalorder %s118, %s119
      %p131 = scmp.eq.s32.totalorder %s30, 1
      %p132 = por %p130, %p131
      %p134 = scmp.ne.s32.totalorder %s119, %s133
      %p135 = scmp.eq.s32.totalorder %s30, 0
      %p136 = por %p134, %p135
      %s137 = ssub.s32 %s24, %s31
      %p138 = scmp.eq.s32.totalorder %s137, 0
      %s140 = sadd.s32 %s139, 1
      %s141 = scalar_select %p138, %s139, %s140
      %p144 = pneg %p138
      %p145 = scmp.eq.s32.totalorder %s24, 1
      %p146 = por %p144, %p145
      %p147 = scmp.ne.s32.totalorder %s139, %s142
      %p148 = scmp.eq.s32.totalorder %s24, 0
      %p149 = por %p147, %p148
      %p150 = scmp.ne.s32.totalorder %s139, %s142
      %p151 = scmp.eq.s32.totalorder %s29, 1
      %p152 = por %p150, %p151
      %p153 = scmp.ne.s32.totalorder %s142, %s143
      %p154 = scmp.eq.s32.totalorder %s29, 0
      %p155 = por %p153, %p154
      %p156 = scmp.ne.s32.totalorder %s142, %s143
      %p157 = scmp.eq.s32.totalorder %s30, 1
      %p158 = por %p156, %p157
      %p160 = scmp.ne.s32.totalorder %s143, %s159
      %p161 = scmp.eq.s32.totalorder %s30, 0
      %p162 = por %p160, %p161
      %s163 = ssub.s32 %s24, %s31
      %p164 = scmp.eq.s32.totalorder %s163, 0
      %s166 = sadd.s32 %s165, 1
      %s167 = scalar_select %p164, %s165, %s166
      %p170 = pneg %p164
      %p171 = scmp.eq.s32.totalorder %s24, 1
      %p172 = por %p170, %p171
      %p173 = scmp.ne.s32.totalorder %s165, %s168
      %p174 = scmp.eq.s32.totalorder %s24, 0
      %p175 = por %p173, %p174
      %p176 = scmp.ne.s32.totalorder %s165, %s168
      %p177 = scmp.eq.s32.totalorder %s29, 1
      %p178 = por %p176, %p177
      %p179 = scmp.ne.s32.totalorder %s168, %s169
      %p180 = scmp.eq.s32.totalorder %s29, 0
      %p181 = por %p179, %p180
      %p182 = scmp.ne.s32.totalorder %s168, %s169
      %p183 = scmp.eq.s32.totalorder %s30, 1
      %p184 = por %p182, %p183
      %p186 = scmp.ne.s32.totalorder %s169, %s185
      %p187 = scmp.eq.s32.totalorder %s30, 0
      %p188 = por %p186, %p187
      %s189 = ssub.s32 %s24, %s31
      %p190 = scmp.eq.s32.totalorder %s189, 0
      %s192 = sadd.s32 %s191, 1
      %s193 = scalar_select %p190, %s191, %s192
      %p196 = pneg %p190
      %p197 = scmp.eq.s32.totalorder %s24, 1
      %p198 = por %p196, %p197
      %p199 = scmp.ne.s32.totalorder %s191, %s194
      %p200 = scmp.eq.s32.totalorder %s24, 0
      %p201 = por %p199, %p200
      %p202 = scmp.ne.s32.totalorder %s191, %s194
      %p203 = scmp.eq.s32.totalorder %s29, 1
      %p204 = por %p202, %p203
      %p205 = scmp.ne.s32.totalorder %s194, %s195
      %p206 = scmp.eq.s32.totalorder %s29, 0
      %p207 = por %p205, %p206
      %p208 = scmp.ne.s32.totalorder %s194, %s195
      %p209 = scmp.eq.s32.totalorder %s30, 1
      %p210 = por %p208, %p209
      %p212 = scmp.ne.s32.totalorder %s195, %s211
      %p213 = scmp.eq.s32.totalorder %s30, 0
      %p214 = por %p212, %p213
      %s215 = ssub.s32 %s24, %s31
      %p216 = scmp.eq.s32.totalorder %s215, 0
      %s218 = sadd.s32 %s217, 1
      %s219 = scalar_select %p216, %s217, %s218
      %p222 = pneg %p216
      %p223 = scmp.eq.s32.totalorder %s24, 1
      %p224 = por %p222, %p223
      %p225 = scmp.ne.s32.totalorder %s217, %s220
      %p226 = scmp.eq.s32.totalorder %s24, 0
      %p227 = por %p225, %p226
      %p228 = scmp.ne.s32.totalorder %s217, %s220
      %p229 = scmp.eq.s32.totalorder %s29, 1
      %p230 = por %p228, %p229
      %p231 = scmp.ne.s32.totalorder %s220, %s221
      %p232 = scmp.eq.s32.totalorder %s29, 0
      %p233 = por %p231, %p232
      %p234 = scmp.ne.s32.totalorder %s220, %s221
      %p235 = scmp.eq.s32.totalorder %s30, 1
      %p236 = por %p234, %p235
      %p238 = scmp.ne.s32.totalorder %s221, %s237
      %p239 = scmp.eq.s32.totalorder %s30, 0
      %p240 = por %p238, %p239
      %s242 = sadd.s32 %s241, 1
      %p245 = scmp.eq.s32.totalorder %s24, 1
      %p246 = scmp.ne.s32.totalorder %s241, %s243
      %p247 = scmp.eq.s32.totalorder %s24, 0
      %p248 = por %p246, %p247
      %p249 = scmp.ne.s32.totalorder %s241, %s243
      %p250 = scmp.eq.s32.totalorder %s29, 1
      %p251 = por %p249, %p250
      %p252 = scmp.ne.s32.totalorder %s243, %s244
      %p253 = scmp.eq.s32.totalorder %s29, 0
      %p254 = por %p252, %p253
      %p255 = scmp.ne.s32.totalorder %s243, %s244
      %p256 = scmp.eq.s32.totalorder %s30, 1
      %p257 = por %p255, %p256
      %p259 = scmp.ne.s32.totalorder %s244, %s258
      %p260 = scmp.eq.s32.totalorder %s30, 0
      %p261 = por %p259, %p260
      %s263 = sadd.s32 %s262, 1
      %p266 = scmp.eq.s32.totalorder %s24, 1
      %p267 = scmp.ne.s32.totalorder %s262, %s264
      %p268 = scmp.eq.s32.totalorder %s24, 0
      %p269 = por %p267, %p268
      %p270 = scmp.ne.s32.totalorder %s262, %s264
      %p271 = scmp.eq.s32.totalorder %s29, 1
      %p272 = por %p270, %p271
      %p273 = scmp.ne.s32.totalorder %s264, %s265
      %p274 = scmp.eq.s32.totalorder %s29, 0
      %p275 = por %p273, %p274
      %p276 = scmp.ne.s32.totalorder %s264, %s265
      %p277 = scmp.eq.s32.totalorder %s30, 1
      %p278 = por %p276, %p277
      %p280 = scmp.ne.s32.totalorder %s265, %s279
      %p281 = scmp.eq.s32.totalorder %s30, 0
      %p282 = por %p280, %p281
      %s284 = sadd.s32 %s283, 1
      %p287 = scmp.eq.s32.totalorder %s24, 1
      %p288 = scmp.ne.s32.totalorder %s283, %s285
      %p289 = scmp.eq.s32.totalorder %s24, 0
      %p290 = por %p288, %p289
      %p291 = scmp.ne.s32.totalorder %s283, %s285
      %p292 = scmp.eq.s32.totalorder %s29, 1
      %p293 = por %p291, %p292
      %p294 = scmp.ne.s32.totalorder %s285, %s286
      %p295 = scmp.eq.s32.totalorder %s29, 0
      %p296 = por %p294, %p295
      %p297 = scmp.ne.s32.totalorder %s285, %s286
      %p298 = scmp.eq.s32.totalorder %s30, 1
      %p299 = por %p297, %p298
      %p301 = scmp.ne.s32.totalorder %s286, %s300
      %p302 = scmp.eq.s32.totalorder %s30, 0
      %p303 = por %p301, %p302
      %s305 = sadd.s32 %s304, 1
      %p308 = scmp.eq.s32.totalorder %s24, 1
      %p309 = scmp.ne.s32.totalorder %s304, %s306
      %p310 = scmp.eq.s32.totalorder %s24, 0
      %p311 = por %p309, %p310
      %p312 = scmp.ne.s32.totalorder %s304, %s306
      %p313 = scmp.eq.s32.totalorder %s29, 1
      %p314 = por %p312, %p313
      %p315 = scmp.ne.s32.totalorder %s306, %s307
      %p316 = scmp.eq.s32.totalorder %s29, 0
      %p317 = por %p315, %p316
      %p318 = scmp.ne.s32.totalorder %s306, %s307
      %p319 = scmp.eq.s32.totalorder %s30, 1
      %p320 = por %p318, %p319
      %p322 = scmp.ne.s32.totalorder %s307, %s321
      %p323 = scmp.eq.s32.totalorder %s30, 0
      %p324 = por %p322, %p323
      %p325 = scmp.le.s32.totalorder 1, %s24
      %p326 = scmp.lt.s32.totalorder %s24, 3
      %p327 = pnand %p325, %p326
      %p328 = pneg %p327
      // Predicated region
      $region9: #{tpu_custom_call.1} parent=5 // pred_check
        _
      $region10: #{tpu_custom_call.1} parent=5 // pred_check_branch
        %330 = sbr.rel (%p327) target = $region12
      $region11: #{tpu_custom_call.1} parent=5 // pred_region
        %s331 = ssub.s32 %s24, 1
        // Predicated region
        $region13: #{tpu_custom_call.1} parent=11 // pred_check
          %p332 = pneg %p45
        $region14: #{tpu_custom_call.1} parent=11 // pred_check_branch
          %334 = sbr.rel (%p332) target = $region16
        $region15: #{tpu_custom_call.1} parent=11 // pred_region
          %s336 = ssub.s32 256, 256
          %337 = vsyncadd [#allocation4], %s336
          %s338 = sshll.u32 [#allocation3], 4
          %s339 = int_to_ptr.vmem [resolvable:$true] %s338
          %344 = dma.hbm_to_vmem [thread:$0]  %s0, 256, %s339, [#allocation4], 128, 128, 8
        $region16: #{tpu_custom_call.1} parent=11 // pred_fallthru
          _
        // Predicated region
        $region17: #{tpu_custom_call.1} parent=11 // pred_check
          %p345 = pneg %p66
        $region18: #{tpu_custom_call.1} parent=11 // pred_check_branch
          %347 = sbr.rel (%p345) target = $region20
        $region19: #{tpu_custom_call.1} parent=11 // pred_region
          %s349 = ssub.s32 32, 32
          %350 = vsyncadd [#allocation7], %s349
          %s351 = sshll.u32 [#allocation6], 4
          %s352 = int_to_ptr.vmem [resolvable:$true] %s351
          %357 = dma.hbm_to_vmem [thread:$0]  %s1, 32, %s352, [#allocation7], 16, 16, 1
        $region20: #{tpu_custom_call.1} parent=11 // pred_fallthru
          _
        // Predicated region
        $region21: #{tpu_custom_call.1} parent=11 // pred_check
          %p358 = pneg %p87
        $region22: #{tpu_custom_call.1} parent=11 // pred_check_branch
          %360 = sbr.rel (%p358) target = $region24
        $region23: #{tpu_custom_call.1} parent=11 // pred_region
          _
        $region24: #{tpu_custom_call.1} parent=11 // pred_fallthru
          _
        // Predicated region
        $region25: #{tpu_custom_call.1} parent=11 // pred_check
          %p361 = pneg %p108
        $region26: #{tpu_custom_call.1} parent=11 // pred_check_branch
          %363 = sbr.rel (%p361) target = $region28
        $region27: #{tpu_custom_call.1} parent=11 // pred_region
          %s365 = ssub.s32 16, 16
          %366 = vsyncadd [#allocation7], %s365
          %s368 = sshll.u32 [#allocation8], 4
          %s369 = int_to_ptr.vmem [resolvable:$true] %s368
          %371 = dma.hbm_to_vmem [thread:$0]  %s3, 16, %s369, [#allocation7]
        $region28: #{tpu_custom_call.1} parent=11 // pred_fallthru
          _
        // Predicated region
        $region29: #{tpu_custom_call.1} parent=11 // pred_check
          %p372 = pneg %p129
        $region30: #{tpu_custom_call.1} parent=11 // pred_check_branch
          %374 = sbr.rel (%p372) target = $region32
        $region31: #{tpu_custom_call.1} parent=11 // pred_region
          _
        $region32: #{tpu_custom_call.1} parent=11 // pred_fallthru
          _
        // Predicated region
        $region33: #{tpu_custom_call.1} parent=11 // pred_check
          %p375 = pneg %p254
        $region34: #{tpu_custom_call.1} parent=11 // pred_check_branch
          %377 = sbr.rel (%p375) target = $region36
        $region35: #{tpu_custom_call.1} parent=11 // pred_region
          %s379 = ssub.s32 128, 128
          %380 = vsyncadd [#allocation10], %s379
          %s382 = sshll.u32 [#allocation9], 4
          %s383 = int_to_ptr.vmem [resolvable:$true] %s382
          %385 = dma.hbm_to_vmem [thread:$0]  %s9, 128, %s383, [#allocation10]
        $region36: #{tpu_custom_call.1} parent=11 // pred_fallthru
          _
        // Predicated region
        $region37: #{tpu_custom_call.1} parent=11 // pred_check
          %p386 = pneg %p275
        $region38: #{tpu_custom_call.1} parent=11 // pred_check_branch
          %388 = sbr.rel (%p386) target = $region40
        $region39: #{tpu_custom_call.1} parent=11 // pred_region
          _
        $region40: #{tpu_custom_call.1} parent=11 // pred_fallthru
          _
      $region12: #{tpu_custom_call.1} parent=5 // pred_fallthru
        _
      %p389 = scmp.lt.s32.totalorder %s24, 2
      // Predicated region
      $region41: #{tpu_custom_call.1} parent=5 // pred_check
        %p390 = pneg %p389
      $region42: #{tpu_custom_call.1} parent=5 // pred_check_branch
        %392 = sbr.rel (%p390) target = $region44
      $region43: #{tpu_custom_call.1} parent=5 // pred_region
        // Predicated region
        $region45: #{tpu_custom_call.1} parent=43 // pred_check
          %p393 = pneg %p149
        $region46: #{tpu_custom_call.1} parent=43 // pred_check_branch
          %395 = sbr.rel (%p393) target = $region48
        $region47: #{tpu_custom_call.1} parent=43 // pred_region
          %p396 = scmp.lt.s32.totalorder %s24, 1
          %s397 = scalar_select %p396, %s24, 1
          %s398 = smul.addr %s397, 4
          %s399 = smul.addr %s398, 8
          %s400 = scalar_lea.vmem %s5, %s399
        $region48: #{tpu_custom_call.1} parent=43 // pred_fallthru
          _
        // Predicated region
        $region49: #{tpu_custom_call.1} parent=43 // pred_check
          %p401 = pneg %p175
        $region50: #{tpu_custom_call.1} parent=43 // pred_check_branch
          %403 = sbr.rel (%p401) target = $region52
        $region51: #{tpu_custom_call.1} parent=43 // pred_region
          %p404 = scmp.lt.s32.totalorder %s24, 1
          %s405 = scalar_select %p404, %s24, 1
          %s406 = smul.addr %s405, 4
          %s407 = smul.addr %s406, 8
          %s408 = scalar_lea.vmem %s6, %s407
        $region52: #{tpu_custom_call.1} parent=43 // pred_fallthru
          _
        // Predicated region
        $region53: #{tpu_custom_call.1} parent=43 // pred_check
          %p409 = pneg %p201
        $region54: #{tpu_custom_call.1} parent=43 // pred_check_branch
          %411 = sbr.rel (%p409) target = $region56
        $region55: #{tpu_custom_call.1} parent=43 // pred_region
          %p412 = scmp.lt.s32.totalorder %s24, 1
          %s413 = scalar_select %p412, %s24, 1
          %s414 = smul.addr %s413, 8
          %s415 = smul.addr %s414, 8
          %s416 = scalar_lea.vmem %s7, %s415
        $region56: #{tpu_custom_call.1} parent=43 // pred_fallthru
          _
        // Predicated region
        $region57: #{tpu_custom_call.1} parent=43 // pred_check
          %p417 = pneg %p227
        $region58: #{tpu_custom_call.1} parent=43 // pred_check_branch
          %419 = sbr.rel (%p417) target = $region60
        $region59: #{tpu_custom_call.1} parent=43 // pred_region
          %p420 = scmp.lt.s32.totalorder %s24, 1
          %s421 = scalar_select %p420, %s24, 1
          %s422 = smul.addr %s421, 8
          %s423 = scalar_lea.vmem %s8, %s422
        $region60: #{tpu_custom_call.1} parent=43 // pred_fallthru
          _
      $region44: #{tpu_custom_call.1} parent=5 // pred_fallthru
        _
      %p424 = scmp.le.s32.totalorder 1, %s24
      %p425 = scmp.lt.s32.totalorder %s24, 3
      %p426 = pnand %p424, %p425
      %p427 = pneg %p426
      // Predicated region
      $region61: #{tpu_custom_call.1} parent=5 // pred_check
        _
      $region62: #{tpu_custom_call.1} parent=5 // pred_check_branch
        %429 = sbr.rel (%p426) target = $region64
      $region63: #{tpu_custom_call.1} parent=5 // pred_region
        %s430 = ssub.s32 %s24, 1
        // Predicated region
        $region65: #{tpu_custom_call.1} parent=63 // pred_check
          %p431 = pneg %p45
        $region66: #{tpu_custom_call.1} parent=63 // pred_check_branch
          %433 = sbr.rel (%p431) target = $region68
        $region67: #{tpu_custom_call.1} parent=63 // pred_region
          %434 = dma.done [#allocation4], 256
        $region68: #{tpu_custom_call.1} parent=63 // pred_fallthru
          _
        // Predicated region
        $region69: #{tpu_custom_call.1} parent=63 // pred_check
          %p435 = pneg %p66
        $region70: #{tpu_custom_call.1} parent=63 // pred_check_branch
          %437 = sbr.rel (%p435) target = $region72
        $region71: #{tpu_custom_call.1} parent=63 // pred_region
          %438 = dma.done [#allocation7], 32
        $region72: #{tpu_custom_call.1} parent=63 // pred_fallthru
          _
        // Predicated region
        $region73: #{tpu_custom_call.1} parent=63 // pred_check
          %p439 = pneg %p108
        $region74: #{tpu_custom_call.1} parent=63 // pred_check_branch
          %441 = sbr.rel (%p439) target = $region76
        $region75: #{tpu_custom_call.1} parent=63 // pred_region
          %442 = dma.done [#allocation7], 16
        $region76: #{tpu_custom_call.1} parent=63 // pred_fallthru
          _
        // Predicated region
        $region77: #{tpu_custom_call.1} parent=63 // pred_check
          %p443 = pneg %p254
        $region78: #{tpu_custom_call.1} parent=63 // pred_check_branch
          %445 = sbr.rel (%p443) target = $region80
        $region79: #{tpu_custom_call.1} parent=63 // pred_region
          %446 = dma.done [#allocation10], 128
        $region80: #{tpu_custom_call.1} parent=63 // pred_fallthru
          _
        %p447 = pneg %p45
        %p448 = pneg %p42
        %p449 = pneg %p66
        %p450 = pneg %p63
        %p451 = pneg %p87
        %p452 = pneg %p84
        %p453 = pneg %p108
        %p454 = pneg %p105
        %p455 = pneg %p129
        %p456 = pneg %p126
        %p457 = scmp.lt.s32.totalorder %s29, 1
        %s458 = scalar_select %p457, %s29, 1
        %s459 = smul.addr %s458, 4
        %s460 = smul.addr %s459, 8
        %s461 = scalar_lea.vmem %s5, %s460
        %p462 = pneg %p155
        %p463 = pneg %p152
        %p464 = scmp.lt.s32.totalorder %s29, 1
        %s465 = scalar_select %p464, %s29, 1
        %s466 = smul.addr %s465, 4
        %s467 = smul.addr %s466, 8
        %s468 = scalar_lea.vmem %s6, %s467
        %p469 = pneg %p181
        %p470 = pneg %p178
        %p471 = scmp.lt.s32.totalorder %s29, 1
        %s472 = scalar_select %p471, %s29, 1
        %s473 = smul.addr %s472, 8
        %s474 = smul.addr %s473, 8
        %s475 = scalar_lea.vmem %s7, %s474
        %p476 = pneg %p207
        %p477 = pneg %p204
        %p478 = scmp.lt.s32.totalorder %s29, 1
        %s479 = scalar_select %p478, %s29, 1
        %s480 = smul.addr %s479, 8
        %s481 = scalar_lea.vmem %s8, %s480
        %p482 = pneg %p233
        %p483 = pneg %p230
        %p484 = pneg %p254
        %p485 = pneg %p251
        %p486 = pneg %p275
        %p487 = pneg %p272
        %p488 = pneg %p296
        %p489 = pneg %p293
        %p490 = pneg %p317
        %p491 = pneg %p314
        %p492 = scmp.lt.s32.totalorder %s29, 1
        %s493 = scalar_select %p492, %s29, 1
        %s494 = smul.addr %s493, 4
        %s495 = smul.addr %s494, 8
        %s496 = scalar_lea.vmem %s5, %s495
        %p497 = scmp.lt.s32.totalorder %s29, 1
        %s498 = scalar_select %p497, %s29, 1
        %s499 = smul.addr %s498, 4
        %s500 = smul.addr %s499, 8
        %s501 = scalar_lea.vmem %s6, %s500
        %p502 = scmp.lt.s32.totalorder %s29, 1
        %s503 = scalar_select %p502, %s29, 1
        %s504 = smul.addr %s503, 8
        %s505 = smul.addr %s504, 8
        %s506 = scalar_lea.vmem %s7, %s505
        %p507 = scmp.lt.s32.totalorder %s29, 1
        %s508 = scalar_select %p507, %s29, 1
        %s509 = smul.addr %s508, 8
        %s510 = scalar_lea.vmem %s8, %s509
        %p511 = scmp.eq.s32.totalorder %s29, 0
        // Predicated region
        $region81: #{tpu_custom_call.1} parent=63 // pred_check
          %p512 = pneg %p511
        $region82: #{tpu_custom_call.1} parent=63 // pred_check_branch
          %514 = sbr.rel (%p512) target = $region84
        $region83: #{tpu_custom_call.1} parent=63 // pred_region
          %v515 = vld [vmem:[#allocation3] sm:$0xff]
          %v516 = vld [vmem:[#allocation3 + $0x8] sm:$0xff]
          %v517 = vld [vmem:[%s2] sm:$0xff]
          %v518 = vld [vmem:[%s2 + $0x8] sm:$0xff]
          %v519 = vld [vmem:[%s2 + $0x10] sm:$0xff]
          %v520 = vld [vmem:[%s2 + $0x18] sm:$0xff]
          %v521 = vld [vmem:[#allocation8] sm:$0x1]
          %v523 = vlaneseq
          %v524 = vshrl.u32 %v523, 7
          %v525 = vsub.s32 0, %v524
          %v526 = vrot.slane %v521, %v525
          %vm528 = vcmask 261120
          %v530 = vsel %vm528, %v515, 0
          %v533 = vsel %vm528, %v516, 0
          %535 = vmatprep.subr.mxu0 0.0
          %536 = vmatpush1.msra.mxu0 0.0
          %537 = vmatprep.subr.mxu0 0.0
          %538 = vmatpush1.msra.mxu0 0.0
          %539 = vmatprep.subr.mxu0 0.0
          %540 = vmatpush1.msra.mxu0 0.0
          %541 = vmatprep.subr.mxu0 0.0
          %542 = vmatpush1.msra.mxu0 0.0
          %543 = vmatprep.subr.mxu0 0.0
          %544 = vmatpush1.msra.mxu0 0.0
          %545 = vmatprep.subr.mxu0 0.0
          %546 = vmatpush1.msra.mxu0 0.0
          %547 = vmatprep.subr.mxu0 0.0
          %548 = vmatpush1.msra.mxu0 0.0
          %549 = vmatprep.subr.mxu0 0.0
          %550 = vmatpush1.msra.mxu0 0.0
          %551 = vmatprep.subr.mxu0 0.0
          %552 = vmatpush1.msra.mxu0 0.0
          %553 = vmatprep.subr.mxu0 0.0
          %554 = vmatpush1.msra.mxu0 0.0
          %555 = vmatprep.subr.mxu0 0.0
          %556 = vmatpush1.msra.mxu0 0.0
          %557 = vmatprep.subr.mxu0 0.0
          %558 = vmatpush1.msra.mxu0 0.0
          %559 = vmatprep.subr.mxu0 0.0
          %560 = vmatpush1.msra.mxu0 %v520
          %561 = vmatprep.subr.mxu0 0.0
          %562 = vmatpush1.msra.mxu0 %v519
          %563 = vmatprep.subr.mxu0 0.0
          %564 = vmatpush1.msra.mxu0 %v518
          %565 = vmatprep.subr.mxu0 0.0
          %566 = vmatpush1.msra.mxu0 %v517
          %567 = vmatprep.subr.mxu0 0.0
          %568 = vmatpush2.msra.mxu0 0.0
          %569 = vmatprep.subr.mxu0 0.0
          %570 = vmatpush2.msra.mxu0 0.0
          %571 = vmatprep.subr.mxu0 0.0
          %572 = vmatpush2.msra.mxu0 0.0
          %573 = vmatprep.subr.mxu0 0.0
          %574 = vmatpush2.msra.mxu0 0.0
          %575 = vmatprep.subr.mxu0 0.0
          %576 = vmatpush2.msra.mxu0 0.0
          %577 = vmatprep.subr.mxu0 0.0
          %578 = vmatpush2.msra.mxu0 0.0
          %579 = vmatprep.subr.mxu0 0.0
          %580 = vmatpush2.msra.mxu0 0.0
          %581 = vmatprep.subr.mxu0 0.0
          %582 = vmatpush2.msra.mxu0 0.0
          %583 = vmatprep.subr.mxu0 0.0
          %584 = vmatpush2.msra.mxu0 0.0
          %585 = vmatprep.subr.mxu0 0.0
          %586 = vmatpush2.msra.mxu0 0.0
          %587 = vmatprep.subr.mxu0 0.0
          %588 = vmatpush2.msra.mxu0 0.0
          %589 = vmatprep.subr.mxu0 0.0
          %590 = vmatpush2.msra.mxu0 0.0
          %591 = vmatprep.subr.mxu0 0.0
          %592 = vmatpush2.msra.mxu0 0.0
          %593 = vmatprep.subr.mxu0 0.0
          %594 = vmatpush2.msra.mxu0 0.0
          %595 = vmatprep.subr.mxu0 0.0
          %596 = vmatpush2.msra.mxu0 0.0
          %597 = vmatprep.subr.mxu0 0.0
          %598 = vmatpush2.msra.mxu0 0.0
          %599 = vmatprep.mubr.f32.mxu0 0.0
          %600 = vmatmul.mubr.f32.gmra.mxu0 %v530
          %v601 = vpop.f32.mrf.mxu0
          %v602 = vadd.f32 %v526, %v601
          %v603 = vpop.f32.mrf.mxu0
          %604 = vmatprep.mubr.f32.mxu0 0.0
          %605 = vmatmul.mubr.f32.gmra.mxu0 %v533
          %v606 = vpop.f32.mrf.mxu0
          %v607 = vadd.f32 %v526, %v606
          %v608 = vpop.f32.mrf.mxu0
          %609 = vdwg.mxu0
          %610 = vst.msk [vmem:[#allocation2] sm:$0xff] %vm528, %v602
          %611 = vst.msk [vmem:[#allocation2 + $0x8] sm:$0xff] %vm528, %v607
        $region84: #{tpu_custom_call.1} parent=63 // pred_fallthru
          _
        %v612 = vld [vmem:[#allocation2] sm:$0xff]
        %v613 = vld [vmem:[#allocation2 + $0x8] sm:$0xff]
        %v614 = vld [vmem:[%s510] sm:$0xff]
        %v615 = vld [vmem:[%s496] sm:$0xff]
        %v616 = vld [vmem:[%s496 + $0x8] sm:$0xff]
        %v617 = vld [vmem:[%s496 + $0x10] sm:$0xff]
        %v618 = vld [vmem:[%s496 + $0x18] sm:$0xff]
        %vm619 = vcmask 261120
        %v621 = vsel %vm619, %v612, 0
        %v624 = vsel %vm619, %v613, 0
        %626 = vmatprep.subr.mxu0 0.0
        %627 = vmatpush1.msra.mxu0 0.0
        %628 = vmatprep.subr.mxu0 0.0
        %629 = vmatpush1.msra.mxu0 0.0
        %630 = vmatprep.subr.mxu0 0.0
        %631 = vmatpush1.msra.mxu0 0.0
        %632 = vmatprep.subr.mxu0 0.0
        %633 = vmatpush1.msra.mxu0 0.0
        %634 = vmatprep.subr.mxu0 0.0
        %635 = vmatpush1.msra.mxu0 0.0
        %636 = vmatprep.subr.mxu0 0.0
        %637 = vmatpush1.msra.mxu0 0.0
        %638 = vmatprep.subr.mxu0 0.0
        %639 = vmatpush1.msra.mxu0 0.0
        %640 = vmatprep.subr.mxu0 0.0
        %641 = vmatpush1.msra.mxu0 0.0
        %642 = vmatprep.subr.mxu0 0.0
        %643 = vmatpush1.msra.mxu0 0.0
        %644 = vmatprep.subr.mxu0 0.0
        %645 = vmatpush1.msra.mxu0 0.0
        %646 = vmatprep.subr.mxu0 0.0
        %647 = vmatpush1.msra.mxu0 0.0
        %648 = vmatprep.subr.mxu0 0.0
        %649 = vmatpush1.msra.mxu0 0.0
        %650 = vmatprep.subr.mxu0 0.0
        %651 = vmatpush1.msra.mxu0 %v618
        %652 = vmatprep.subr.mxu0 0.0
        %653 = vmatpush1.msra.mxu0 %v617
        %654 = vmatprep.subr.mxu0 0.0
        %655 = vmatpush1.msra.mxu0 %v616
        %656 = vmatprep.subr.mxu0 0.0
        %657 = vmatpush1.msra.mxu0 %v615
        %658 = vmatprep.subr.mxu0 0.0
        %659 = vmatpush2.msra.mxu0 0.0
        %660 = vmatprep.subr.mxu0 0.0
        %661 = vmatpush2.msra.mxu0 0.0
        %662 = vmatprep.subr.mxu0 0.0
        %663 = vmatpush2.msra.mxu0 0.0
        %664 = vmatprep.subr.mxu0 0.0
        %665 = vmatpush2.msra.mxu0 0.0
        %666 = vmatprep.subr.mxu0 0.0
        %667 = vmatpush2.msra.mxu0 0.0
        %668 = vmatprep.subr.mxu0 0.0
        %669 = vmatpush2.msra.mxu0 0.0
        %670 = vmatprep.subr.mxu0 0.0
        %671 = vmatpush2.msra.mxu0 0.0
        %672 = vmatprep.subr.mxu0 0.0
        %673 = vmatpush2.msra.mxu0 0.0
        %674 = vmatprep.subr.mxu0 0.0
        %675 = vmatpush2.msra.mxu0 0.0
        %676 = vmatprep.subr.mxu0 0.0
        %677 = vmatpush2.msra.mxu0 0.0
        %678 = vmatprep.subr.mxu0 0.0
        %679 = vmatpush2.msra.mxu0 0.0
        %680 = vmatprep.subr.mxu0 0.0
        %681 = vmatpush2.msra.mxu0 0.0
        %682 = vmatprep.subr.mxu0 0.0
        %683 = vmatpush2.msra.mxu0 0.0
        %684 = vmatprep.subr.mxu0 0.0
        %685 = vmatpush2.msra.mxu0 0.0
        %686 = vmatprep.subr.mxu0 0.0
        %687 = vmatpush2.msra.mxu0 0.0
        %688 = vmatprep.subr.mxu0 0.0
        %689 = vmatpush2.msra.mxu0 0.0
        %690 = vmatprep.mubr.f32.mxu0 0.0
        %691 = vmatmul.mubr.f32.gmra.mxu0 %v621
        %v692 = vpop.f32.mrf.mxu0
        %v693 = vadd.f32 0.0, %v692
        %v694 = vpop.f32.mrf.mxu0
        %695 = vmatprep.mubr.f32.mxu0 0.0
        %696 = vmatmul.mubr.f32.gmra.mxu0 %v624
        %v697 = vpop.f32.mrf.mxu0
        %v698 = vadd.f32 0.0, %v697
        %v699 = vpop.f32.mrf.mxu0
        %700 = vdwg.mxu0
        %v701 = vld [vmem:[%s4] sm:$0xff]
        %v702 = vld [vmem:[%s4 + $0x8] sm:$0xff]
        %v703 = vld [vmem:[%s4 + $0x10] sm:$0xff]
        %v704 = vld [vmem:[%s4 + $0x18] sm:$0xff]
        %v705 = vlaneseq
        %v706 = vshrl.u32 %v705, 7
        %v707 = vsub.s32 1, %v706
        %v708 = vrot.slane %v614, %v707
        %v709 = vadd.f32 %v693, %v708
        %v710 = vadd.f32 %v698, %v708
        %v712 = vsel %vm619, %v709, 0
        %v715 = vsel %vm619, %v710, 0
        %717 = vmatprep.subr.mxu0 0.0
        %718 = vmatpush1.msra.mxu0 0.0
        %719 = vmatprep.subr.mxu0 0.0
        %720 = vmatpush1.msra.mxu0 0.0
        %721 = vmatprep.subr.mxu0 0.0
        %722 = vmatpush1.msra.mxu0 0.0
        %723 = vmatprep.subr.mxu0 0.0
        %724 = vmatpush1.msra.mxu0 0.0
        %725 = vmatprep.subr.mxu0 0.0
        %726 = vmatpush1.msra.mxu0 0.0
        %727 = vmatprep.subr.mxu0 0.0
        %728 = vmatpush1.msra.mxu0 0.0
        %729 = vmatprep.subr.mxu0 0.0
        %730 = vmatpush1.msra.mxu0 0.0
        %731 = vmatprep.subr.mxu0 0.0
        %732 = vmatpush1.msra.mxu0 0.0
        %733 = vmatprep.subr.mxu0 0.0
        %734 = vmatpush1.msra.mxu0 0.0
        %735 = vmatprep.subr.mxu0 0.0
        %736 = vmatpush1.msra.mxu0 0.0
        %737 = vmatprep.subr.mxu0 0.0
        %738 = vmatpush1.msra.mxu0 0.0
        %739 = vmatprep.subr.mxu0 0.0
        %740 = vmatpush1.msra.mxu0 0.0
        %741 = vmatprep.subr.mxu0 0.0
        %742 = vmatpush1.msra.mxu0 %v704
        %743 = vmatprep.subr.mxu0 0.0
        %744 = vmatpush1.msra.mxu0 %v703
        %745 = vmatprep.subr.mxu0 0.0
        %746 = vmatpush1.msra.mxu0 %v702
        %747 = vmatprep.subr.mxu0 0.0
        %748 = vmatpush1.msra.mxu0 %v701
        %749 = vmatprep.subr.mxu0 0.0
        %750 = vmatpush2.msra.mxu0 0.0
        %751 = vmatprep.subr.mxu0 0.0
        %752 = vmatpush2.msra.mxu0 0.0
        %753 = vmatprep.subr.mxu0 0.0
        %754 = vmatpush2.msra.mxu0 0.0
        %755 = vmatprep.subr.mxu0 0.0
        %756 = vmatpush2.msra.mxu0 0.0
        %757 = vmatprep.subr.mxu0 0.0
        %758 = vmatpush2.msra.mxu0 0.0
        %759 = vmatprep.subr.mxu0 0.0
        %760 = vmatpush2.msra.mxu0 0.0
        %761 = vmatprep.subr.mxu0 0.0
        %762 = vmatpush2.msra.mxu0 0.0
        %763 = vmatprep.subr.mxu0 0.0
        %764 = vmatpush2.msra.mxu0 0.0
        %765 = vmatprep.subr.mxu0 0.0
        %766 = vmatpush2.msra.mxu0 0.0
        %767 = vmatprep.subr.mxu0 0.0
        %768 = vmatpush2.msra.mxu0 0.0
        %769 = vmatprep.subr.mxu0 0.0
        %770 = vmatpush2.msra.mxu0 0.0
        %771 = vmatprep.subr.mxu0 0.0
        %772 = vmatpush2.msra.mxu0 0.0
        %773 = vmatprep.subr.mxu0 0.0
        %774 = vmatpush2.msra.mxu0 0.0
        %775 = vmatprep.subr.mxu0 0.0
        %776 = vmatpush2.msra.mxu0 0.0
        %777 = vmatprep.subr.mxu0 0.0
        %778 = vmatpush2.msra.mxu0 0.0
        %779 = vmatprep.subr.mxu0 0.0
        %780 = vmatpush2.msra.mxu0 0.0
        %781 = vmatprep.mubr.f32.mxu0 0.0
        %782 = vmatmul.mubr.f32.gmra.mxu0 %v712
        %v783 = vpop.f32.mrf.mxu0
        %v784 = vadd.f32 0.0, %v783
        %v785 = vpop.f32.mrf.mxu0
        %786 = vmatprep.mubr.f32.mxu0 0.0
        %787 = vmatmul.mubr.f32.gmra.mxu0 %v715
        %v788 = vpop.f32.mrf.mxu0
        %v789 = vadd.f32 0.0, %v788
        %v790 = vpop.f32.mrf.mxu0
        %791 = vdwg.mxu0
        %794 = vrot.lane.b32.xlu0 %v693, 96
        %v795 = vpop.permute.xlu0 %794
        %796 = vrot.lane.b32.xlu0 %v698, 96
        %v797 = vpop.permute.xlu0 %796
        %v798 = vsel %vm619, %v795, 0
        %v800 = vsel %vm619, %v797, 0
        %802 = vmatprep.subr.mxu0 0.0
        %803 = vmatpush1.msra.mxu0 0.0
        %804 = vmatprep.subr.mxu0 0.0
        %805 = vmatpush1.msra.mxu0 0.0
        %806 = vmatprep.subr.mxu0 0.0
        %807 = vmatpush1.msra.mxu0 0.0
        %808 = vmatprep.subr.mxu0 0.0
        %809 = vmatpush1.msra.mxu0 0.0
        %810 = vmatprep.subr.mxu0 0.0
        %811 = vmatpush1.msra.mxu0 0.0
        %812 = vmatprep.subr.mxu0 0.0
        %813 = vmatpush1.msra.mxu0 0.0
        %814 = vmatprep.subr.mxu0 0.0
        %815 = vmatpush1.msra.mxu0 0.0
        %816 = vmatprep.subr.mxu0 0.0
        %817 = vmatpush1.msra.mxu0 0.0
        %818 = vmatprep.subr.mxu0 0.0
        %819 = vmatpush1.msra.mxu0 0.0
        %820 = vmatprep.subr.mxu0 0.0
        %821 = vmatpush1.msra.mxu0 0.0
        %822 = vmatprep.subr.mxu0 0.0
        %823 = vmatpush1.msra.mxu0 0.0
        %824 = vmatprep.subr.mxu0 0.0
        %825 = vmatpush1.msra.mxu0 0.0
        %826 = vmatprep.subr.mxu0 0.0
        %827 = vmatpush1.msra.mxu0 %v704
        %828 = vmatprep.subr.mxu0 0.0
        %829 = vmatpush1.msra.mxu0 %v703
        %830 = vmatprep.subr.mxu0 0.0
        %831 = vmatpush1.msra.mxu0 %v702
        %832 = vmatprep.subr.mxu0 0.0
        %833 = vmatpush1.msra.mxu0 %v701
        %834 = vmatprep.subr.mxu0 0.0
        %835 = vmatpush2.msra.mxu0 0.0
        %836 = vmatprep.subr.mxu0 0.0
        %837 = vmatpush2.msra.mxu0 0.0
        %838 = vmatprep.subr.mxu0 0.0
        %839 = vmatpush2.msra.mxu0 0.0
        %840 = vmatprep.subr.mxu0 0.0
        %841 = vmatpush2.msra.mxu0 0.0
        %842 = vmatprep.subr.mxu0 0.0
        %843 = vmatpush2.msra.mxu0 0.0
        %844 = vmatprep.subr.mxu0 0.0
        %845 = vmatpush2.msra.mxu0 0.0
        %846 = vmatprep.subr.mxu0 0.0
        %847 = vmatpush2.msra.mxu0 0.0
        %848 = vmatprep.subr.mxu0 0.0
        %849 = vmatpush2.msra.mxu0 0.0
        %850 = vmatprep.subr.mxu0 0.0
        %851 = vmatpush2.msra.mxu0 0.0
        %852 = vmatprep.subr.mxu0 0.0
        %853 = vmatpush2.msra.mxu0 0.0
        %854 = vmatprep.subr.mxu0 0.0
        %855 = vmatpush2.msra.mxu0 0.0
        %856 = vmatprep.subr.mxu0 0.0
        %857 = vmatpush2.msra.mxu0 0.0
        %858 = vmatprep.subr.mxu0 0.0
        %859 = vmatpush2.msra.mxu0 0.0
        %860 = vmatprep.subr.mxu0 0.0
        %861 = vmatpush2.msra.mxu0 0.0
        %862 = vmatprep.subr.mxu0 0.0
        %863 = vmatpush2.msra.mxu0 0.0
        %864 = vmatprep.subr.mxu0 0.0
        %865 = vmatpush2.msra.mxu0 0.0
        %866 = vmatprep.mubr.f32.mxu0 0.0
        %867 = vmatmul.mubr.f32.gmra.mxu0 %v798
        %v868 = vpop.f32.mrf.mxu0
        %v869 = vadd.f32 0.0, %v868
        %v870 = vpop.f32.mrf.mxu0
        %871 = vmatprep.mubr.f32.mxu0 0.0
        %872 = vmatmul.mubr.f32.gmra.mxu0 %v800
        %v873 = vpop.f32.mrf.mxu0
        %v874 = vadd.f32 0.0, %v873
        %v875 = vpop.f32.mrf.mxu0
        %876 = vdwg.mxu0
        %v877 = vlaneseq
        %v878 = vshrl.u32 %v877, 7
        %v879 = vsub.s32 0, %v878
        %v880 = vrot.slane %v614, %v879
        %v881 = vadd.f32 %v693, %v880
        %v882 = vadd.f32 %v698, %v880
        %v883 = vld [vmem:[#allocation6] sm:$0x1]
        %v884 = vld [vmem:[#allocation6 + $0x1] sm:$0x1]
        %v885 = vlaneseq
        %v886 = vshrl.u32 %v885, 7
        %v887 = vadd.s32 %v886, 8
        %v888 = vand.u32 %v886, 7
        %v889 = vand.u32 %v887, 7
        %v890 = vand.u32 %v888, 1
        %v891 = vand.u32 %v889, 1
        %vm892 = vcmp.ne.s32.totalorder %v890, 0
        %vm893 = vcmp.ne.s32.totalorder %v891, 0
        %v894 = vand.u32 %v888, 2
        %v895 = vand.u32 %v889, 2
        %vm896 = vcmp.ne.s32.totalorder %v894, 0
        %vm897 = vcmp.ne.s32.totalorder %v895, 0
        %v898 = vand.u32 %v888, 4
        %v899 = vand.u32 %v889, 4
        %vm900 = vcmp.ne.s32.totalorder %v898, 0
        %vm901 = vcmp.ne.s32.totalorder %v899, 0
        %904 = vrot.lane.b32.xlu0 %v784, 120
        %v905 = vpop.permute.xlu0 %904
        %906 = vrot.lane.b32.xlu0 %v789, 120
        %v907 = vpop.permute.xlu0 %906
        %910 = vrot.lane.b32.xlu0 %v784, 8
        %v911 = vpop.permute.xlu0 %910
        %912 = vrot.lane.b32.xlu0 %v789, 8
        %v913 = vpop.permute.xlu0 %912
        %vm916 = vcmask 64512
        %v917 = vsel %vm916, %v905, %v911
        %v918 = vsel %vm916, %v907, %v913
        %921 = vrot.lane.b32.xlu0 %v917, 113
        %v922 = vpop.permute.xlu0 %921
        %923 = vrot.lane.b32.xlu0 %v918, 113
        %v924 = vpop.permute.xlu0 %923
        %927 = vrot.lane.b32.xlu0 %v917, 1
        %v928 = vpop.permute.xlu0 %927
        %929 = vrot.lane.b32.xlu0 %v918, 1
        %v930 = vpop.permute.xlu0 %929
        %vm933 = vcmask 7168
        %v934 = vsel %vm933, %v922, %v928
        %v935 = vsel %vm933, %v924, %v930
        %v936 = vsel %vm892, 1, 0
        %v937 = vsel %vm893, 1, 0
        %vm938 = vcmp.eq.s32.totalorder %v936, 1
        %vm939 = vcmp.eq.s32.totalorder %v937, 1
        %v940 = vsel %vm938, %v934, %v917
        %v941 = vsel %vm939, %v935, %v918
        %944 = vrot.lane.b32.xlu0 %v940, 114
        %v945 = vpop.permute.xlu0 %944
        %946 = vrot.lane.b32.xlu0 %v941, 114
        %v947 = vpop.permute.xlu0 %946
        %950 = vrot.lane.b32.xlu0 %v940, 2
        %v951 = vpop.permute.xlu0 %950
        %952 = vrot.lane.b32.xlu0 %v941, 2
        %v953 = vpop.permute.xlu0 %952
        %vm956 = vcmask 15360
        %v957 = vsel %vm956, %v945, %v951
        %v958 = vsel %vm956, %v947, %v953
        %v959 = vsel %vm896, 1, 0
        %v960 = vsel %vm897, 1, 0
        %vm961 = vcmp.eq.s32.totalorder %v959, 1
        %vm962 = vcmp.eq.s32.totalorder %v960, 1
        %v963 = vsel %vm961, %v957, %v940
        %v964 = vsel %vm962, %v958, %v941
        %967 = vrot.lane.b32.xlu0 %v963, 116
        %v968 = vpop.permute.xlu0 %967
        %969 = vrot.lane.b32.xlu0 %v964, 116
        %v970 = vpop.permute.xlu0 %969
        %973 = vrot.lane.b32.xlu0 %v963, 4
        %v974 = vpop.permute.xlu0 %973
        %975 = vrot.lane.b32.xlu0 %v964, 4
        %v976 = vpop.permute.xlu0 %975
        %vm979 = vcmask 31744
        %v980 = vsel %vm979, %v968, %v974
        %v981 = vsel %vm979, %v970, %v976
        %v982 = vsel %vm900, 1, 0
        %v983 = vsel %vm901, 1, 0
        %vm984 = vcmp.eq.s32.totalorder %v982, 1
        %vm985 = vcmp.eq.s32.totalorder %v983, 1
        %v986 = vsel %vm984, %v980, %v963
        %v987 = vsel %vm985, %v981, %v964
        %990 = vrot.lane.b32.xlu0 %v869, 120
        %v991 = vpop.permute.xlu0 %990
        %992 = vrot.lane.b32.xlu0 %v874, 120
        %v993 = vpop.permute.xlu0 %992
        %996 = vrot.lane.b32.xlu0 %v869, 8
        %v997 = vpop.permute.xlu0 %996
        %998 = vrot.lane.b32.xlu0 %v874, 8
        %v999 = vpop.permute.xlu0 %998
        %v1002 = vsel %vm916, %v991, %v997
        %v1003 = vsel %vm916, %v993, %v999
        %1006 = vrot.lane.b32.xlu0 %v1002, 113
        %v1007 = vpop.permute.xlu0 %1006
        %1008 = vrot.lane.b32.xlu0 %v1003, 113
        %v1009 = vpop.permute.xlu0 %1008
        %1012 = vrot.lane.b32.xlu0 %v1002, 1
        %v1013 = vpop.permute.xlu0 %1012
        %1014 = vrot.lane.b32.xlu0 %v1003, 1
        %v1015 = vpop.permute.xlu0 %1014
        %v1018 = vsel %vm933, %v1007, %v1013
        %v1019 = vsel %vm933, %v1009, %v1015
        %v1020 = vsel %vm938, %v1018, %v1002
        %v1021 = vsel %vm939, %v1019, %v1003
        %1024 = vrot.lane.b32.xlu0 %v1020, 114
        %v1025 = vpop.permute.xlu0 %1024
        %1026 = vrot.lane.b32.xlu0 %v1021, 114
        %v1027 = vpop.permute.xlu0 %1026
        %1030 = vrot.lane.b32.xlu0 %v1020, 2
        %v1031 = vpop.permute.xlu0 %1030
        %1032 = vrot.lane.b32.xlu0 %v1021, 2
        %v1033 = vpop.permute.xlu0 %1032
        %v1036 = vsel %vm956, %v1025, %v1031
        %v1037 = vsel %vm956, %v1027, %v1033
        %v1038 = vsel %vm961, %v1036, %v1020
        %v1039 = vsel %vm962, %v1037, %v1021
        %1042 = vrot.lane.b32.xlu0 %v1038, 116
        %v1043 = vpop.permute.xlu0 %1042
        %1044 = vrot.lane.b32.xlu0 %v1039, 116
        %v1045 = vpop.permute.xlu0 %1044
        %1048 = vrot.lane.b32.xlu0 %v1038, 4
        %v1049 = vpop.permute.xlu0 %1048
        %1050 = vrot.lane.b32.xlu0 %v1039, 4
        %v1051 = vpop.permute.xlu0 %1050
        %v1054 = vsel %vm979, %v1043, %v1049
        %v1055 = vsel %vm979, %v1045, %v1051
        %v1056 = vsel %vm984, %v1054, %v1038
        %v1057 = vsel %vm985, %v1055, %v1039
        %1058 = vxpose.xlu0.b32.start [1/16] %v1056, 128
        %1059 = vxpose.xlu0.b32.cont [2/16] 0.0, 128
        %1060 = vxpose.xlu0.b32.cont [3/16] 0.0, 128
        %1061 = vxpose.xlu0.b32.cont [4/16] 0.0, 128
        %1062 = vxpose.xlu0.b32.cont [5/16] 0.0, 128
        %1063 = vxpose.xlu0.b32.cont [6/16] 0.0, 128
        %1064 = vxpose.xlu0.b32.cont [7/16] 0.0, 128
        %1065 = vxpose.xlu0.b32.cont [8/16] 0.0, 128
        %1066 = vxpose.xlu0.b32.cont [9/16] 0.0, 128
        %1067 = vxpose.xlu0.b32.cont [10/16] 0.0, 128
        %1068 = vxpose.xlu0.b32.cont [11/16] 0.0, 128
        %1069 = vxpose.xlu0.b32.cont [12/16] 0.0, 128
        %1070 = vxpose.xlu0.b32.cont [13/16] 0.0, 128
        %1071 = vxpose.xlu0.b32.cont [14/16] 0.0, 128
        %1072 = vxpose.xlu0.b32.cont [15/16] 0.0, 128
        %1073 = vxpose.xlu0.b32.end [16/16] 0.0, 128
        %v1074 = vpop.trf.xlu0
        %v1075 = vpop.trf.xlu0
        %v1076 = vpop.trf.xlu0
        %v1077 = vpop.trf.xlu0
        %v1078 = vpop.trf.xlu0
        %v1079 = vpop.trf.xlu0
        %v1080 = vpop.trf.xlu0
        %v1081 = vpop.trf.xlu0
        %v1082 = vpop.trf.xlu0
        %v1083 = vpop.trf.xlu0
        %v1084 = vpop.trf.xlu0
        %v1085 = vpop.trf.xlu0
        %v1086 = vpop.trf.xlu0
        %v1087 = vpop.trf.xlu0
        %v1088 = vpop.trf.xlu0
        %v1089 = vpop.trf.xlu0
        %1090 = vxpose.xlu0.b32.start [1/16] %v1057, 128
        %1091 = vxpose.xlu0.b32.cont [2/16] 0.0, 128
        %1092 = vxpose.xlu0.b32.cont [3/16] 0.0, 128
        %1093 = vxpose.xlu0.b32.cont [4/16] 0.0, 128
        %1094 = vxpose.xlu0.b32.cont [5/16] 0.0, 128
        %1095 = vxpose.xlu0.b32.cont [6/16] 0.0, 128
        %1096 = vxpose.xlu0.b32.cont [7/16] 0.0, 128
        %1097 = vxpose.xlu0.b32.cont [8/16] 0.0, 128
        %1098 = vxpose.xlu0.b32.cont [9/16] 0.0, 128
        %1099 = vxpose.xlu0.b32.cont [10/16] 0.0, 128
        %1100 = vxpose.xlu0.b32.cont [11/16] 0.0, 128
        %1101 = vxpose.xlu0.b32.cont [12/16] 0.0, 128
        %1102 = vxpose.xlu0.b32.cont [13/16] 0.0, 128
        %1103 = vxpose.xlu0.b32.cont [14/16] 0.0, 128
        %1104 = vxpose.xlu0.b32.cont [15/16] 0.0, 128
        %1105 = vxpose.xlu0.b32.end [16/16] 0.0, 128
        %v1106 = vpop.trf.xlu0
        %v1107 = vpop.trf.xlu0
        %v1108 = vpop.trf.xlu0
        %v1109 = vpop.trf.xlu0
        %v1110 = vpop.trf.xlu0
        %v1111 = vpop.trf.xlu0
        %v1112 = vpop.trf.xlu0
        %v1113 = vpop.trf.xlu0
        %v1114 = vpop.trf.xlu0
        %v1115 = vpop.trf.xlu0
        %v1116 = vpop.trf.xlu0
        %v1117 = vpop.trf.xlu0
        %v1118 = vpop.trf.xlu0
        %v1119 = vpop.trf.xlu0
        %v1120 = vpop.trf.xlu0
        %v1121 = vpop.trf.xlu0
        %vm1122 = vcmask 130048
        %v1124 = vsel %vm1122, %v881, 0
        %v1126 = vsel %vm1122, %v795, 0
        %1128 = vmatprep.subr.mxu0 0.0
        %1129 = vmatpush1.xpose.msra.mxu0 0.0
        %1130 = vmatprep.subr.mxu0 0.0
        %1131 = vmatpush1.xpose.msra.mxu0 0.0
        %1132 = vmatprep.subr.mxu0 0.0
        %1133 = vmatpush1.xpose.msra.mxu0 0.0
        %1134 = vmatprep.subr.mxu0 0.0
        %1135 = vmatpush1.xpose.msra.mxu0 0.0
        %1136 = vmatprep.subr.mxu0 0.0
        %1137 = vmatpush1.xpose.msra.mxu0 0.0
        %1138 = vmatprep.subr.mxu0 0.0
        %1139 = vmatpush1.xpose.msra.mxu0 0.0
        %1140 = vmatprep.subr.mxu0 0.0
        %1141 = vmatpush1.xpose.msra.mxu0 0.0
        %1142 = vmatprep.subr.mxu0 0.0
        %1143 = vmatpush1.xpose.msra.mxu0 0.0
        %1144 = vmatprep.subr.mxu0 0.0
        %1145 = vmatpush1.xpose.msra.mxu0 0.0
        %1146 = vmatprep.subr.mxu0 0.0
        %1147 = vmatpush1.xpose.msra.mxu0 0.0
        %1148 = vmatprep.subr.mxu0 0.0
        %1149 = vmatpush1.xpose.msra.mxu0 0.0
        %1150 = vmatprep.subr.mxu0 0.0
        %1151 = vmatpush1.xpose.msra.mxu0 0.0
        %1152 = vmatprep.subr.mxu0 0.0
        %1153 = vmatpush1.xpose.msra.mxu0 0.0
        %1154 = vmatprep.subr.mxu0 0.0
        %1155 = vmatpush1.xpose.msra.mxu0 0.0
        %1156 = vmatprep.subr.mxu0 0.0
        %1157 = vmatpush1.xpose.msra.mxu0 0.0
        %1158 = vmatprep.subr.mxu0 0.0
        %1159 = vmatpush1.xpose.msra.mxu0 %v1126
        %1160 = vmatprep.subr.mxu0 0.0
        %1161 = vmatpush2.xpose.msra.mxu0 0.0
        %1162 = vmatprep.subr.mxu0 0.0
        %1163 = vmatpush2.xpose.msra.mxu0 0.0
        %1164 = vmatprep.subr.mxu0 0.0
        %1165 = vmatpush2.xpose.msra.mxu0 0.0
        %1166 = vmatprep.subr.mxu0 0.0
        %1167 = vmatpush2.xpose.msra.mxu0 0.0
        %1168 = vmatprep.subr.mxu0 0.0
        %1169 = vmatpush2.xpose.msra.mxu0 0.0
        %1170 = vmatprep.subr.mxu0 0.0
        %1171 = vmatpush2.xpose.msra.mxu0 0.0
        %1172 = vmatprep.subr.mxu0 0.0
        %1173 = vmatpush2.xpose.msra.mxu0 0.0
        %1174 = vmatprep.subr.mxu0 0.0
        %1175 = vmatpush2.xpose.msra.mxu0 0.0
        %1176 = vmatprep.subr.mxu0 0.0
        %1177 = vmatpush2.xpose.msra.mxu0 0.0
        %1178 = vmatprep.subr.mxu0 0.0
        %1179 = vmatpush2.xpose.msra.mxu0 0.0
        %1180 = vmatprep.subr.mxu0 0.0
        %1181 = vmatpush2.xpose.msra.mxu0 0.0
        %1182 = vmatprep.subr.mxu0 0.0
        %1183 = vmatpush2.xpose.msra.mxu0 0.0
        %1184 = vmatprep.subr.mxu0 0.0
        %1185 = vmatpush2.xpose.msra.mxu0 0.0
        %1186 = vmatprep.subr.mxu0 0.0
        %1187 = vmatpush2.xpose.msra.mxu0 0.0
        %1188 = vmatprep.subr.mxu0 0.0
        %1189 = vmatpush2.xpose.msra.mxu0 0.0
        %1190 = vmatprep.subr.mxu0 0.0
        %1191 = vmatpush2.xpose.msra.mxu0 0.0
        %1192 = vmatprep.mubr.f32.mxu0 0.0
        %1193 = vmatmul.mubr.f32.gmra.mxu0 %v1124
        %v1194 = vpop.f32.mrf.mxu0
        %v1195 = vadd.f32 %v986, %v1194
        %v1196 = vpop.f32.mrf.mxu0
        %1197 = vdwg.mxu0
        %v1199 = vsel %vm1122, %v882, 0
        %v1201 = vsel %vm1122, %v797, 0
        %1203 = vmatprep.subr.mxu0 0.0
        %1204 = vmatpush1.xpose.msra.mxu0 0.0
        %1205 = vmatprep.subr.mxu0 0.0
        %1206 = vmatpush1.xpose.msra.mxu0 0.0
        %1207 = vmatprep.subr.mxu0 0.0
        %1208 = vmatpush1.xpose.msra.mxu0 0.0
        %1209 = vmatprep.subr.mxu0 0.0
        %1210 = vmatpush1.xpose.msra.mxu0 0.0
        %1211 = vmatprep.subr.mxu0 0.0
        %1212 = vmatpush1.xpose.msra.mxu0 0.0
        %1213 = vmatprep.subr.mxu0 0.0
        %1214 = vmatpush1.xpose.msra.mxu0 0.0
        %1215 = vmatprep.subr.mxu0 0.0
        %1216 = vmatpush1.xpose.msra.mxu0 0.0
        %1217 = vmatprep.subr.mxu0 0.0
        %1218 = vmatpush1.xpose.msra.mxu0 0.0
        %1219 = vmatprep.subr.mxu0 0.0
        %1220 = vmatpush1.xpose.msra.mxu0 0.0
        %1221 = vmatprep.subr.mxu0 0.0
        %1222 = vmatpush1.xpose.msra.mxu0 0.0
        %1223 = vmatprep.subr.mxu0 0.0
        %1224 = vmatpush1.xpose.msra.mxu0 0.0
        %1225 = vmatprep.subr.mxu0 0.0
        %1226 = vmatpush1.xpose.msra.mxu0 0.0
        %1227 = vmatprep.subr.mxu0 0.0
        %1228 = vmatpush1.xpose.msra.mxu0 0.0
        %1229 = vmatprep.subr.mxu0 0.0
        %1230 = vmatpush1.xpose.msra.mxu0 0.0
        %1231 = vmatprep.subr.mxu0 0.0
        %1232 = vmatpush1.xpose.msra.mxu0 0.0
        %1233 = vmatprep.subr.mxu0 0.0
        %1234 = vmatpush1.xpose.msra.mxu0 %v1201
        %1235 = vmatprep.subr.mxu0 0.0
        %1236 = vmatpush2.xpose.msra.mxu0 0.0
        %1237 = vmatprep.subr.mxu0 0.0
        %1238 = vmatpush2.xpose.msra.mxu0 0.0
        %1239 = vmatprep.subr.mxu0 0.0
        %1240 = vmatpush2.xpose.msra.mxu0 0.0
        %1241 = vmatprep.subr.mxu0 0.0
        %1242 = vmatpush2.xpose.msra.mxu0 0.0
        %1243 = vmatprep.subr.mxu0 0.0
        %1244 = vmatpush2.xpose.msra.mxu0 0.0
        %1245 = vmatprep.subr.mxu0 0.0
        %1246 = vmatpush2.xpose.msra.mxu0 0.0
        %1247 = vmatprep.subr.mxu0 0.0
        %1248 = vmatpush2.xpose.msra.mxu0 0.0
        %1249 = vmatprep.subr.mxu0 0.0
        %1250 = vmatpush2.xpose.msra.mxu0 0.0
        %1251 = vmatprep.subr.mxu0 0.0
        %1252 = vmatpush2.xpose.msra.mxu0 0.0
        %1253 = vmatprep.subr.mxu0 0.0
        %1254 = vmatpush2.xpose.msra.mxu0 0.0
        %1255 = vmatprep.subr.mxu0 0.0
        %1256 = vmatpush2.xpose.msra.mxu0 0.0
        %1257 = vmatprep.subr.mxu0 0.0
        %1258 = vmatpush2.xpose.msra.mxu0 0.0
        %1259 = vmatprep.subr.mxu0 0.0
        %1260 = vmatpush2.xpose.msra.mxu0 0.0
        %1261 = vmatprep.subr.mxu0 0.0
        %1262 = vmatpush2.xpose.msra.mxu0 0.0
        %1263 = vmatprep.subr.mxu0 0.0
        %1264 = vmatpush2.xpose.msra.mxu0 0.0
        %1265 = vmatprep.subr.mxu0 0.0
        %1266 = vmatpush2.xpose.msra.mxu0 0.0
        %1267 = vmatprep.mubr.f32.mxu0 0.0
        %1268 = vmatmul.mubr.f32.gmra.mxu0 %v1199
        %v1269 = vpop.f32.mrf.mxu0
        %v1270 = vadd.f32 %v987, %v1269
        %v1271 = vpop.f32.mrf.mxu0
        %1272 = vdwg.mxu0
        %v1273 = vadd.f32 %v1195, %v1074
        %v1274 = vadd.f32 %v1270, %v1106
        %v1277 = vlaneseq
        %v1278 = vshrl.u32 %v1277, 7
        %v1279 = vsub.s32 0, %v1278
        %v1280 = vrot.slane %v883, %v1279
        %v1281 = vlaneseq
        %v1282 = vshrl.u32 %v1281, 7
        %v1283 = vsub.s32 0, %v1282
        %v1284 = vrot.slane %v884, %v1283
        %v1287 = vadd.f32 %v1273, %v1280
        %v1288 = vadd.f32 %v1274, %v1284
        %v1289 = vsel %vm916, %v1287, -inf
        %1290 = vmax.xlane.f32.xlu0 %v1289
        %v1291 = vpop.xlane.xlu0 %1290
        %v1292 = vsel %vm916, %v1288, -inf
        %1293 = vmax.xlane.f32.xlu0 %v1292
        %v1294 = vpop.xlane.xlu0 %1293
        %v1295 = vsub.f32 %v1287, %v1291
        %v1296 = vsub.f32 %v1288, %v1294
        %v1297 = vmul.f32 %v1295, 1.442695
        %v1298 = vpow.pop %v1297
        %v1299 = vmul.f32 %v1296, 1.442695
        %v1300 = vpow.pop %v1299
        %v1301 = vsel %vm916, %v1298, 0.0
        %1302 = vadd.xlane.f32.xlu0 %v1301
        %v1303 = vpop.xlane.xlu0 %1302
        %v1304 = vsel %vm916, %v1300, 0.0
        %1305 = vadd.xlane.f32.xlu0 %v1304
        %v1306 = vpop.xlane.xlu0 %1305
        %v1307 = vrcp.pop %v1303
        %v1308 = vrcp.pop %v1306
        %v1309 = vmul.f32 %v1298, %v1307
        %v1310 = vmul.f32 %v1300, %v1308
        %1311 = vrot.lane.b32.xlu0 %v693, 64
        %v1312 = vpop.permute.xlu0 %1311
        %v1315 = vsel %vm916, %v1309, 0
        %1317 = vmatprep.subr.mxu0 0.0
        %1318 = vmatpush1.msra.mxu0 0.0
        %1319 = vmatprep.subr.mxu0 0.0
        %1320 = vmatpush1.msra.mxu0 0.0
        %1321 = vmatprep.subr.mxu0 0.0
        %1322 = vmatpush1.msra.mxu0 0.0
        %1323 = vmatprep.subr.mxu0 0.0
        %1324 = vmatpush1.msra.mxu0 0.0
        %1325 = vmatprep.subr.mxu0 0.0
        %1326 = vmatpush1.msra.mxu0 0.0
        %1327 = vmatprep.subr.mxu0 0.0
        %1328 = vmatpush1.msra.mxu0 0.0
        %1329 = vmatprep.subr.mxu0 0.0
        %1330 = vmatpush1.msra.mxu0 0.0
        %1331 = vmatprep.subr.mxu0 0.0
        %1332 = vmatpush1.msra.mxu0 0.0
        %1333 = vmatprep.subr.mxu0 0.0
        %1334 = vmatpush1.msra.mxu0 0.0
        %1335 = vmatprep.subr.mxu0 0.0
        %1336 = vmatpush1.msra.mxu0 0.0
        %1337 = vmatprep.subr.mxu0 0.0
        %1338 = vmatpush1.msra.mxu0 0.0
        %1339 = vmatprep.subr.mxu0 0.0
        %1340 = vmatpush1.msra.mxu0 0.0
        %1341 = vmatprep.subr.mxu0 0.0
        %1342 = vmatpush1.msra.mxu0 0.0
        %1343 = vmatprep.subr.mxu0 0.0
        %1344 = vmatpush1.msra.mxu0 0.0
        %1345 = vmatprep.subr.mxu0 0.0
        %1346 = vmatpush1.msra.mxu0 0.0
        %1347 = vmatprep.subr.mxu0 0.0
        %1348 = vmatpush1.msra.mxu0 %v1312
        %1349 = vmatprep.subr.mxu0 0.0
        %1350 = vmatpush2.msra.mxu0 0.0
        %1351 = vmatprep.subr.mxu0 0.0
        %1352 = vmatpush2.msra.mxu0 0.0
        %1353 = vmatprep.subr.mxu0 0.0
        %1354 = vmatpush2.msra.mxu0 0.0
        %1355 = vmatprep.subr.mxu0 0.0
        %1356 = vmatpush2.msra.mxu0 0.0
        %1357 = vmatprep.subr.mxu0 0.0
        %1358 = vmatpush2.msra.mxu0 0.0
        %1359 = vmatprep.subr.mxu0 0.0
        %1360 = vmatpush2.msra.mxu0 0.0
        %1361 = vmatprep.subr.mxu0 0.0
        %1362 = vmatpush2.msra.mxu0 0.0
        %1363 = vmatprep.subr.mxu0 0.0
        %1364 = vmatpush2.msra.mxu0 0.0
        %1365 = vmatprep.subr.mxu0 0.0
        %1366 = vmatpush2.msra.mxu0 0.0
        %1367 = vmatprep.subr.mxu0 0.0
        %1368 = vmatpush2.msra.mxu0 0.0
        %1369 = vmatprep.subr.mxu0 0.0
        %1370 = vmatpush2.msra.mxu0 0.0
        %1371 = vmatprep.subr.mxu0 0.0
        %1372 = vmatpush2.msra.mxu0 0.0
        %1373 = vmatprep.subr.mxu0 0.0
        %1374 = vmatpush2.msra.mxu0 0.0
        %1375 = vmatprep.subr.mxu0 0.0
        %1376 = vmatpush2.msra.mxu0 0.0
        %1377 = vmatprep.subr.mxu0 0.0
        %1378 = vmatpush2.msra.mxu0 0.0
        %1379 = vmatprep.subr.mxu0 0.0
        %1380 = vmatpush2.msra.mxu0 0.0
        %1381 = vmatprep.mubr.f32.mxu0 0.0
        %1382 = vmatmul.mubr.f32.gmra.mxu0 %v1315
        %v1383 = vpop.f32.mrf.mxu0
        %v1384 = vadd.f32 0.0, %v1383
        %v1385 = vpop.f32.mrf.mxu0
        %1386 = vdwg.mxu0
        %1387 = vrot.lane.b32.xlu0 %v698, 64
        %v1388 = vpop.permute.xlu0 %1387
        %v1391 = vsel %vm916, %v1310, 0
        %1393 = vmatprep.subr.mxu0 0.0
        %1394 = vmatpush1.msra.mxu0 0.0
        %1395 = vmatprep.subr.mxu0 0.0
        %1396 = vmatpush1.msra.mxu0 0.0
        %1397 = vmatprep.subr.mxu0 0.0
        %1398 = vmatpush1.msra.mxu0 0.0
        %1399 = vmatprep.subr.mxu0 0.0
        %1400 = vmatpush1.msra.mxu0 0.0
        %1401 = vmatprep.subr.mxu0 0.0
        %1402 = vmatpush1.msra.mxu0 0.0
        %1403 = vmatprep.subr.mxu0 0.0
        %1404 = vmatpush1.msra.mxu0 0.0
        %1405 = vmatprep.subr.mxu0 0.0
        %1406 = vmatpush1.msra.mxu0 0.0
        %1407 = vmatprep.subr.mxu0 0.0
        %1408 = vmatpush1.msra.mxu0 0.0
        %1409 = vmatprep.subr.mxu0 0.0
        %1410 = vmatpush1.msra.mxu0 0.0
        %1411 = vmatprep.subr.mxu0 0.0
        %1412 = vmatpush1.msra.mxu0 0.0
        %1413 = vmatprep.subr.mxu0 0.0
        %1414 = vmatpush1.msra.mxu0 0.0
        %1415 = vmatprep.subr.mxu0 0.0
        %1416 = vmatpush1.msra.mxu0 0.0
        %1417 = vmatprep.subr.mxu0 0.0
        %1418 = vmatpush1.msra.mxu0 0.0
        %1419 = vmatprep.subr.mxu0 0.0
        %1420 = vmatpush1.msra.mxu0 0.0
        %1421 = vmatprep.subr.mxu0 0.0
        %1422 = vmatpush1.msra.mxu0 0.0
        %1423 = vmatprep.subr.mxu0 0.0
        %1424 = vmatpush1.msra.mxu0 %v1388
        %1425 = vmatprep.subr.mxu0 0.0
        %1426 = vmatpush2.msra.mxu0 0.0
        %1427 = vmatprep.subr.mxu0 0.0
        %1428 = vmatpush2.msra.mxu0 0.0
        %1429 = vmatprep.subr.mxu0 0.0
        %1430 = vmatpush2.msra.mxu0 0.0
        %1431 = vmatprep.subr.mxu0 0.0
        %1432 = vmatpush2.msra.mxu0 0.0
        %1433 = vmatprep.subr.mxu0 0.0
        %1434 = vmatpush2.msra.mxu0 0.0
        %1435 = vmatprep.subr.mxu0 0.0
        %1436 = vmatpush2.msra.mxu0 0.0
        %1437 = vmatprep.subr.mxu0 0.0
        %1438 = vmatpush2.msra.mxu0 0.0
        %1439 = vmatprep.subr.mxu0 0.0
        %1440 = vmatpush2.msra.mxu0 0.0
        %1441 = vmatprep.subr.mxu0 0.0
        %1442 = vmatpush2.msra.mxu0 0.0
        %1443 = vmatprep.subr.mxu0 0.0
        %1444 = vmatpush2.msra.mxu0 0.0
        %1445 = vmatprep.subr.mxu0 0.0
        %1446 = vmatpush2.msra.mxu0 0.0
        %1447 = vmatprep.subr.mxu0 0.0
        %1448 = vmatpush2.msra.mxu0 0.0
        %1449 = vmatprep.subr.mxu0 0.0
        %1450 = vmatpush2.msra.mxu0 0.0
        %1451 = vmatprep.subr.mxu0 0.0
        %1452 = vmatpush2.msra.mxu0 0.0
        %1453 = vmatprep.subr.mxu0 0.0
        %1454 = vmatpush2.msra.mxu0 0.0
        %1455 = vmatprep.subr.mxu0 0.0
        %1456 = vmatpush2.msra.mxu0 0.0
        %1457 = vmatprep.mubr.f32.mxu0 0.0
        %1458 = vmatmul.mubr.f32.gmra.mxu0 %v1391
        %v1459 = vpop.f32.mrf.mxu0
        %v1460 = vadd.f32 0.0, %v1459
        %v1461 = vpop.f32.mrf.mxu0
        %1462 = vdwg.mxu0
        %1463 = vrot.lane.b32.xlu0 %v784, 104
        %v1464 = vpop.permute.xlu0 %1463
        %1465 = vrot.lane.b32.xlu0 %v789, 104
        %v1466 = vpop.permute.xlu0 %1465
        %v1469 = vsel %vm916, %v1464, %v905
        %v1470 = vsel %vm916, %v1466, %v907
        %1473 = vrot.lane.b32.xlu0 %v1469, 113
        %v1474 = vpop.permute.xlu0 %1473
        %1475 = vrot.lane.b32.xlu0 %v1470, 113
        %v1476 = vpop.permute.xlu0 %1475
        %1479 = vrot.lane.b32.xlu0 %v1469, 1
        %v1480 = vpop.permute.xlu0 %1479
        %1481 = vrot.lane.b32.xlu0 %v1470, 1
        %v1482 = vpop.permute.xlu0 %1481
        %v1485 = vsel %vm933, %v1474, %v1480
        %v1486 = vsel %vm933, %v1476, %v1482
        %v1487 = vsel %vm938, %v1485, %v1469
        %v1488 = vsel %vm939, %v1486, %v1470
        %1491 = vrot.lane.b32.xlu0 %v1487, 114
        %v1492 = vpop.permute.xlu0 %1491
        %1493 = vrot.lane.b32.xlu0 %v1488, 114
        %v1494 = vpop.permute.xlu0 %1493
        %1497 = vrot.lane.b32.xlu0 %v1487, 2
        %v1498 = vpop.permute.xlu0 %1497
        %1499 = vrot.lane.b32.xlu0 %v1488, 2
        %v1500 = vpop.permute.xlu0 %1499
        %v1503 = vsel %vm956, %v1492, %v1498
        %v1504 = vsel %vm956, %v1494, %v1500
        %v1505 = vsel %vm961, %v1503, %v1487
        %v1506 = vsel %vm962, %v1504, %v1488
        %1509 = vrot.lane.b32.xlu0 %v1505, 116
        %v1510 = vpop.permute.xlu0 %1509
        %1511 = vrot.lane.b32.xlu0 %v1506, 116
        %v1512 = vpop.permute.xlu0 %1511
        %1515 = vrot.lane.b32.xlu0 %v1505, 4
        %v1516 = vpop.permute.xlu0 %1515
        %1517 = vrot.lane.b32.xlu0 %v1506, 4
        %v1518 = vpop.permute.xlu0 %1517
        %v1521 = vsel %vm979, %v1510, %v1516
        %v1522 = vsel %vm979, %v1512, %v1518
        %v1523 = vsel %vm984, %v1521, %v1505
        %v1524 = vsel %vm985, %v1522, %v1506
        %1525 = vrot.lane.b32.xlu0 %v869, 104
        %v1526 = vpop.permute.xlu0 %1525
        %1527 = vrot.lane.b32.xlu0 %v874, 104
        %v1528 = vpop.permute.xlu0 %1527
        %v1531 = vsel %vm916, %v1526, %v991
        %v1532 = vsel %vm916, %v1528, %v993
        %1535 = vrot.lane.b32.xlu0 %v1531, 113
        %v1536 = vpop.permute.xlu0 %1535
        %1537 = vrot.lane.b32.xlu0 %v1532, 113
        %v1538 = vpop.permute.xlu0 %1537
        %1541 = vrot.lane.b32.xlu0 %v1531, 1
        %v1542 = vpop.permute.xlu0 %1541
        %1543 = vrot.lane.b32.xlu0 %v1532, 1
        %v1544 = vpop.permute.xlu0 %1543
        %v1547 = vsel %vm933, %v1536, %v1542
        %v1548 = vsel %vm933, %v1538, %v1544
        %v1549 = vsel %vm938, %v1547, %v1531
        %v1550 = vsel %vm939, %v1548, %v1532
        %1553 = vrot.lane.b32.xlu0 %v1549, 114
        %v1554 = vpop.permute.xlu0 %1553
        %1555 = vrot.lane.b32.xlu0 %v1550, 114
        %v1556 = vpop.permute.xlu0 %1555
        %1559 = vrot.lane.b32.xlu0 %v1549, 2
        %v1560 = vpop.permute.xlu0 %1559
        %1561 = vrot.lane.b32.xlu0 %v1550, 2
        %v1562 = vpop.permute.xlu0 %1561
        %v1565 = vsel %vm956, %v1554, %v1560
        %v1566 = vsel %vm956, %v1556, %v1562
        %v1567 = vsel %vm961, %v1565, %v1549
        %v1568 = vsel %vm962, %v1566, %v1550
        %1571 = vrot.lane.b32.xlu0 %v1567, 116
        %v1572 = vpop.permute.xlu0 %1571
        %1573 = vrot.lane.b32.xlu0 %v1568, 116
        %v1574 = vpop.permute.xlu0 %1573
        %1577 = vrot.lane.b32.xlu0 %v1567, 4
        %v1578 = vpop.permute.xlu0 %1577
        %1579 = vrot.lane.b32.xlu0 %v1568, 4
        %v1580 = vpop.permute.xlu0 %1579
        %v1583 = vsel %vm979, %v1572, %v1578
        %v1584 = vsel %vm979, %v1574, %v1580
        %v1585 = vsel %vm984, %v1583, %v1567
        %v1586 = vsel %vm985, %v1584, %v1568
        %1587 = vxpose.xlu0.b32.start [1/16] %v1585, 128
        %1588 = vxpose.xlu0.b32.cont [2/16] 0.0, 128
        %1589 = vxpose.xlu0.b32.cont [3/16] 0.0, 128
        %1590 = vxpose.xlu0.b32.cont [4/16] 0.0, 128
        %1591 = vxpose.xlu0.b32.cont [5/16] 0.0, 128
        %1592 = vxpose.xlu0.b32.cont [6/16] 0.0, 128
        %1593 = vxpose.xlu0.b32.cont [7/16] 0.0, 128
        %1594 = vxpose.xlu0.b32.cont [8/16] 0.0, 128
        %1595 = vxpose.xlu0.b32.cont [9/16] 0.0, 128
        %1596 = vxpose.xlu0.b32.cont [10/16] 0.0, 128
        %1597 = vxpose.xlu0.b32.cont [11/16] 0.0, 128
        %1598 = vxpose.xlu0.b32.cont [12/16] 0.0, 128
        %1599 = vxpose.xlu0.b32.cont [13/16] 0.0, 128
        %1600 = vxpose.xlu0.b32.cont [14/16] 0.0, 128
        %1601 = vxpose.xlu0.b32.cont [15/16] 0.0, 128
        %1602 = vxpose.xlu0.b32.end [16/16] 0.0, 128
        %v1603 = vpop.trf.xlu0
        %v1604 = vpop.trf.xlu0
        %v1605 = vpop.trf.xlu0
        %v1606 = vpop.trf.xlu0
        %v1607 = vpop.trf.xlu0
        %v1608 = vpop.trf.xlu0
        %v1609 = vpop.trf.xlu0
        %v1610 = vpop.trf.xlu0
        %v1611 = vpop.trf.xlu0
        %v1612 = vpop.trf.xlu0
        %v1613 = vpop.trf.xlu0
        %v1614 = vpop.trf.xlu0
        %v1615 = vpop.trf.xlu0
        %v1616 = vpop.trf.xlu0
        %v1617 = vpop.trf.xlu0
        %v1618 = vpop.trf.xlu0
        %1619 = vxpose.xlu0.b32.start [1/16] %v1586, 128
        %1620 = vxpose.xlu0.b32.cont [2/16] 0.0, 128
        %1621 = vxpose.xlu0.b32.cont [3/16] 0.0, 128
        %1622 = vxpose.xlu0.b32.cont [4/16] 0.0, 128
        %1623 = vxpose.xlu0.b32.cont [5/16] 0.0, 128
        %1624 = vxpose.xlu0.b32.cont [6/16] 0.0, 128
        %1625 = vxpose.xlu0.b32.cont [7/16] 0.0, 128
        %1626 = vxpose.xlu0.b32.cont [8/16] 0.0, 128
        %1627 = vxpose.xlu0.b32.cont [9/16] 0.0, 128
        %1628 = vxpose.xlu0.b32.cont [10/16] 0.0, 128
        %1629 = vxpose.xlu0.b32.cont [11/16] 0.0, 128
        %1630 = vxpose.xlu0.b32.cont [12/16] 0.0, 128
        %1631 = vxpose.xlu0.b32.cont [13/16] 0.0, 128
        %1632 = vxpose.xlu0.b32.cont [14/16] 0.0, 128
        %1633 = vxpose.xlu0.b32.cont [15/16] 0.0, 128
        %1634 = vxpose.xlu0.b32.end [16/16] 0.0, 128
        %v1635 = vpop.trf.xlu0
        %v1636 = vpop.trf.xlu0
        %v1637 = vpop.trf.xlu0
        %v1638 = vpop.trf.xlu0
        %v1639 = vpop.trf.xlu0
        %v1640 = vpop.trf.xlu0
        %v1641 = vpop.trf.xlu0
        %v1642 = vpop.trf.xlu0
        %v1643 = vpop.trf.xlu0
        %v1644 = vpop.trf.xlu0
        %v1645 = vpop.trf.xlu0
        %v1646 = vpop.trf.xlu0
        %v1647 = vpop.trf.xlu0
        %v1648 = vpop.trf.xlu0
        %v1649 = vpop.trf.xlu0
        %v1650 = vpop.trf.xlu0
        %1651 = vrot.lane.b32.xlu0 %v881, 112
        %v1652 = vpop.permute.xlu0 %1651
        %1653 = vrot.lane.b32.xlu0 %v693, 80
        %v1654 = vpop.permute.xlu0 %1653
        %v1655 = vsel %vm1122, %v1652, 0
        %v1657 = vsel %vm1122, %v1654, 0
        %1659 = vmatprep.subr.mxu0 0.0
        %1660 = vmatpush1.xpose.msra.mxu0 0.0
        %1661 = vmatprep.subr.mxu0 0.0
        %1662 = vmatpush1.xpose.msra.mxu0 0.0
        %1663 = vmatprep.subr.mxu0 0.0
        %1664 = vmatpush1.xpose.msra.mxu0 0.0
        %1665 = vmatprep.subr.mxu0 0.0
        %1666 = vmatpush1.xpose.msra.mxu0 0.0
        %1667 = vmatprep.subr.mxu0 0.0
        %1668 = vmatpush1.xpose.msra.mxu0 0.0
        %1669 = vmatprep.subr.mxu0 0.0
        %1670 = vmatpush1.xpose.msra.mxu0 0.0
        %1671 = vmatprep.subr.mxu0 0.0
        %1672 = vmatpush1.xpose.msra.mxu0 0.0
        %1673 = vmatprep.subr.mxu0 0.0
        %1674 = vmatpush1.xpose.msra.mxu0 0.0
        %1675 = vmatprep.subr.mxu0 0.0
        %1676 = vmatpush1.xpose.msra.mxu0 0.0
        %1677 = vmatprep.subr.mxu0 0.0
        %1678 = vmatpush1.xpose.msra.mxu0 0.0
        %1679 = vmatprep.subr.mxu0 0.0
        %1680 = vmatpush1.xpose.msra.mxu0 0.0
        %1681 = vmatprep.subr.mxu0 0.0
        %1682 = vmatpush1.xpose.msra.mxu0 0.0
        %1683 = vmatprep.subr.mxu0 0.0
        %1684 = vmatpush1.xpose.msra.mxu0 0.0
        %1685 = vmatprep.subr.mxu0 0.0
        %1686 = vmatpush1.xpose.msra.mxu0 0.0
        %1687 = vmatprep.subr.mxu0 0.0
        %1688 = vmatpush1.xpose.msra.mxu0 0.0
        %1689 = vmatprep.subr.mxu0 0.0
        %1690 = vmatpush1.xpose.msra.mxu0 %v1657
        %1691 = vmatprep.subr.mxu0 0.0
        %1692 = vmatpush2.xpose.msra.mxu0 0.0
        %1693 = vmatprep.subr.mxu0 0.0
        %1694 = vmatpush2.xpose.msra.mxu0 0.0
        %1695 = vmatprep.subr.mxu0 0.0
        %1696 = vmatpush2.xpose.msra.mxu0 0.0
        %1697 = vmatprep.subr.mxu0 0.0
        %1698 = vmatpush2.xpose.msra.mxu0 0.0
        %1699 = vmatprep.subr.mxu0 0.0
        %1700 = vmatpush2.xpose.msra.mxu0 0.0
        %1701 = vmatprep.subr.mxu0 0.0
        %1702 = vmatpush2.xpose.msra.mxu0 0.0
        %1703 = vmatprep.subr.mxu0 0.0
        %1704 = vmatpush2.xpose.msra.mxu0 0.0
        %1705 = vmatprep.subr.mxu0 0.0
        %1706 = vmatpush2.xpose.msra.mxu0 0.0
        %1707 = vmatprep.subr.mxu0 0.0
        %1708 = vmatpush2.xpose.msra.mxu0 0.0
        %1709 = vmatprep.subr.mxu0 0.0
        %1710 = vmatpush2.xpose.msra.mxu0 0.0
        %1711 = vmatprep.subr.mxu0 0.0
        %1712 = vmatpush2.xpose.msra.mxu0 0.0
        %1713 = vmatprep.subr.mxu0 0.0
        %1714 = vmatpush2.xpose.msra.mxu0 0.0
        %1715 = vmatprep.subr.mxu0 0.0
        %1716 = vmatpush2.xpose.msra.mxu0 0.0
        %1717 = vmatprep.subr.mxu0 0.0
        %1718 = vmatpush2.xpose.msra.mxu0 0.0
        %1719 = vmatprep.subr.mxu0 0.0
        %1720 = vmatpush2.xpose.msra.mxu0 0.0
        %1721 = vmatprep.subr.mxu0 0.0
        %1722 = vmatpush2.xpose.msra.mxu0 0.0
        %1723 = vmatprep.mubr.f32.mxu0 0.0
        %1724 = vmatmul.mubr.f32.gmra.mxu0 %v1655
        %v1725 = vpop.f32.mrf.mxu0
        %v1726 = vadd.f32 %v1523, %v1725
        %v1727 = vpop.f32.mrf.mxu0
        %1728 = vdwg.mxu0
        %1729 = vrot.lane.b32.xlu0 %v882, 112
        %v1730 = vpop.permute.xlu0 %1729
        %1731 = vrot.lane.b32.xlu0 %v698, 80
        %v1732 = vpop.permute.xlu0 %1731
        %v1733 = vsel %vm1122, %v1730, 0
        %v1735 = vsel %vm1122, %v1732, 0
        %1737 = vmatprep.subr.mxu0 0.0
        %1738 = vmatpush1.xpose.msra.mxu0 0.0
        %1739 = vmatprep.subr.mxu0 0.0
        %1740 = vmatpush1.xpose.msra.mxu0 0.0
        %1741 = vmatprep.subr.mxu0 0.0
        %1742 = vmatpush1.xpose.msra.mxu0 0.0
        %1743 = vmatprep.subr.mxu0 0.0
        %1744 = vmatpush1.xpose.msra.mxu0 0.0
        %1745 = vmatprep.subr.mxu0 0.0
        %1746 = vmatpush1.xpose.msra.mxu0 0.0
        %1747 = vmatprep.subr.mxu0 0.0
        %1748 = vmatpush1.xpose.msra.mxu0 0.0
        %1749 = vmatprep.subr.mxu0 0.0
        %1750 = vmatpush1.xpose.msra.mxu0 0.0
        %1751 = vmatprep.subr.mxu0 0.0
        %1752 = vmatpush1.xpose.msra.mxu0 0.0
        %1753 = vmatprep.subr.mxu0 0.0
        %1754 = vmatpush1.xpose.msra.mxu0 0.0
        %1755 = vmatprep.subr.mxu0 0.0
        %1756 = vmatpush1.xpose.msra.mxu0 0.0
        %1757 = vmatprep.subr.mxu0 0.0
        %1758 = vmatpush1.xpose.msra.mxu0 0.0
        %1759 = vmatprep.subr.mxu0 0.0
        %1760 = vmatpush1.xpose.msra.mxu0 0.0
        %1761 = vmatprep.subr.mxu0 0.0
        %1762 = vmatpush1.xpose.msra.mxu0 0.0
        %1763 = vmatprep.subr.mxu0 0.0
        %1764 = vmatpush1.xpose.msra.mxu0 0.0
        %1765 = vmatprep.subr.mxu0 0.0
        %1766 = vmatpush1.xpose.msra.mxu0 0.0
        %1767 = vmatprep.subr.mxu0 0.0
        %1768 = vmatpush1.xpose.msra.mxu0 %v1735
        %1769 = vmatprep.subr.mxu0 0.0
        %1770 = vmatpush2.xpose.msra.mxu0 0.0
        %1771 = vmatprep.subr.mxu0 0.0
        %1772 = vmatpush2.xpose.msra.mxu0 0.0
        %1773 = vmatprep.subr.mxu0 0.0
        %1774 = vmatpush2.xpose.msra.mxu0 0.0
        %1775 = vmatprep.subr.mxu0 0.0
        %1776 = vmatpush2.xpose.msra.mxu0 0.0
        %1777 = vmatprep.subr.mxu0 0.0
        %1778 = vmatpush2.xpose.msra.mxu0 0.0
        %1779 = vmatprep.subr.mxu0 0.0
        %1780 = vmatpush2.xpose.msra.mxu0 0.0
        %1781 = vmatprep.subr.mxu0 0.0
        %1782 = vmatpush2.xpose.msra.mxu0 0.0
        %1783 = vmatprep.subr.mxu0 0.0
        %1784 = vmatpush2.xpose.msra.mxu0 0.0
        %1785 = vmatprep.subr.mxu0 0.0
        %1786 = vmatpush2.xpose.msra.mxu0 0.0
        %1787 = vmatprep.subr.mxu0 0.0
        %1788 = vmatpush2.xpose.msra.mxu0 0.0
        %1789 = vmatprep.subr.mxu0 0.0
        %1790 = vmatpush2.xpose.msra.mxu0 0.0
        %1791 = vmatprep.subr.mxu0 0.0
        %1792 = vmatpush2.xpose.msra.mxu0 0.0
        %1793 = vmatprep.subr.mxu0 0.0
        %1794 = vmatpush2.xpose.msra.mxu0 0.0
        %1795 = vmatprep.subr.mxu0 0.0
        %1796 = vmatpush2.xpose.msra.mxu0 0.0
        %1797 = vmatprep.subr.mxu0 0.0
        %1798 = vmatpush2.xpose.msra.mxu0 0.0
        %1799 = vmatprep.subr.mxu0 0.0
        %1800 = vmatpush2.xpose.msra.mxu0 0.0
        %1801 = vmatprep.mubr.f32.mxu0 0.0
        %1802 = vmatmul.mubr.f32.gmra.mxu0 %v1733
        %v1803 = vpop.f32.mrf.mxu0
        %v1804 = vadd.f32 %v1524, %v1803
        %v1805 = vpop.f32.mrf.mxu0
        %1806 = vdwg.mxu0
        %v1807 = vadd.f32 %v1726, %v1603
        %v1808 = vadd.f32 %v1804, %v1635
        %v1809 = vadd.f32 %v1807, %v1280
        %v1810 = vadd.f32 %v1808, %v1284
        %v1811 = vsel %vm916, %v1809, -inf
        %1812 = vmax.xlane.f32.xlu0 %v1811
        %v1813 = vpop.xlane.xlu0 %1812
        %v1814 = vsel %vm916, %v1810, -inf
        %1815 = vmax.xlane.f32.xlu0 %v1814
        %v1816 = vpop.xlane.xlu0 %1815
        %v1817 = vsub.f32 %v1809, %v1813
        %v1818 = vsub.f32 %v1810, %v1816
        %v1819 = vmul.f32 %v1817, 1.442695
        %v1820 = vpow.pop %v1819
        %v1821 = vmul.f32 %v1818, 1.442695
        %v1822 = vpow.pop %v1821
        %v1823 = vsel %vm916, %v1820, 0.0
        %1824 = vadd.xlane.f32.xlu0 %v1823
        %v1825 = vpop.xlane.xlu0 %1824
        %v1826 = vsel %vm916, %v1822, 0.0
        %1827 = vadd.xlane.f32.xlu0 %v1826
        %v1828 = vpop.xlane.xlu0 %1827
        %v1829 = vrcp.pop %v1825
        %v1830 = vrcp.pop %v1828
        %v1831 = vmul.f32 %v1820, %v1829
        %v1832 = vmul.f32 %v1822, %v1830
        %1833 = vrot.lane.b32.xlu0 %v693, 48
        %v1834 = vpop.permute.xlu0 %1833
        %v1837 = vsel %vm916, %v1831, 0
        %1839 = vmatprep.subr.mxu0 0.0
        %1840 = vmatpush1.msra.mxu0 0.0
        %1841 = vmatprep.subr.mxu0 0.0
        %1842 = vmatpush1.msra.mxu0 0.0
        %1843 = vmatprep.subr.mxu0 0.0
        %1844 = vmatpush1.msra.mxu0 0.0
        %1845 = vmatprep.subr.mxu0 0.0
        %1846 = vmatpush1.msra.mxu0 0.0
        %1847 = vmatprep.subr.mxu0 0.0
        %1848 = vmatpush1.msra.mxu0 0.0
        %1849 = vmatprep.subr.mxu0 0.0
        %1850 = vmatpush1.msra.mxu0 0.0
        %1851 = vmatprep.subr.mxu0 0.0
        %1852 = vmatpush1.msra.mxu0 0.0
        %1853 = vmatprep.subr.mxu0 0.0
        %1854 = vmatpush1.msra.mxu0 0.0
        %1855 = vmatprep.subr.mxu0 0.0
        %1856 = vmatpush1.msra.mxu0 0.0
        %1857 = vmatprep.subr.mxu0 0.0
        %1858 = vmatpush1.msra.mxu0 0.0
        %1859 = vmatprep.subr.mxu0 0.0
        %1860 = vmatpush1.msra.mxu0 0.0
        %1861 = vmatprep.subr.mxu0 0.0
        %1862 = vmatpush1.msra.mxu0 0.0
        %1863 = vmatprep.subr.mxu0 0.0
        %1864 = vmatpush1.msra.mxu0 0.0
        %1865 = vmatprep.subr.mxu0 0.0
        %1866 = vmatpush1.msra.mxu0 0.0
        %1867 = vmatprep.subr.mxu0 0.0
        %1868 = vmatpush1.msra.mxu0 0.0
        %1869 = vmatprep.subr.mxu0 0.0
        %1870 = vmatpush1.msra.mxu0 %v1834
        %1871 = vmatprep.subr.mxu0 0.0
        %1872 = vmatpush2.msra.mxu0 0.0
        %1873 = vmatprep.subr.mxu0 0.0
        %1874 = vmatpush2.msra.mxu0 0.0
        %1875 = vmatprep.subr.mxu0 0.0
        %1876 = vmatpush2.msra.mxu0 0.0
        %1877 = vmatprep.subr.mxu0 0.0
        %1878 = vmatpush2.msra.mxu0 0.0
        %1879 = vmatprep.subr.mxu0 0.0
        %1880 = vmatpush2.msra.mxu0 0.0
        %1881 = vmatprep.subr.mxu0 0.0
        %1882 = vmatpush2.msra.mxu0 0.0
        %1883 = vmatprep.subr.mxu0 0.0
        %1884 = vmatpush2.msra.mxu0 0.0
        %1885 = vmatprep.subr.mxu0 0.0
        %1886 = vmatpush2.msra.mxu0 0.0
        %1887 = vmatprep.subr.mxu0 0.0
        %1888 = vmatpush2.msra.mxu0 0.0
        %1889 = vmatprep.subr.mxu0 0.0
        %1890 = vmatpush2.msra.mxu0 0.0
        %1891 = vmatprep.subr.mxu0 0.0
        %1892 = vmatpush2.msra.mxu0 0.0
        %1893 = vmatprep.subr.mxu0 0.0
        %1894 = vmatpush2.msra.mxu0 0.0
        %1895 = vmatprep.subr.mxu0 0.0
        %1896 = vmatpush2.msra.mxu0 0.0
        %1897 = vmatprep.subr.mxu0 0.0
        %1898 = vmatpush2.msra.mxu0 0.0
        %1899 = vmatprep.subr.mxu0 0.0
        %1900 = vmatpush2.msra.mxu0 0.0
        %1901 = vmatprep.subr.mxu0 0.0
        %1902 = vmatpush2.msra.mxu0 0.0
        %1903 = vmatprep.mubr.f32.mxu0 0.0
        %1904 = vmatmul.mubr.f32.gmra.mxu0 %v1837
        %v1905 = vpop.f32.mrf.mxu0
        %v1906 = vadd.f32 0.0, %v1905
        %v1907 = vpop.f32.mrf.mxu0
        %1908 = vdwg.mxu0
        %1909 = vrot.lane.b32.xlu0 %v698, 48
        %v1910 = vpop.permute.xlu0 %1909
        %v1913 = vsel %vm916, %v1832, 0
        %1915 = vmatprep.subr.mxu0 0.0
        %1916 = vmatpush1.msra.mxu0 0.0
        %1917 = vmatprep.subr.mxu0 0.0
        %1918 = vmatpush1.msra.mxu0 0.0
        %1919 = vmatprep.subr.mxu0 0.0
        %1920 = vmatpush1.msra.mxu0 0.0
        %1921 = vmatprep.subr.mxu0 0.0
        %1922 = vmatpush1.msra.mxu0 0.0
        %1923 = vmatprep.subr.mxu0 0.0
        %1924 = vmatpush1.msra.mxu0 0.0
        %1925 = vmatprep.subr.mxu0 0.0
        %1926 = vmatpush1.msra.mxu0 0.0
        %1927 = vmatprep.subr.mxu0 0.0
        %1928 = vmatpush1.msra.mxu0 0.0
        %1929 = vmatprep.subr.mxu0 0.0
        %1930 = vmatpush1.msra.mxu0 0.0
        %1931 = vmatprep.subr.mxu0 0.0
        %1932 = vmatpush1.msra.mxu0 0.0
        %1933 = vmatprep.subr.mxu0 0.0
        %1934 = vmatpush1.msra.mxu0 0.0
        %1935 = vmatprep.subr.mxu0 0.0
        %1936 = vmatpush1.msra.mxu0 0.0
        %1937 = vmatprep.subr.mxu0 0.0
        %1938 = vmatpush1.msra.mxu0 0.0
        %1939 = vmatprep.subr.mxu0 0.0
        %1940 = vmatpush1.msra.mxu0 0.0
        %1941 = vmatprep.subr.mxu0 0.0
        %1942 = vmatpush1.msra.mxu0 0.0
        %1943 = vmatprep.subr.mxu0 0.0
        %1944 = vmatpush1.msra.mxu0 0.0
        %1945 = vmatprep.subr.mxu0 0.0
        %1946 = vmatpush1.msra.mxu0 %v1910
        %1947 = vmatprep.subr.mxu0 0.0
        %1948 = vmatpush2.msra.mxu0 0.0
        %1949 = vmatprep.subr.mxu0 0.0
        %1950 = vmatpush2.msra.mxu0 0.0
        %1951 = vmatprep.subr.mxu0 0.0
        %1952 = vmatpush2.msra.mxu0 0.0
        %1953 = vmatprep.subr.mxu0 0.0
        %1954 = vmatpush2.msra.mxu0 0.0
        %1955 = vmatprep.subr.mxu0 0.0
        %1956 = vmatpush2.msra.mxu0 0.0
        %1957 = vmatprep.subr.mxu0 0.0
        %1958 = vmatpush2.msra.mxu0 0.0
        %1959 = vmatprep.subr.mxu0 0.0
        %1960 = vmatpush2.msra.mxu0 0.0
        %1961 = vmatprep.subr.mxu0 0.0
        %1962 = vmatpush2.msra.mxu0 0.0
        %1963 = vmatprep.subr.mxu0 0.0
        %1964 = vmatpush2.msra.mxu0 0.0
        %1965 = vmatprep.subr.mxu0 0.0
        %1966 = vmatpush2.msra.mxu0 0.0
        %1967 = vmatprep.subr.mxu0 0.0
        %1968 = vmatpush2.msra.mxu0 0.0
        %1969 = vmatprep.subr.mxu0 0.0
        %1970 = vmatpush2.msra.mxu0 0.0
        %1971 = vmatprep.subr.mxu0 0.0
        %1972 = vmatpush2.msra.mxu0 0.0
        %1973 = vmatprep.subr.mxu0 0.0
        %1974 = vmatpush2.msra.mxu0 0.0
        %1975 = vmatprep.subr.mxu0 0.0
        %1976 = vmatpush2.msra.mxu0 0.0
        %1977 = vmatprep.subr.mxu0 0.0
        %1978 = vmatpush2.msra.mxu0 0.0
        %1979 = vmatprep.mubr.f32.mxu0 0.0
        %1980 = vmatmul.mubr.f32.gmra.mxu0 %v1913
        %v1981 = vpop.f32.mrf.mxu0
        %v1982 = vadd.f32 0.0, %v1981
        %v1983 = vpop.f32.mrf.mxu0
        %1984 = vdwg.mxu0
        %1987 = vrot.lane.b32.xlu0 %v1906, 16
        %v1988 = vpop.permute.xlu0 %1987
        %1989 = vrot.lane.b32.xlu0 %v1982, 16
        %v1990 = vpop.permute.xlu0 %1989
        %v1993 = vsel %vm1122, %v1384, %v1988
        %v1994 = vsel %vm1122, %v1460, %v1990
        %v1995 = vadd.f32 %v612, %v1993
        %v1996 = vadd.f32 %v613, %v1994
        %v1997 = vsel %vm619, %v1995, 0.0
        %1998 = vadd.xlane.f32.xlu0 %v1997
        %v1999 = vpop.xlane.xlu0 %1998
        %v2000 = vsel %vm619, %v1996, 0.0
        %2001 = vadd.xlane.f32.xlu0 %v2000
        %v2002 = vpop.xlane.xlu0 %2001
        %v2003 = vrcp.pop 32.0
        %v2004 = vmul.f32 %v1999, %v2003
        %v2005 = vmul.f32 %v2002, %v2003
        %v2006 = vsub.f32 %v1995, %v2004
        %v2007 = vsub.f32 %v1996, %v2005
        %v2008 = vmul.f32 %v2006, %v2006
        %v2009 = vmul.f32 %v2007, %v2007
        %v2010 = vsel %vm619, %v2008, 0.0
        %2011 = vadd.xlane.f32.xlu0 %v2010
        %v2012 = vpop.xlane.xlu0 %2011
        %v2013 = vsel %vm619, %v2009, 0.0
        %2014 = vadd.xlane.f32.xlu0 %v2013
        %v2015 = vpop.xlane.xlu0 %2014
        %v2016 = vmul.f32 %v2012, %v2003
        %v2017 = vmul.f32 %v2015, %v2003
        %v2018 = vadd.f32 %v2016, 1e-05
        %v2019 = vadd.f32 %v2017, 1e-05
        %v2020 = vrsqrt.pop %v2018
        %v2021 = vrsqrt.pop %v2019
        %v2022 = vmul.f32 %v2006, %v2020
        %v2023 = vmul.f32 %v2007, %v2021
        %v2024 = vlaneseq
        %v2025 = vshrl.u32 %v2024, 7
        %v2026 = vsub.s32 2, %v2025
        %v2027 = vrot.slane %v614, %v2026
        %v2028 = vmul.f32 %v2022, %v2027
        %v2029 = vmul.f32 %v2023, %v2027
        %v2030 = vlaneseq
        %v2031 = vshrl.u32 %v2030, 7
        %v2032 = vsub.s32 3, %v2031
        %v2033 = vrot.slane %v614, %v2032
        %v2034 = vadd.f32 %v2028, %v2033
        %v2035 = vadd.f32 %v2029, %v2033
        %v2036 = vld [vmem:[%s501] sm:$0xff]
        %v2037 = vld [vmem:[%s501 + $0x8] sm:$0xff]
        %v2038 = vld [vmem:[%s501 + $0x10] sm:$0xff]
        %v2039 = vld [vmem:[%s501 + $0x18] sm:$0xff]
        %v2040 = vlaneseq
        %v2041 = vshrl.u32 %v2040, 7
        %v2042 = vsub.s32 4, %v2041
        %v2043 = vrot.slane %v614, %v2042
        %v2045 = vsel %vm619, %v2034, 0
        %v2048 = vsel %vm619, %v2035, 0
        %2050 = vmatprep.subr.mxu0 0.0
        %2051 = vmatpush1.msra.mxu0 0.0
        %2052 = vmatprep.subr.mxu0 0.0
        %2053 = vmatpush1.msra.mxu0 0.0
        %2054 = vmatprep.subr.mxu0 0.0
        %2055 = vmatpush1.msra.mxu0 0.0
        %2056 = vmatprep.subr.mxu0 0.0
        %2057 = vmatpush1.msra.mxu0 0.0
        %2058 = vmatprep.subr.mxu0 0.0
        %2059 = vmatpush1.msra.mxu0 0.0
        %2060 = vmatprep.subr.mxu0 0.0
        %2061 = vmatpush1.msra.mxu0 0.0
        %2062 = vmatprep.subr.mxu0 0.0
        %2063 = vmatpush1.msra.mxu0 0.0
        %2064 = vmatprep.subr.mxu0 0.0
        %2065 = vmatpush1.msra.mxu0 0.0
        %2066 = vmatprep.subr.mxu0 0.0
        %2067 = vmatpush1.msra.mxu0 0.0
        %2068 = vmatprep.subr.mxu0 0.0
        %2069 = vmatpush1.msra.mxu0 0.0
        %2070 = vmatprep.subr.mxu0 0.0
        %2071 = vmatpush1.msra.mxu0 0.0
        %2072 = vmatprep.subr.mxu0 0.0
        %2073 = vmatpush1.msra.mxu0 0.0
        %2074 = vmatprep.subr.mxu0 0.0
        %2075 = vmatpush1.msra.mxu0 %v2039
        %2076 = vmatprep.subr.mxu0 0.0
        %2077 = vmatpush1.msra.mxu0 %v2038
        %2078 = vmatprep.subr.mxu0 0.0
        %2079 = vmatpush1.msra.mxu0 %v2037
        %2080 = vmatprep.subr.mxu0 0.0
        %2081 = vmatpush1.msra.mxu0 %v2036
        %2082 = vmatprep.subr.mxu0 0.0
        %2083 = vmatpush2.msra.mxu0 0.0
        %2084 = vmatprep.subr.mxu0 0.0
        %2085 = vmatpush2.msra.mxu0 0.0
        %2086 = vmatprep.subr.mxu0 0.0
        %2087 = vmatpush2.msra.mxu0 0.0
        %2088 = vmatprep.subr.mxu0 0.0
        %2089 = vmatpush2.msra.mxu0 0.0
        %2090 = vmatprep.subr.mxu0 0.0
        %2091 = vmatpush2.msra.mxu0 0.0
        %2092 = vmatprep.subr.mxu0 0.0
        %2093 = vmatpush2.msra.mxu0 0.0
        %2094 = vmatprep.subr.mxu0 0.0
        %2095 = vmatpush2.msra.mxu0 0.0
        %2096 = vmatprep.subr.mxu0 0.0
        %2097 = vmatpush2.msra.mxu0 0.0
        %2098 = vmatprep.subr.mxu0 0.0
        %2099 = vmatpush2.msra.mxu0 0.0
        %2100 = vmatprep.subr.mxu0 0.0
        %2101 = vmatpush2.msra.mxu0 0.0
        %2102 = vmatprep.subr.mxu0 0.0
        %2103 = vmatpush2.msra.mxu0 0.0
        %2104 = vmatprep.subr.mxu0 0.0
        %2105 = vmatpush2.msra.mxu0 0.0
        %2106 = vmatprep.subr.mxu0 0.0
        %2107 = vmatpush2.msra.mxu0 0.0
        %2108 = vmatprep.subr.mxu0 0.0
        %2109 = vmatpush2.msra.mxu0 0.0
        %2110 = vmatprep.subr.mxu0 0.0
        %2111 = vmatpush2.msra.mxu0 0.0
        %2112 = vmatprep.subr.mxu0 0.0
        %2113 = vmatpush2.msra.mxu0 0.0
        %2114 = vmatprep.mubr.f32.mxu0 0.0
        %2115 = vmatmul.mubr.f32.gmra.mxu0 %v2045
        %v2116 = vpop.f32.mrf.mxu0
        %v2117 = vadd.f32 %v2043, %v2116
        %v2118 = vpop.f32.mrf.mxu0
        %2119 = vmatprep.mubr.f32.mxu0 0.0
        %2120 = vmatmul.mubr.f32.gmra.mxu0 %v2048
        %v2121 = vpop.f32.mrf.mxu0
        %v2122 = vadd.f32 %v2043, %v2121
        %v2123 = vpop.f32.mrf.mxu0
        %2124 = vdwg.mxu0
        %v2125 = vmax.f32 %v2117, 0.0
        %v2126 = vmax.f32 %v2122, 0.0
        %v2127 = vld [vmem:[%s506] sm:$0xff]
        %v2128 = vld [vmem:[%s506 + $0x8] sm:$0xff]
        %v2129 = vld [vmem:[%s506 + $0x10] sm:$0xff]
        %v2130 = vld [vmem:[%s506 + $0x18] sm:$0xff]
        %v2131 = vld [vmem:[%s506 + $0x20] sm:$0xff]
        %v2132 = vld [vmem:[%s506 + $0x28] sm:$0xff]
        %v2133 = vld [vmem:[%s506 + $0x30] sm:$0xff]
        %v2134 = vld [vmem:[%s506 + $0x38] sm:$0xff]
        %v2135 = vlaneseq
        %v2136 = vshrl.u32 %v2135, 7
        %v2137 = vsub.s32 5, %v2136
        %v2138 = vrot.slane %v614, %v2137
        %vm2139 = vcmask 523264
        %v2141 = vsel %vm2139, %v2125, 0
        %v2144 = vsel %vm2139, %v2126, 0
        %2146 = vmatprep.subr.mxu0 0.0
        %2147 = vmatpush1.msra.mxu0 0.0
        %2148 = vmatprep.subr.mxu0 0.0
        %2149 = vmatpush1.msra.mxu0 0.0
        %2150 = vmatprep.subr.mxu0 0.0
        %2151 = vmatpush1.msra.mxu0 0.0
        %2152 = vmatprep.subr.mxu0 0.0
        %2153 = vmatpush1.msra.mxu0 0.0
        %2154 = vmatprep.subr.mxu0 0.0
        %2155 = vmatpush1.msra.mxu0 0.0
        %2156 = vmatprep.subr.mxu0 0.0
        %2157 = vmatpush1.msra.mxu0 0.0
        %2158 = vmatprep.subr.mxu0 0.0
        %2159 = vmatpush1.msra.mxu0 0.0
        %2160 = vmatprep.subr.mxu0 0.0
        %2161 = vmatpush1.msra.mxu0 0.0
        %2162 = vmatprep.subr.mxu0 0.0
        %2163 = vmatpush1.msra.mxu0 %v2134
        %2164 = vmatprep.subr.mxu0 0.0
        %2165 = vmatpush1.msra.mxu0 %v2133
        %2166 = vmatprep.subr.mxu0 0.0
        %2167 = vmatpush1.msra.mxu0 %v2132
        %2168 = vmatprep.subr.mxu0 0.0
        %2169 = vmatpush1.msra.mxu0 %v2131
        %2170 = vmatprep.subr.mxu0 0.0
        %2171 = vmatpush1.msra.mxu0 %v2130
        %2172 = vmatprep.subr.mxu0 0.0
        %2173 = vmatpush1.msra.mxu0 %v2129
        %2174 = vmatprep.subr.mxu0 0.0
        %2175 = vmatpush1.msra.mxu0 %v2128
        %2176 = vmatprep.subr.mxu0 0.0
        %2177 = vmatpush1.msra.mxu0 %v2127
        %2178 = vmatprep.subr.mxu0 0.0
        %2179 = vmatpush2.msra.mxu0 0.0
        %2180 = vmatprep.subr.mxu0 0.0
        %2181 = vmatpush2.msra.mxu0 0.0
        %2182 = vmatprep.subr.mxu0 0.0
        %2183 = vmatpush2.msra.mxu0 0.0
        %2184 = vmatprep.subr.mxu0 0.0
        %2185 = vmatpush2.msra.mxu0 0.0
        %2186 = vmatprep.subr.mxu0 0.0
        %2187 = vmatpush2.msra.mxu0 0.0
        %2188 = vmatprep.subr.mxu0 0.0
        %2189 = vmatpush2.msra.mxu0 0.0
        %2190 = vmatprep.subr.mxu0 0.0
        %2191 = vmatpush2.msra.mxu0 0.0
        %2192 = vmatprep.subr.mxu0 0.0
        %2193 = vmatpush2.msra.mxu0 0.0
        %2194 = vmatprep.subr.mxu0 0.0
        %2195 = vmatpush2.msra.mxu0 0.0
        %2196 = vmatprep.subr.mxu0 0.0
        %2197 = vmatpush2.msra.mxu0 0.0
        %2198 = vmatprep.subr.mxu0 0.0
        %2199 = vmatpush2.msra.mxu0 0.0
        %2200 = vmatprep.subr.mxu0 0.0
        %2201 = vmatpush2.msra.mxu0 0.0
        %2202 = vmatprep.subr.mxu0 0.0
        %2203 = vmatpush2.msra.mxu0 0.0
        %2204 = vmatprep.subr.mxu0 0.0
        %2205 = vmatpush2.msra.mxu0 0.0
        %2206 = vmatprep.subr.mxu0 0.0
        %2207 = vmatpush2.msra.mxu0 0.0
        %2208 = vmatprep.subr.mxu0 0.0
        %2209 = vmatpush2.msra.mxu0 0.0
        %2210 = vmatprep.mubr.f32.mxu0 0.0
        %2211 = vmatmul.mubr.f32.gmra.mxu0 %v2141
        %v2212 = vpop.f32.mrf.mxu0
        %v2213 = vadd.f32 %v2138, %v2212
        %v2214 = vpop.f32.mrf.mxu0
        %2215 = vmatprep.mubr.f32.mxu0 0.0
        %2216 = vmatmul.mubr.f32.gmra.mxu0 %v2144
        %v2217 = vpop.f32.mrf.mxu0
        %v2218 = vadd.f32 %v2138, %v2217
        %v2219 = vpop.f32.mrf.mxu0
        %2220 = vdwg.mxu0
        %v2221 = vadd.f32 %v2034, %v2213
        %v2222 = vadd.f32 %v2035, %v2218
        %v2223 = vsel %vm619, %v2221, 0.0
        %2224 = vadd.xlane.f32.xlu0 %v2223
        %v2225 = vpop.xlane.xlu0 %2224
        %v2226 = vsel %vm619, %v2222, 0.0
        %2227 = vadd.xlane.f32.xlu0 %v2226
        %v2228 = vpop.xlane.xlu0 %2227
        %v2229 = vmul.f32 %v2225, %v2003
        %v2230 = vmul.f32 %v2228, %v2003
        %v2231 = vsub.f32 %v2221, %v2229
        %v2232 = vsub.f32 %v2222, %v2230
        %v2233 = vmul.f32 %v2231, %v2231
        %v2234 = vmul.f32 %v2232, %v2232
        %v2235 = vsel %vm619, %v2233, 0.0
        %2236 = vadd.xlane.f32.xlu0 %v2235
        %v2237 = vpop.xlane.xlu0 %2236
        %v2238 = vsel %vm619, %v2234, 0.0
        %2239 = vadd.xlane.f32.xlu0 %v2238
        %v2240 = vpop.xlane.xlu0 %2239
        %v2241 = vmul.f32 %v2237, %v2003
        %v2242 = vmul.f32 %v2240, %v2003
        %v2243 = vadd.f32 %v2241, 1e-05
        %v2244 = vadd.f32 %v2242, 1e-05
        %v2245 = vrsqrt.pop %v2243
        %v2246 = vrsqrt.pop %v2244
        %v2247 = vmul.f32 %v2231, %v2245
        %v2248 = vmul.f32 %v2232, %v2246
        %v2249 = vlaneseq
        %v2250 = vshrl.u32 %v2249, 7
        %v2251 = vsub.s32 6, %v2250
        %v2252 = vrot.slane %v614, %v2251
        %v2253 = vmul.f32 %v2247, %v2252
        %v2254 = vmul.f32 %v2248, %v2252
        %v2255 = vlaneseq
        %v2256 = vshrl.u32 %v2255, 7
        %v2257 = vsub.s32 7, %v2256
        %v2258 = vrot.slane %v614, %v2257
        %v2259 = vadd.f32 %v2253, %v2258
        %v2260 = vadd.f32 %v2254, %v2258
        %2261 = vst.msk [vmem:[#allocation2] sm:$0xff] %vm619, %v2259
        %2262 = vst.msk [vmem:[#allocation2 + $0x8] sm:$0xff] %vm619, %v2260
        %p2263 = scmp.eq.s32.totalorder %s29, 1
        // Predicated region
        $region85: #{tpu_custom_call.1} parent=63 // pred_check
          %p2264 = pneg %p2263
        $region86: #{tpu_custom_call.1} parent=63 // pred_check_branch
          %2266 = sbr.rel (%p2264) target = $region88
        $region87: #{tpu_custom_call.1} parent=63 // pred_region
          %2267 = vst.msk [vmem:[#allocation11] sm:$0xff] %vm619, %v2259
          %2268 = vst.msk [vmem:[#allocation11 + $0x8] sm:$0xff] %vm619, %v2260
          %v2269 = vld [vmem:[#allocation9] sm:$0x7f]
          %v2270 = vld [vmem:[%s10] sm:$0x7f]
          %2272 = vset.pattern.permute.xlu0 0
          %2273 = vperm.xlu0 %2272, %v2270
          %v2274 = vpop.permute.xlu0 %2273
          %v2277 = vsel %vm619, %v2269, 0
          %v2280 = vsel %vm619, %v2259, 0
          %v2283 = vsel %vm619, %v2260, 0
          %2285 = vmatprep.subr.mxu0 0.0
          %2286 = vmatpush1.xpose.msra.mxu0 0.0
          %2287 = vmatprep.subr.mxu0 0.0
          %2288 = vmatpush1.xpose.msra.mxu0 0.0
          %2289 = vmatprep.subr.mxu0 0.0
          %2290 = vmatpush1.xpose.msra.mxu0 0.0
          %2291 = vmatprep.subr.mxu0 0.0
          %2292 = vmatpush1.xpose.msra.mxu0 0.0
          %2293 = vmatprep.subr.mxu0 0.0
          %2294 = vmatpush1.xpose.msra.mxu0 0.0
          %2295 = vmatprep.subr.mxu0 0.0
          %2296 = vmatpush1.xpose.msra.mxu0 0.0
          %2297 = vmatprep.subr.mxu0 0.0
          %2298 = vmatpush1.xpose.msra.mxu0 0.0
          %2299 = vmatprep.subr.mxu0 0.0
          %2300 = vmatpush1.xpose.msra.mxu0 0.0
          %2301 = vmatprep.subr.mxu0 0.0
          %2302 = vmatpush1.xpose.msra.mxu0 0.0
          %2303 = vmatprep.subr.mxu0 0.0
          %2304 = vmatpush1.xpose.msra.mxu0 0.0
          %2305 = vmatprep.subr.mxu0 0.0
          %2306 = vmatpush1.xpose.msra.mxu0 0.0
          %2307 = vmatprep.subr.mxu0 0.0
          %2308 = vmatpush1.xpose.msra.mxu0 0.0
          %2309 = vmatprep.subr.mxu0 0.0
          %2310 = vmatpush1.xpose.msra.mxu0 0.0
          %2311 = vmatprep.subr.mxu0 0.0
          %2312 = vmatpush1.xpose.msra.mxu0 0.0
          %2313 = vmatprep.subr.mxu0 0.0
          %2314 = vmatpush1.xpose.msra.mxu0 %v2283
          %2315 = vmatprep.subr.mxu0 0.0
          %2316 = vmatpush1.xpose.msra.mxu0 %v2280
          %2317 = vmatprep.subr.mxu0 0.0
          %2318 = vmatpush2.xpose.msra.mxu0 0.0
          %2319 = vmatprep.subr.mxu0 0.0
          %2320 = vmatpush2.xpose.msra.mxu0 0.0
          %2321 = vmatprep.subr.mxu0 0.0
          %2322 = vmatpush2.xpose.msra.mxu0 0.0
          %2323 = vmatprep.subr.mxu0 0.0
          %2324 = vmatpush2.xpose.msra.mxu0 0.0
          %2325 = vmatprep.subr.mxu0 0.0
          %2326 = vmatpush2.xpose.msra.mxu0 0.0
          %2327 = vmatprep.subr.mxu0 0.0
          %2328 = vmatpush2.xpose.msra.mxu0 0.0
          %2329 = vmatprep.subr.mxu0 0.0
          %2330 = vmatpush2.xpose.msra.mxu0 0.0
          %2331 = vmatprep.subr.mxu0 0.0
          %2332 = vmatpush2.xpose.msra.mxu0 0.0
          %2333 = vmatprep.subr.mxu0 0.0
          %2334 = vmatpush2.xpose.msra.mxu0 0.0
          %2335 = vmatprep.subr.mxu0 0.0
          %2336 = vmatpush2.xpose.msra.mxu0 0.0
          %2337 = vmatprep.subr.mxu0 0.0
          %2338 = vmatpush2.xpose.msra.mxu0 0.0
          %2339 = vmatprep.subr.mxu0 0.0
          %2340 = vmatpush2.xpose.msra.mxu0 0.0
          %2341 = vmatprep.subr.mxu0 0.0
          %2342 = vmatpush2.xpose.msra.mxu0 0.0
          %2343 = vmatprep.subr.mxu0 0.0
          %2344 = vmatpush2.xpose.msra.mxu0 0.0
          %2345 = vmatprep.subr.mxu0 0.0
          %2346 = vmatpush2.xpose.msra.mxu0 0.0
          %2347 = vmatprep.subr.mxu0 0.0
          %2348 = vmatpush2.xpose.msra.mxu0 0.0
          %2349 = vmatprep.mubr.f32.mxu0 0.0
          %2350 = vmatmul.mubr.f32.gmra.mxu0 %v2277
          %v2351 = vpop.f32.mrf.mxu0
          %v2352 = vadd.f32 %v2274, %v2351
          %v2353 = vpop.f32.mrf.mxu0
          %2354 = vdwg.mxu0
          %vm2355 = vcmask 129024
          %v2356 = vsel %vm2355, %v2352, -inf
          %v2357 = vrot.slane %v2356, 4
          %v2358 = vmax.f32 %v2356, %v2357
          %v2359 = vrot.slane %v2358, 2
          %v2360 = vmax.f32 %v2358, %v2359
          %v2361 = vrot.slane %v2360, 1
          %v2362 = vmax.f32 %v2360, %v2361
          %v2363 = vcvt.s32.f32 %v886
          %vm2364 = vcmp.eq.f32.partialorder %v2352, %v2362
          %v2365 = vsel %vm2364, %v2363, 7.0
          %v2366 = vsel %vm2355, %v2365, inf
          %v2367 = vrot.slane %v2366, 4
          %v2368 = vmin.f32 %v2366, %v2367
          %v2369 = vrot.slane %v2368, 2
          %v2370 = vmin.f32 %v2368, %v2369
          %v2371 = vrot.slane %v2370, 1
          %v2372 = vmin.f32 %v2370, %v2371
          %v2373 = vcvt.f32.s32.to.zero.pseudo %v2372
          %vm2374 = vcmask 122880
          %2375 = vst.msk [vmem:[#allocation12] sm:$0x1] %vm2374, %v2373
        $region88: #{tpu_custom_call.1} parent=63 // pred_fallthru
          _
        // Predicated region
        $region89: #{tpu_custom_call.1} parent=63 // pred_check
          %p2376 = pneg %p293
        $region90: #{tpu_custom_call.1} parent=63 // pred_check_branch
          %2378 = sbr.rel (%p2376) target = $region92
        $region91: #{tpu_custom_call.1} parent=63 // pred_region
          %s2380 = ssub.s32 256, 256
          %2381 = vsyncadd [#allocation5], %s2380
          %s2382 = sshll.u32 [#allocation11], 4
          %s2383 = int_to_ptr.vmem [resolvable:$true] %s2382
          %2388 = dma.vmem_to_hbm [thread:$0]  %s2383, 256, %s11, [#allocation5], 128, 128, 8
        $region92: #{tpu_custom_call.1} parent=63 // pred_fallthru
          _
        // Predicated region
        $region93: #{tpu_custom_call.1} parent=63 // pred_check
          %p2389 = pneg %p314
        $region94: #{tpu_custom_call.1} parent=63 // pred_check_branch
          %2391 = sbr.rel (%p2389) target = $region96
        $region95: #{tpu_custom_call.1} parent=63 // pred_region
          %s2393 = ssub.s32 16, 16
          %2394 = vsyncadd [#allocation13], %s2393
          %s2396 = sshll.u32 [#allocation12], 4
          %s2397 = int_to_ptr.vmem [resolvable:$true] %s2396
          %2399 = dma.vmem_to_hbm [thread:$0]  %s2397, 16, %s12, [#allocation13]
        $region96: #{tpu_custom_call.1} parent=63 // pred_fallthru
          _
        // Predicated region
        $region97: #{tpu_custom_call.1} parent=63 // pred_check
          %p2400 = pneg %p293
        $region98: #{tpu_custom_call.1} parent=63 // pred_check_branch
          %2402 = sbr.rel (%p2400) target = $region100
        $region99: #{tpu_custom_call.1} parent=63 // pred_region
          %2403 = dma.done [#allocation5], 256
        $region100: #{tpu_custom_call.1} parent=63 // pred_fallthru
          _
        // Predicated region
        $region101: #{tpu_custom_call.1} parent=63 // pred_check
          %p2404 = pneg %p314
        $region102: #{tpu_custom_call.1} parent=63 // pred_check_branch
          %2406 = sbr.rel (%p2404) target = $region104
        $region103: #{tpu_custom_call.1} parent=63 // pred_region
          %2407 = dma.done [#allocation13], 16
        $region104: #{tpu_custom_call.1} parent=63 // pred_fallthru
          _
      $region64: #{tpu_custom_call.1} parent=5 // pred_fallthru
        _
      %p2408 = scmp.le.s32.totalorder 2, %s24
      // Predicated region
      $region105: #{tpu_custom_call.1} parent=5 // pred_check
        %p2409 = pneg %p2408
      $region106: #{tpu_custom_call.1} parent=5 // pred_check_branch
        %2411 = sbr.rel (%p2409) target = $region108
      $region107: #{tpu_custom_call.1} parent=5 // pred_region
        %s2412 = ssub.s32 %s24, 2
      $region108: #{tpu_custom_call.1} parent=5 // pred_fallthru
        _
    $region6: #{tpu_custom_call.1} parent=1 // loop_footer
      %s28 = sadd.s32 1, %s24
    $region7: #{tpu_custom_call.1} parent=1 // loop_footer_branch
      %23 = sbr.rel target = $region3
    $region8: #{tpu_custom_call.1} parent=1 // loop_exit
      _
    %2413 = vsyncpa [#allocation4], 1
    %s2414 = scalar_lea.sflag [#allocation4], 1
    %2415 = vsyncpa %s2414, 1
    %2416 = vsyncpa [#allocation7], 1
    %2417 = vsyncpa [#allocation10], 1
    %2418 = vsyncpa [#allocation5], 1
    %s2419 = scalar_lea.sflag [#allocation5], 1
    %2420 = vsyncpa %s2419, 1
    %2421 = vsyncpa [#allocation13], 1

</llo_original>
